<compile_context>
chip_gen: v6e
topology: v6e:2x2x1
jax: 0.10.0
libtpu: 0.0.40
codegen_flags: <defaults>
</compile_context>

<pallas_src>
import math

import jax
import jax.numpy as jnp
from jax.experimental import pallas as pl
from jax.experimental.pallas import tpu as pltpu

IMAGENET_MEAN = [0.485, 0.456, 0.406]
IMAGENET_STD = [0.229, 0.224, 0.225]


# --------------------------- fused feature-stack kernel ---------------------

def _make_fused_kernel(layer_cfg, capture_indices, n_conv):
    """Builds a kernel that runs the whole conv/relu/maxpool stack for one image.

    layer_cfg:        static list of ("conv", cin, cout) / ("relu",) / ("maxpool",)
    capture_indices:  ordered list of layer indices whose outputs leave the kernel
    """
    capture_pos = {li: oi for oi, li in enumerate(capture_indices)}

    def kernel(*refs):
        x_ref, m_ref, s_ref = refs[0], refs[1], refs[2]
        wb_refs = refs[3:3 + 2 * n_conv]
        out_refs = refs[3 + 2 * n_conv:-2]
        pad_ref, act_ref = refs[-2], refs[-1]

        # Fused ImageNormalization: (x - mean) * (1/std) -- multiply, no divide.
        x = (x_ref[0].astype(jnp.float32) - m_ref[...]) * s_ref[...]

        ci = 0
        for li, spec in enumerate(layer_cfg):
            kind = spec[0]
            if kind == "conv":
                _, cin, cout = spec
                hh, ww = x.shape[0], x.shape[1]
                # SAME padding: zero ONLY the 1-wide halo ring for the current
                # (hh, ww, cin) window (always re-zeroed, so shrinking spatial
                # dims after a maxpool cannot expose stale interior data),
                # then write the activation into the interior (stays on-chip).
                zrow = jnp.zeros((1, ww + 2, cin), jnp.float32)
                zcol = jnp.zeros((hh + 2, 1, cin), jnp.float32)
                pad_ref[0:1, 0:ww + 2, 0:cin] = zrow
                pad_ref[hh + 1:hh + 2, 0:ww + 2, 0:cin] = zrow
                pad_ref[0:hh + 2, 0:1, 0:cin] = zcol
                pad_ref[0:hh + 2, ww + 1:ww + 2, 0:cin] = zcol
                pad_ref[1:hh + 1, 1:ww + 1, 0:cin] = x

                # im2col: concatenate the 9 shifted windows along lanes and do
                # ONE MXU matmul with K = 9*cin (bf16 operands, f32 accum).
                taps = []
                for kh in range(3):
                    for kw in range(3):
                        taps.append(
                            pad_ref[kh:kh + hh, kw:kw + ww, 0:cin]
                            .reshape(hh * ww, cin))
                cols = jnp.concatenate(taps, axis=-1).astype(jnp.bfloat16)
                w_ref = wb_refs[2 * ci]              # (9*cin, cout) bf16
                b_ref = wb_refs[2 * ci + 1]          # (1, cout)    f32
                y = jnp.dot(cols, w_ref[...],
                            preferred_element_type=jnp.float32)
                x = (y + b_ref[...]).reshape(hh, ww, cout)
                ci += 1
            elif kind == "relu":
                x = jnp.maximum(x, 0.0)
            else:  # "maxpool": 2x2 window, stride 2
                hh, ww, cc = x.shape
                ho, wo = hh // 2, ww // 2
                # H-pool straight from the value (layout-preserving split+max),
                # then W-pool with two stride-2 reads off a half-size scratch.
                xh = jnp.max(x.reshape(ho, 2, ww, cc), axis=1)   # (ho, ww, cc)
                act_ref[0:ho, 0:ww, 0:cc] = xh
                x = jnp.maximum(
                    act_ref[0:ho, pl.ds(0, wo, stride=2), 0:cc],
                    act_ref[0:ho, pl.ds(1, wo, stride=2), 0:cc])  # (ho, wo, cc)

            oi = capture_pos.get(li)
            if oi is not None:
                fh, fw, fc = x.shape
                # Lane-dense writeback: present the feature map as
                # (1, fh, fw*fc) (fw*fc = 128 here) -> dense, unmasked stores.
                out_refs[oi][...] = x.reshape(1, fh, fw * fc).astype(
                    out_refs[oi].dtype)

    return kernel


def fused_feature_stack(x, conv_params, mean, inv_std, layer_cfg, captures):
    """x: (N, H, W, C0) NHWC f32.  captures: list of (layer_idx, (h, w, c)).

    Returns a list of lane-folded feature maps of shape (N, fh, fw*fc).
    """
    N, H, W, C0 = x.shape
    n_conv = len(conv_params)

    # Right-size the two VMEM scratches from a static walk of the stack.
    ph = pw = pc = 1          # conv halo scratch dims
    ah = aw = ac = 1          # (H-pooled) maxpool scratch dims
    h, w, c = H, W, C0
    for spec in layer_cfg:
        if spec[0] == "conv":
            cin, cout = spec[1], spec[2]
            ph, pw, pc = max(ph, h + 2), max(pw, w + 2), max(pc, cin)
            c = cout
        elif spec[0] == "maxpool":
            ah, aw, ac = max(ah, h // 2), max(aw, w), max(ac, c)
            h, w = h // 2, w // 2

    args = [x,
            mean.reshape(1, C0).astype(jnp.float32),
            inv_std.reshape(1, C0).astype(jnp.float32)]
    in_specs = [
        pl.BlockSpec((1, H, W, C0), lambda n: (n, 0, 0, 0)),
        pl.BlockSpec((1, C0), lambda n: (0, 0)),
        pl.BlockSpec((1, C0), lambda n: (0, 0)),
    ]
    for wgt, b in conv_params:
        args += [wgt, b]
        in_specs.append(pl.BlockSpec(wgt.shape, lambda n: (0, 0)))
        in_specs.append(pl.BlockSpec(b.shape, lambda n: (0, 0)))

    # Lane-dense HBM outputs: (N, fh, fw*fc) so the last dim is a multiple of
    # 128 for this config.  Wrapper reshapes back to NHWC.
    out_shape = tuple(jax.ShapeDtypeStruct((N, fh, fw * fc), x.dtype)
                      for _, (fh, fw, fc) in captures)
    out_specs = tuple(pl.BlockSpec((1, fh, fw * fc), lambda n: (n, 0, 0))
                      for _, (fh, fw, fc) in captures)

    scratch_shapes = [
        pltpu.VMEM((ph, pw, pc), jnp.float32),   # conv halo scratch
        pltpu.VMEM((ah, aw, ac), jnp.float32),   # H-pooled maxpool scratch
    ]

    # Explicit VMEM cap with headroom (double-buffered blocks + scratches).
    def _nbytes(shape, dtype):
        return math.prod(shape) * jnp.dtype(dtype).itemsize
    blk = _nbytes((1, H, W, C0), x.dtype) + 2 * _nbytes((1, C0), jnp.float32)
    for wgt, b in conv_params:
        blk += _nbytes(wgt.shape, wgt.dtype) + _nbytes(b.shape, b.dtype)
    for _, (fh, fw, fc) in captures:
        blk += _nbytes((1, fh, fw * fc), x.dtype)
    scr = _nbytes((ph, pw, pc), jnp.float32) + _nbytes((ah, aw, ac), jnp.float32)
    vmem_limit = int(min(2 * blk + scr + (16 << 20), 64 << 20))

    kernel = _make_fused_kernel(layer_cfg, [li for li, _ in captures], n_conv)

    feats = pl.pallas_call(
        kernel,
        out_shape=out_shape,
        grid=(N,),
        in_specs=in_specs,
        out_specs=out_specs,
        scratch_shapes=scratch_shapes,
        compiler_params=pltpu.CompilerParams(
            dimension_semantics=("parallel",),
            vmem_limit_bytes=vmem_limit),
    )(*args)
    if not isinstance(feats, (tuple, list)):
        feats = (feats,)
    return list(feats)


# ----------------------------- FeatureExtractor -----------------------------

# VGG-style `.features` stacks: ("conv", cin, cout) for conv, else (kind,)
_FEATURE_CONFIGS = {
    "vgg_tiny": [
        ("conv", 3, 8), ("relu",), ("conv", 8, 8), ("relu",), ("maxpool",),
        ("conv", 8, 16), ("relu",), ("conv", 16, 16), ("relu",), ("maxpool",),
    ],
}


class FeatureExtractor:
    """JAX/Pallas port of torchlake's FeatureExtractor forward pass."""
    # TODO(synk): torchvision pretrained weights (`weights="DEFAULT"`) cannot be
    # loaded here; a VGG-style `.features` stack is built with deterministic init.

    def __init__(self, network_name, layer_type, trainable=True, key=None):
        assert layer_type in ("conv", "relu", "maxpool")
        self.layer_type = layer_type
        self.trainable = trainable  # inference-only forward; no effect
        self.mean = jnp.asarray(IMAGENET_MEAN, jnp.float32)
        self.inv_std = 1.0 / jnp.asarray(IMAGENET_STD, jnp.float32)
        self.layer_cfg = _FEATURE_CONFIGS.get(network_name,
                                              _FEATURE_CONFIGS["vgg_tiny"])
        if key is None:
            key = jax.random.PRNGKey(0)
        self.conv_params = []
        for i, spec in enumerate(self.layer_cfg):
            if spec[0] == "conv":
                _, cin, cout = spec
                kkey = jax.random.fold_in(key, i)
                w = jax.random.normal(kkey, (3, 3, cin, cout), jnp.float32)
                w = w * jnp.sqrt(2.0 / (9.0 * cin))       # kaiming-like init
                # im2col weight layout (9*cin, cout); bf16 at the MXU boundary
                # (accumulation stays f32 in-kernel).
                w = w.reshape(9 * cin, cout).astype(jnp.bfloat16)
                self.conv_params.append((w, jnp.zeros((1, cout), jnp.float32)))

    def __call__(self, img, target_layer_names):
        # img: NCHW (PyTorch convention), float32
        unbatched = img.ndim == 3
        if unbatched:
            img = img[None]
        x = jnp.transpose(img, (0, 2, 3, 1))               # NCHW -> NHWC glue
        N, H, W, C0 = x.shape
        n_pool = sum(1 for s in self.layer_cfg if s[0] == "maxpool")
        assert H % (2 ** n_pool) == 0 and W % (2 ** n_pool) == 0, \
            "spatial dims must be divisible by 2**num_maxpools"

        # Static walk of the stack: which layer outputs must leave the kernel,
        # mirroring the PyTorch block/layer naming exactly.
        captures = []
        block_count, layer_count = 1, 1
        ch, cw, cc = H, W, C0
        for li, spec in enumerate(self.layer_cfg):
            kind = spec[0]
            if kind == "conv":
                cc = spec[2]
            elif kind == "maxpool":
                ch //= 2
                cw //= 2
            name = f"{block_count}_{layer_count}"
            if kind == self.layer_type:
                if name in target_layer_names:
                    captures.append((li, (ch, cw, cc)))
                layer_count += 1
            if kind == "maxpool":
                block_count += 1
                layer_count = 1
        if not captures:
            return []

        feats = fused_feature_stack(x, self.conv_params, self.mean,
                                    self.inv_std, self.layer_cfg, captures)
        out = []
        for f, (_, (fh, fw, fc)) in zip(feats, captures):
            f = f.reshape(f.shape[0], fh, fw, fc)          # undo lane folding
            out.append(jnp.transpose(f, (0, 3, 1, 2)))     # NHWC -> NCHW glue
        if unbatched:
            out = [f[0] for f in out]
        return out


if __name__ == "__main__":
    key = jax.random.PRNGKey(0)
    img = jax.random.uniform(key, (2, 3, 16, 16), dtype=jnp.float32)  # NCHW, [0,1)

    extractor = FeatureExtractor("vgg_tiny", layer_type="relu", trainable=False,
                                 key=jax.random.PRNGKey(0))
    feats = extractor(img, ["1_2", "2_1"])
    feats = jax.block_until_ready(feats)

    assert feats[0].shape == (2, 8, 16, 16)    # relu 1_2 (pre-pool resolution)
    assert feats[1].shape == (2, 16, 8, 8)     # relu 2_1 (after first maxpool)
    assert all(bool(jnp.all(jnp.isfinite(f))) for f in feats)
    print("KERNEL_OK")
</pallas_src>

<mosaic_0001>
module attributes {stable_mosaic.version = 11 : i64} {
  func.func @kernel(%arg0: i32, %arg1: memref<1x16x16x3xf32, #tpu.memory_space<vmem>>, %arg2: memref<1x3xf32, #tpu.memory_space<vmem>>, %arg3: memref<1x3xf32, #tpu.memory_space<vmem>>, %arg4: memref<27x8xbf16, #tpu.memory_space<vmem>>, %arg5: memref<1x8xf32, #tpu.memory_space<vmem>>, %arg6: memref<72x8xbf16, #tpu.memory_space<vmem>>, %arg7: memref<1x8xf32, #tpu.memory_space<vmem>>, %arg8: memref<72x16xbf16, #tpu.memory_space<vmem>>, %arg9: memref<1x16xf32, #tpu.memory_space<vmem>>, %arg10: memref<144x16xbf16, #tpu.memory_space<vmem>>, %arg11: memref<1x16xf32, #tpu.memory_space<vmem>>, %arg12: memref<1x16x128xf32, #tpu.memory_space<vmem>>, %arg13: memref<1x8x128xf32, #tpu.memory_space<vmem>>, %arg14: memref<18x18x16xf32, #tpu.memory_space<vmem>>, %arg15: memref<8x16x16xf32, #tpu.memory_space<vmem>>) attributes {dimension_semantics = [#tpu.dimension_semantics<parallel>], iteration_bounds = array<i64: 2>, scalar_prefetch = 0 : i64, scratch_operands = 2 : i64, tpu.core_type = #tpu.core_type<tc>, window_params = [{transform_indices = @transform_0, window_bounds = array<i64: 1, 16, 16, 3>}, {pipeline_mode = #tpu.pipeline_mode<synchronous>, transform_indices = @transform_1, window_bounds = array<i64: 1, 3>}, {pipeline_mode = #tpu.pipeline_mode<synchronous>, transform_indices = @transform_2, window_bounds = array<i64: 1, 3>}, {pipeline_mode = #tpu.pipeline_mode<synchronous>, transform_indices = @transform_3, window_bounds = array<i64: 27, 8>}, {pipeline_mode = #tpu.pipeline_mode<synchronous>, transform_indices = @transform_4, window_bounds = array<i64: 1, 8>}, {pipeline_mode = #tpu.pipeline_mode<synchronous>, transform_indices = @transform_5, window_bounds = array<i64: 72, 8>}, {pipeline_mode = #tpu.pipeline_mode<synchronous>, transform_indices = @transform_6, window_bounds = array<i64: 1, 8>}, {pipeline_mode = #tpu.pipeline_mode<synchronous>, transform_indices = @transform_7, window_bounds = array<i64: 72, 16>}, {pipeline_mode = #tpu.pipeline_mode<synchronous>, transform_indices = @transform_8, window_bounds = array<i64: 1, 16>}, {pipeline_mode = #tpu.pipeline_mode<synchronous>, transform_indices = @transform_9, window_bounds = array<i64: 144, 16>}, {pipeline_mode = #tpu.pipeline_mode<synchronous>, transform_indices = @transform_10, window_bounds = array<i64: 1, 16>}, {transform_indices = @transform_11, window_bounds = array<i64: 1, 16, 128>}, {transform_indices = @transform_12, window_bounds = array<i64: 1, 8, 128>}]} {
    %c0 = arith.constant 0 : index
    %c0_0 = arith.constant 0 : index
    %c0_1 = arith.constant 0 : index
    %c0_2 = arith.constant 0 : index
    %0 = vector.load %arg1[%c0, %c0_0, %c0_1, %c0_2] : memref<1x16x16x3xf32, #tpu.memory_space<vmem>>, vector<1x16x16x3xf32>
    %1 = vector.shape_cast %0 : vector<1x16x16x3xf32> to vector<16x16x3xf32>
    %c0_3 = arith.constant 0 : index
    %c0_4 = arith.constant 0 : index
    %2 = vector.load %arg2[%c0_3, %c0_4] : memref<1x3xf32, #tpu.memory_space<vmem>>, vector<1x3xf32>
    %3 = vector.shape_cast %2 : vector<1x3xf32> to vector<1x1x3xf32>
    %4 = vector.broadcast %3 : vector<1x1x3xf32> to vector<16x16x3xf32>
    %5 = arith.subf %1, %4 : vector<16x16x3xf32>
    %c0_5 = arith.constant 0 : index
    %c0_6 = arith.constant 0 : index
    %6 = vector.load %arg3[%c0_5, %c0_6] : memref<1x3xf32, #tpu.memory_space<vmem>>, vector<1x3xf32>
    %7 = vector.shape_cast %6 : vector<1x3xf32> to vector<1x1x3xf32>
    %8 = vector.broadcast %7 : vector<1x1x3xf32> to vector<16x16x3xf32>
    %9 = arith.mulf %5, %8 : vector<16x16x3xf32>
    %cst = arith.constant 0.000000e+00 : f32
    %10 = vector.broadcast %cst : f32 to vector<1x18x3xf32>
    %cst_7 = arith.constant 0.000000e+00 : f32
    %11 = vector.broadcast %cst_7 : f32 to vector<18x1x3xf32>
    %c0_8 = arith.constant 0 : index
    %c0_9 = arith.constant 0 : index
    %c0_10 = arith.constant 0 : index
    %12 = vector.load %arg14[%c0_8, %c0_9, %c0_10] : memref<18x18x16xf32, #tpu.memory_space<vmem>>, vector<1x18x3xf32>
    tpu.vector_store %arg14[%c0_8, %c0_9, %c0_10], %10 {strides = array<i32>} : memref<18x18x16xf32, #tpu.memory_space<vmem>>, vector<1x18x3xf32>,
    %c17 = arith.constant 17 : index
    %c0_11 = arith.constant 0 : index
    %c0_12 = arith.constant 0 : index
    %13 = vector.load %arg14[%c17, %c0_11, %c0_12] : memref<18x18x16xf32, #tpu.memory_space<vmem>>, vector<1x18x3xf32>
    tpu.vector_store %arg14[%c17, %c0_11, %c0_12], %10 {strides = array<i32>} : memref<18x18x16xf32, #tpu.memory_space<vmem>>, vector<1x18x3xf32>,
    %c0_13 = arith.constant 0 : index
    %c0_14 = arith.constant 0 : index
    %c0_15 = arith.constant 0 : index
    %14 = vector.load %arg14[%c0_13, %c0_14, %c0_15] : memref<18x18x16xf32, #tpu.memory_space<vmem>>, vector<18x1x3xf32>
    tpu.vector_store %arg14[%c0_13, %c0_14, %c0_15], %11 {strides = array<i32>} : memref<18x18x16xf32, #tpu.memory_space<vmem>>, vector<18x1x3xf32>,
    %c0_16 = arith.constant 0 : index
    %c17_17 = arith.constant 17 : index
    %c0_18 = arith.constant 0 : index
    %15 = vector.load %arg14[%c0_16, %c17_17, %c0_18] : memref<18x18x16xf32, #tpu.memory_space<vmem>>, vector<18x1x3xf32>
    tpu.vector_store %arg14[%c0_16, %c17_17, %c0_18], %11 {strides = array<i32>} : memref<18x18x16xf32, #tpu.memory_space<vmem>>, vector<18x1x3xf32>,
    %c1 = arith.constant 1 : index
    %c1_19 = arith.constant 1 : index
    %c0_20 = arith.constant 0 : index
    %16 = vector.load %arg14[%c1, %c1_19, %c0_20] : memref<18x18x16xf32, #tpu.memory_space<vmem>>, vector<16x16x3xf32>
    tpu.vector_store %arg14[%c1, %c1_19, %c0_20], %9 {strides = array<i32>} : memref<18x18x16xf32, #tpu.memory_space<vmem>>, vector<16x16x3xf32>,
    %c0_21 = arith.constant 0 : index
    %c0_22 = arith.constant 0 : index
    %c0_23 = arith.constant 0 : index
    %17 = vector.load %arg14[%c0_21, %c0_22, %c0_23] : memref<18x18x16xf32, #tpu.memory_space<vmem>>, vector<16x16x3xf32>
    %18 = vector.shape_cast %17 : vector<16x16x3xf32> to vector<256x3xf32>
    %c0_24 = arith.constant 0 : index
    %c1_25 = arith.constant 1 : index
    %c0_26 = arith.constant 0 : index
    %19 = vector.load %arg14[%c0_24, %c1_25, %c0_26] : memref<18x18x16xf32, #tpu.memory_space<vmem>>, vector<16x16x3xf32>
    %20 = vector.shape_cast %19 : vector<16x16x3xf32> to vector<256x3xf32>
    %c0_27 = arith.constant 0 : index
    %c2 = arith.constant 2 : index
    %c0_28 = arith.constant 0 : index
    %21 = vector.load %arg14[%c0_27, %c2, %c0_28] : memref<18x18x16xf32, #tpu.memory_space<vmem>>, vector<16x16x3xf32>
    %22 = vector.shape_cast %21 : vector<16x16x3xf32> to vector<256x3xf32>
    %c1_29 = arith.constant 1 : index
    %c0_30 = arith.constant 0 : index
    %c0_31 = arith.constant 0 : index
    %23 = vector.load %arg14[%c1_29, %c0_30, %c0_31] : memref<18x18x16xf32, #tpu.memory_space<vmem>>, vector<16x16x3xf32>
    %24 = vector.shape_cast %23 : vector<16x16x3xf32> to vector<256x3xf32>
    %c1_32 = arith.constant 1 : index
    %c1_33 = arith.constant 1 : index
    %c0_34 = arith.constant 0 : index
    %25 = vector.load %arg14[%c1_32, %c1_33, %c0_34] : memref<18x18x16xf32, #tpu.memory_space<vmem>>, vector<16x16x3xf32>
    %26 = vector.shape_cast %25 : vector<16x16x3xf32> to vector<256x3xf32>
    %c1_35 = arith.constant 1 : index
    %c2_36 = arith.constant 2 : index
    %c0_37 = arith.constant 0 : index
    %27 = vector.load %arg14[%c1_35, %c2_36, %c0_37] : memref<18x18x16xf32, #tpu.memory_space<vmem>>, vector<16x16x3xf32>
    %28 = vector.shape_cast %27 : vector<16x16x3xf32> to vector<256x3xf32>
    %c2_38 = arith.constant 2 : index
    %c0_39 = arith.constant 0 : index
    %c0_40 = arith.constant 0 : index
    %29 = vector.load %arg14[%c2_38, %c0_39, %c0_40] : memref<18x18x16xf32, #tpu.memory_space<vmem>>, vector<16x16x3xf32>
    %30 = vector.shape_cast %29 : vector<16x16x3xf32> to vector<256x3xf32>
    %c2_41 = arith.constant 2 : index
    %c1_42 = arith.constant 1 : index
    %c0_43 = arith.constant 0 : index
    %31 = vector.load %arg14[%c2_41, %c1_42, %c0_43] : memref<18x18x16xf32, #tpu.memory_space<vmem>>, vector<16x16x3xf32>
    %32 = vector.shape_cast %31 : vector<16x16x3xf32> to vector<256x3xf32>
    %c2_44 = arith.constant 2 : index
    %c2_45 = arith.constant 2 : index
    %c0_46 = arith.constant 0 : index
    %33 = vector.load %arg14[%c2_44, %c2_45, %c0_46] : memref<18x18x16xf32, #tpu.memory_space<vmem>>, vector<16x16x3xf32>
    %34 = vector.shape_cast %33 : vector<16x16x3xf32> to vector<256x3xf32>
    %35 = tpu.concatenate %18, %20, %22, %24, %26, %28, %30, %32, %34 in 1 : vector<256x3xf32>, vector<256x3xf32>, vector<256x3xf32>, vector<256x3xf32>, vector<256x3xf32>, vector<256x3xf32>, vector<256x3xf32>, vector<256x3xf32>, vector<256x3xf32> -> vector<256x27xf32>
    %36 = arith.truncf %35 : vector<256x27xf32> to vector<256x27xbf16>
    %c0_47 = arith.constant 0 : index
    %c0_48 = arith.constant 0 : index
    %37 = vector.load %arg4[%c0_47, %c0_48] : memref<27x8xbf16, #tpu.memory_space<vmem>>, vector<27x8xbf16>
    %cst_49 = arith.constant dense<0.000000e+00> : vector<256x8xf32>
    %38 = tpu.matmul %36, %37, %cst_49 {dimension_numbers = #tpu.dot_dimension_numbers<[1], [0], [0], [1], [0, 0, 1, 1], [], []>} : vector<256x27xbf16>, vector<27x8xbf16>, vector<256x8xf32> -> vector<256x8xf32>
    %c0_50 = arith.constant 0 : index
    %c0_51 = arith.constant 0 : index
    %39 = vector.load %arg5[%c0_50, %c0_51] : memref<1x8xf32, #tpu.memory_space<vmem>>, vector<1x8xf32>
    %40 = vector.broadcast %39 : vector<1x8xf32> to vector<256x8xf32>
    %41 = arith.addf %38, %40 : vector<256x8xf32>
    %42 = vector.shape_cast %41 : vector<256x8xf32> to vector<16x16x8xf32>
    %cst_52 = arith.constant 0.000000e+00 : f32
    %43 = vector.broadcast %cst_52 : f32 to vector<16x16x8xf32>
    %44 = arith.maximumf %42, %43 : vector<16x16x8xf32>
    %cst_53 = arith.constant 0.000000e+00 : f32
    %45 = vector.broadcast %cst_53 : f32 to vector<1x18x8xf32>
    %cst_54 = arith.constant 0.000000e+00 : f32
    %46 = vector.broadcast %cst_54 : f32 to vector<18x1x8xf32>
    %c0_55 = arith.constant 0 : index
    %c0_56 = arith.constant 0 : index
    %c0_57 = arith.constant 0 : index
    %47 = vector.load %arg14[%c0_55, %c0_56, %c0_57] : memref<18x18x16xf32, #tpu.memory_space<vmem>>, vector<1x18x8xf32>
    tpu.vector_store %arg14[%c0_55, %c0_56, %c0_57], %45 {strides = array<i32>} : memref<18x18x16xf32, #tpu.memory_space<vmem>>, vector<1x18x8xf32>,
    %c17_58 = arith.constant 17 : index
    %c0_59 = arith.constant 0 : index
    %c0_60 = arith.constant 0 : index
    %48 = vector.load %arg14[%c17_58, %c0_59, %c0_60] : memref<18x18x16xf32, #tpu.memory_space<vmem>>, vector<1x18x8xf32>
    tpu.vector_store %arg14[%c17_58, %c0_59, %c0_60], %45 {strides = array<i32>} : memref<18x18x16xf32, #tpu.memory_space<vmem>>, vector<1x18x8xf32>,
    %c0_61 = arith.constant 0 : index
    %c0_62 = arith.constant 0 : index
    %c0_63 = arith.constant 0 : index
    %49 = vector.load %arg14[%c0_61, %c0_62, %c0_63] : memref<18x18x16xf32, #tpu.memory_space<vmem>>, vector<18x1x8xf32>
    tpu.vector_store %arg14[%c0_61, %c0_62, %c0_63], %46 {strides = array<i32>} : memref<18x18x16xf32, #tpu.memory_space<vmem>>, vector<18x1x8xf32>,
    %c0_64 = arith.constant 0 : index
    %c17_65 = arith.constant 17 : index
    %c0_66 = arith.constant 0 : index
    %50 = vector.load %arg14[%c0_64, %c17_65, %c0_66] : memref<18x18x16xf32, #tpu.memory_space<vmem>>, vector<18x1x8xf32>
    tpu.vector_store %arg14[%c0_64, %c17_65, %c0_66], %46 {strides = array<i32>} : memref<18x18x16xf32, #tpu.memory_space<vmem>>, vector<18x1x8xf32>,
    %c1_67 = arith.constant 1 : index
    %c1_68 = arith.constant 1 : index
    %c0_69 = arith.constant 0 : index
    %51 = vector.load %arg14[%c1_67, %c1_68, %c0_69] : memref<18x18x16xf32, #tpu.memory_space<vmem>>, vector<16x16x8xf32>
    tpu.vector_store %arg14[%c1_67, %c1_68, %c0_69], %44 {strides = array<i32>} : memref<18x18x16xf32, #tpu.memory_space<vmem>>, vector<16x16x8xf32>,
    %c0_70 = arith.constant 0 : index
    %c0_71 = arith.constant 0 : index
    %c0_72 = arith.constant 0 : index
    %52 = vector.load %arg14[%c0_70, %c0_71, %c0_72] : memref<18x18x16xf32, #tpu.memory_space<vmem>>, vector<16x16x8xf32>
    %53 = vector.shape_cast %52 : vector<16x16x8xf32> to vector<256x8xf32>
    %c0_73 = arith.constant 0 : index
    %c1_74 = arith.constant 1 : index
    %c0_75 = arith.constant 0 : index
    %54 = vector.load %arg14[%c0_73, %c1_74, %c0_75] : memref<18x18x16xf32, #tpu.memory_space<vmem>>, vector<16x16x8xf32>
    %55 = vector.shape_cast %54 : vector<16x16x8xf32> to vector<256x8xf32>
    %c0_76 = arith.constant 0 : index
    %c2_77 = arith.constant 2 : index
    %c0_78 = arith.constant 0 : index
    %56 = vector.load %arg14[%c0_76, %c2_77, %c0_78] : memref<18x18x16xf32, #tpu.memory_space<vmem>>, vector<16x16x8xf32>
    %57 = vector.shape_cast %56 : vector<16x16x8xf32> to vector<256x8xf32>
    %c1_79 = arith.constant 1 : index
    %c0_80 = arith.constant 0 : index
    %c0_81 = arith.constant 0 : index
    %58 = vector.load %arg14[%c1_79, %c0_80, %c0_81] : memref<18x18x16xf32, #tpu.memory_space<vmem>>, vector<16x16x8xf32>
    %59 = vector.shape_cast %58 : vector<16x16x8xf32> to vector<256x8xf32>
    %c1_82 = arith.constant 1 : index
    %c1_83 = arith.constant 1 : index
    %c0_84 = arith.constant 0 : index
    %60 = vector.load %arg14[%c1_82, %c1_83, %c0_84] : memref<18x18x16xf32, #tpu.memory_space<vmem>>, vector<16x16x8xf32>
    %61 = vector.shape_cast %60 : vector<16x16x8xf32> to vector<256x8xf32>
    %c1_85 = arith.constant 1 : index
    %c2_86 = arith.constant 2 : index
    %c0_87 = arith.constant 0 : index
    %62 = vector.load %arg14[%c1_85, %c2_86, %c0_87] : memref<18x18x16xf32, #tpu.memory_space<vmem>>, vector<16x16x8xf32>
    %63 = vector.shape_cast %62 : vector<16x16x8xf32> to vector<256x8xf32>
    %c2_88 = arith.constant 2 : index
    %c0_89 = arith.constant 0 : index
    %c0_90 = arith.constant 0 : index
    %64 = vector.load %arg14[%c2_88, %c0_89, %c0_90] : memref<18x18x16xf32, #tpu.memory_space<vmem>>, vector<16x16x8xf32>
    %65 = vector.shape_cast %64 : vector<16x16x8xf32> to vector<256x8xf32>
    %c2_91 = arith.constant 2 : index
    %c1_92 = arith.constant 1 : index
    %c0_93 = arith.constant 0 : index
    %66 = vector.load %arg14[%c2_91, %c1_92, %c0_93] : memref<18x18x16xf32, #tpu.memory_space<vmem>>, vector<16x16x8xf32>
    %67 = vector.shape_cast %66 : vector<16x16x8xf32> to vector<256x8xf32>
    %c2_94 = arith.constant 2 : index
    %c2_95 = arith.constant 2 : index
    %c0_96 = arith.constant 0 : index
    %68 = vector.load %arg14[%c2_94, %c2_95, %c0_96] : memref<18x18x16xf32, #tpu.memory_space<vmem>>, vector<16x16x8xf32>
    %69 = vector.shape_cast %68 : vector<16x16x8xf32> to vector<256x8xf32>
    %70 = tpu.concatenate %53, %55, %57, %59, %61, %63, %65, %67, %69 in 1 : vector<256x8xf32>, vector<256x8xf32>, vector<256x8xf32>, vector<256x8xf32>, vector<256x8xf32>, vector<256x8xf32>, vector<256x8xf32>, vector<256x8xf32>, vector<256x8xf32> -> vector<256x72xf32>
    %71 = arith.truncf %70 : vector<256x72xf32> to vector<256x72xbf16>
    %c0_97 = arith.constant 0 : index
    %c0_98 = arith.constant 0 : index
    %72 = vector.load %arg6[%c0_97, %c0_98] : memref<72x8xbf16, #tpu.memory_space<vmem>>, vector<72x8xbf16>
    %cst_99 = arith.constant dense<0.000000e+00> : vector<256x8xf32>
    %73 = tpu.matmul %71, %72, %cst_99 {dimension_numbers = #tpu.dot_dimension_numbers<[1], [0], [0], [1], [0, 0, 1, 1], [], []>} : vector<256x72xbf16>, vector<72x8xbf16>, vector<256x8xf32> -> vector<256x8xf32>
    %c0_100 = arith.constant 0 : index
    %c0_101 = arith.constant 0 : index
    %74 = vector.load %arg7[%c0_100, %c0_101] : memref<1x8xf32, #tpu.memory_space<vmem>>, vector<1x8xf32>
    %75 = vector.broadcast %74 : vector<1x8xf32> to vector<256x8xf32>
    %76 = arith.addf %73, %75 : vector<256x8xf32>
    %77 = vector.shape_cast %76 : vector<256x8xf32> to vector<16x16x8xf32>
    %cst_102 = arith.constant 0.000000e+00 : f32
    %78 = vector.broadcast %cst_102 : f32 to vector<16x16x8xf32>
    %79 = arith.maximumf %77, %78 : vector<16x16x8xf32>
    %80 = vector.shape_cast %79 : vector<16x16x8xf32> to vector<1x16x128xf32>
    %c0_103 = arith.constant 0 : index
    %c0_104 = arith.constant 0 : index
    %c0_105 = arith.constant 0 : index
    %81 = vector.load %arg12[%c0_103, %c0_104, %c0_105] : memref<1x16x128xf32, #tpu.memory_space<vmem>>, vector<1x16x128xf32>
    tpu.vector_store %arg12[%c0_103, %c0_104, %c0_105], %80 {strides = array<i32>} : memref<1x16x128xf32, #tpu.memory_space<vmem>>, vector<1x16x128xf32>,
    %82 = vector.shape_cast %79 : vector<16x16x8xf32> to vector<8x2x16x8xf32>
    %cst_106 = arith.constant dense<0xFF800000> : vector<8x16x8xf32>
    %83 = vector.multi_reduction <maximumf>, %82, %cst_106 [1] : vector<8x2x16x8xf32> to vector<8x16x8xf32>
    %c0_107 = arith.constant 0 : index
    %c0_108 = arith.constant 0 : index
    %c0_109 = arith.constant 0 : index
    %84 = vector.load %arg15[%c0_107, %c0_108, %c0_109] : memref<8x16x16xf32, #tpu.memory_space<vmem>>, vector<8x16x8xf32>
    tpu.vector_store %arg15[%c0_107, %c0_108, %c0_109], %83 {strides = array<i32>} : memref<8x16x16xf32, #tpu.memory_space<vmem>>, vector<8x16x8xf32>,
    %c0_110 = arith.constant 0 : index
    %c0_111 = arith.constant 0 : index
    %c0_112 = arith.constant 0 : index
    %85 = tpu.strided_load %arg15[%c0_110, %c0_111, %c0_112] {strides = array<i32: 1, 2, 1>} : memref<8x16x16xf32, #tpu.memory_space<vmem>>, vector<8x8x8xf32>
    %c0_113 = arith.constant 0 : index
    %c1_114 = arith.constant 1 : index
    %c0_115 = arith.constant 0 : index
    %86 = tpu.strided_load %arg15[%c0_113, %c1_114, %c0_115] {strides = array<i32: 1, 2, 1>} : memref<8x16x16xf32, #tpu.memory_space<vmem>>, vector<8x8x8xf32>
    %87 = arith.maximumf %85, %86 : vector<8x8x8xf32>
    %cst_116 = arith.constant 0.000000e+00 : f32
    %88 = vector.broadcast %cst_116 : f32 to vector<1x10x8xf32>
    %cst_117 = arith.constant 0.000000e+00 : f32
    %89 = vector.broadcast %cst_117 : f32 to vector<10x1x8xf32>
    %c0_118 = arith.constant 0 : index
    %c0_119 = arith.constant 0 : index
    %c0_120 = arith.constant 0 : index
    %90 = vector.load %arg14[%c0_118, %c0_119, %c0_120] : memref<18x18x16xf32, #tpu.memory_space<vmem>>, vector<1x10x8xf32>
    tpu.vector_store %arg14[%c0_118, %c0_119, %c0_120], %88 {strides = array<i32>} : memref<18x18x16xf32, #tpu.memory_space<vmem>>, vector<1x10x8xf32>,
    %c9 = arith.constant 9 : index
    %c0_121 = arith.constant 0 : index
    %c0_122 = arith.constant 0 : index
    %91 = vector.load %arg14[%c9, %c0_121, %c0_122] : memref<18x18x16xf32, #tpu.memory_space<vmem>>, vector<1x10x8xf32>
    tpu.vector_store %arg14[%c9, %c0_121, %c0_122], %88 {strides = array<i32>} : memref<18x18x16xf32, #tpu.memory_space<vmem>>, vector<1x10x8xf32>,
    %c0_123 = arith.constant 0 : index
    %c0_124 = arith.constant 0 : index
    %c0_125 = arith.constant 0 : index
    %92 = vector.load %arg14[%c0_123, %c0_124, %c0_125] : memref<18x18x16xf32, #tpu.memory_space<vmem>>, vector<10x1x8xf32>
    tpu.vector_store %arg14[%c0_123, %c0_124, %c0_125], %89 {strides = array<i32>} : memref<18x18x16xf32, #tpu.memory_space<vmem>>, vector<10x1x8xf32>,
    %c0_126 = arith.constant 0 : index
    %c9_127 = arith.constant 9 : index
    %c0_128 = arith.constant 0 : index
    %93 = vector.load %arg14[%c0_126, %c9_127, %c0_128] : memref<18x18x16xf32, #tpu.memory_space<vmem>>, vector<10x1x8xf32>
    tpu.vector_store %arg14[%c0_126, %c9_127, %c0_128], %89 {strides = array<i32>} : memref<18x18x16xf32, #tpu.memory_space<vmem>>, vector<10x1x8xf32>,
    %c1_129 = arith.constant 1 : index
    %c1_130 = arith.constant 1 : index
    %c0_131 = arith.constant 0 : index
    %94 = vector.load %arg14[%c1_129, %c1_130, %c0_131] : memref<18x18x16xf32, #tpu.memory_space<vmem>>, vector<8x8x8xf32>
    tpu.vector_store %arg14[%c1_129, %c1_130, %c0_131], %87 {strides = array<i32>} : memref<18x18x16xf32, #tpu.memory_space<vmem>>, vector<8x8x8xf32>,
    %c0_132 = arith.constant 0 : index
    %c0_133 = arith.constant 0 : index
    %c0_134 = arith.constant 0 : index
    %95 = vector.load %arg14[%c0_132, %c0_133, %c0_134] : memref<18x18x16xf32, #tpu.memory_space<vmem>>, vector<8x8x8xf32>
    %96 = vector.shape_cast %95 : vector<8x8x8xf32> to vector<64x8xf32>
    %c0_135 = arith.constant 0 : index
    %c1_136 = arith.constant 1 : index
    %c0_137 = arith.constant 0 : index
    %97 = vector.load %arg14[%c0_135, %c1_136, %c0_137] : memref<18x18x16xf32, #tpu.memory_space<vmem>>, vector<8x8x8xf32>
    %98 = vector.shape_cast %97 : vector<8x8x8xf32> to vector<64x8xf32>
    %c0_138 = arith.constant 0 : index
    %c2_139 = arith.constant 2 : index
    %c0_140 = arith.constant 0 : index
    %99 = vector.load %arg14[%c0_138, %c2_139, %c0_140] : memref<18x18x16xf32, #tpu.memory_space<vmem>>, vector<8x8x8xf32>
    %100 = vector.shape_cast %99 : vector<8x8x8xf32> to vector<64x8xf32>
    %c1_141 = arith.constant 1 : index
    %c0_142 = arith.constant 0 : index
    %c0_143 = arith.constant 0 : index
    %101 = vector.load %arg14[%c1_141, %c0_142, %c0_143] : memref<18x18x16xf32, #tpu.memory_space<vmem>>, vector<8x8x8xf32>
    %102 = vector.shape_cast %101 : vector<8x8x8xf32> to vector<64x8xf32>
    %c1_144 = arith.constant 1 : index
    %c1_145 = arith.constant 1 : index
    %c0_146 = arith.constant 0 : index
    %103 = vector.load %arg14[%c1_144, %c1_145, %c0_146] : memref<18x18x16xf32, #tpu.memory_space<vmem>>, vector<8x8x8xf32>
    %104 = vector.shape_cast %103 : vector<8x8x8xf32> to vector<64x8xf32>
    %c1_147 = arith.constant 1 : index
    %c2_148 = arith.constant 2 : index
    %c0_149 = arith.constant 0 : index
    %105 = vector.load %arg14[%c1_147, %c2_148, %c0_149] : memref<18x18x16xf32, #tpu.memory_space<vmem>>, vector<8x8x8xf32>
    %106 = vector.shape_cast %105 : vector<8x8x8xf32> to vector<64x8xf32>
    %c2_150 = arith.constant 2 : index
    %c0_151 = arith.constant 0 : index
    %c0_152 = arith.constant 0 : index
    %107 = vector.load %arg14[%c2_150, %c0_151, %c0_152] : memref<18x18x16xf32, #tpu.memory_space<vmem>>, vector<8x8x8xf32>
    %108 = vector.shape_cast %107 : vector<8x8x8xf32> to vector<64x8xf32>
    %c2_153 = arith.constant 2 : index
    %c1_154 = arith.constant 1 : index
    %c0_155 = arith.constant 0 : index
    %109 = vector.load %arg14[%c2_153, %c1_154, %c0_155] : memref<18x18x16xf32, #tpu.memory_space<vmem>>, vector<8x8x8xf32>
    %110 = vector.shape_cast %109 : vector<8x8x8xf32> to vector<64x8xf32>
    %c2_156 = arith.constant 2 : index
    %c2_157 = arith.constant 2 : index
    %c0_158 = arith.constant 0 : index
    %111 = vector.load %arg14[%c2_156, %c2_157, %c0_158] : memref<18x18x16xf32, #tpu.memory_space<vmem>>, vector<8x8x8xf32>
    %112 = vector.shape_cast %111 : vector<8x8x8xf32> to vector<64x8xf32>
    %113 = tpu.concatenate %96, %98, %100, %102, %104, %106, %108, %110, %112 in 1 : vector<64x8xf32>, vector<64x8xf32>, vector<64x8xf32>, vector<64x8xf32>, vector<64x8xf32>, vector<64x8xf32>, vector<64x8xf32>, vector<64x8xf32>, vector<64x8xf32> -> vector<64x72xf32>
    %114 = arith.truncf %113 : vector<64x72xf32> to vector<64x72xbf16>
    %c0_159 = arith.constant 0 : index
    %c0_160 = arith.constant 0 : index
    %115 = vector.load %arg8[%c0_159, %c0_160] : memref<72x16xbf16, #tpu.memory_space<vmem>>, vector<72x16xbf16>
    %cst_161 = arith.constant dense<0.000000e+00> : vector<64x16xf32>
    %116 = tpu.matmul %114, %115, %cst_161 {dimension_numbers = #tpu.dot_dimension_numbers<[1], [0], [0], [1], [0, 0, 1, 1], [], []>} : vector<64x72xbf16>, vector<72x16xbf16>, vector<64x16xf32> -> vector<64x16xf32>
    %c0_162 = arith.constant 0 : index
    %c0_163 = arith.constant 0 : index
    %117 = vector.load %arg9[%c0_162, %c0_163] : memref<1x16xf32, #tpu.memory_space<vmem>>, vector<1x16xf32>
    %118 = vector.broadcast %117 : vector<1x16xf32> to vector<64x16xf32>
    %119 = arith.addf %116, %118 : vector<64x16xf32>
    %120 = vector.shape_cast %119 : vector<64x16xf32> to vector<8x8x16xf32>
    %cst_164 = arith.constant 0.000000e+00 : f32
    %121 = vector.broadcast %cst_164 : f32 to vector<8x8x16xf32>
    %122 = arith.maximumf %120, %121 : vector<8x8x16xf32>
    %123 = vector.shape_cast %122 : vector<8x8x16xf32> to vector<1x8x128xf32>
    %c0_165 = arith.constant 0 : index
    %c0_166 = arith.constant 0 : index
    %c0_167 = arith.constant 0 : index
    %124 = vector.load %arg13[%c0_165, %c0_166, %c0_167] : memref<1x8x128xf32, #tpu.memory_space<vmem>>, vector<1x8x128xf32>
    tpu.vector_store %arg13[%c0_165, %c0_166, %c0_167], %123 {strides = array<i32>} : memref<1x8x128xf32, #tpu.memory_space<vmem>>, vector<1x8x128xf32>,
    %cst_168 = arith.constant 0.000000e+00 : f32
    %125 = vector.broadcast %cst_168 : f32 to vector<1x10x16xf32>
    %cst_169 = arith.constant 0.000000e+00 : f32
    %126 = vector.broadcast %cst_169 : f32 to vector<10x1x16xf32>
    %c0_170 = arith.constant 0 : index
    %c0_171 = arith.constant 0 : index
    %c0_172 = arith.constant 0 : index
    %127 = vector.load %arg14[%c0_170, %c0_171, %c0_172] : memref<18x18x16xf32, #tpu.memory_space<vmem>>, vector<1x10x16xf32>
    tpu.vector_store %arg14[%c0_170, %c0_171, %c0_172], %125 {strides = array<i32>} : memref<18x18x16xf32, #tpu.memory_space<vmem>>, vector<1x10x16xf32>,
    %c9_173 = arith.constant 9 : index
    %c0_174 = arith.constant 0 : index
    %c0_175 = arith.constant 0 : index
    %128 = vector.load %arg14[%c9_173, %c0_174, %c0_175] : memref<18x18x16xf32, #tpu.memory_space<vmem>>, vector<1x10x16xf32>
    tpu.vector_store %arg14[%c9_173, %c0_174, %c0_175], %125 {strides = array<i32>} : memref<18x18x16xf32, #tpu.memory_space<vmem>>, vector<1x10x16xf32>,
    %c0_176 = arith.constant 0 : index
    %c0_177 = arith.constant 0 : index
    %c0_178 = arith.constant 0 : index
    %129 = vector.load %arg14[%c0_176, %c0_177, %c0_178] : memref<18x18x16xf32, #tpu.memory_space<vmem>>, vector<10x1x16xf32>
    tpu.vector_store %arg14[%c0_176, %c0_177, %c0_178], %126 {strides = array<i32>} : memref<18x18x16xf32, #tpu.memory_space<vmem>>, vector<10x1x16xf32>,
    %c0_179 = arith.constant 0 : index
    %c9_180 = arith.constant 9 : index
    %c0_181 = arith.constant 0 : index
    %130 = vector.load %arg14[%c0_179, %c9_180, %c0_181] : memref<18x18x16xf32, #tpu.memory_space<vmem>>, vector<10x1x16xf32>
    tpu.vector_store %arg14[%c0_179, %c9_180, %c0_181], %126 {strides = array<i32>} : memref<18x18x16xf32, #tpu.memory_space<vmem>>, vector<10x1x16xf32>,
    %c1_182 = arith.constant 1 : index
    %c1_183 = arith.constant 1 : index
    %c0_184 = arith.constant 0 : index
    %131 = vector.load %arg14[%c1_182, %c1_183, %c0_184] : memref<18x18x16xf32, #tpu.memory_space<vmem>>, vector<8x8x16xf32>
    tpu.vector_store %arg14[%c1_182, %c1_183, %c0_184], %122 {strides = array<i32>} : memref<18x18x16xf32, #tpu.memory_space<vmem>>, vector<8x8x16xf32>,
    %c0_185 = arith.constant 0 : index
    %c0_186 = arith.constant 0 : index
    %c0_187 = arith.constant 0 : index
    %132 = vector.load %arg14[%c0_185, %c0_186, %c0_187] : memref<18x18x16xf32, #tpu.memory_space<vmem>>, vector<8x8x16xf32>
    %133 = vector.shape_cast %132 : vector<8x8x16xf32> to vector<64x16xf32>
    %c0_188 = arith.constant 0 : index
    %c1_189 = arith.constant 1 : index
    %c0_190 = arith.constant 0 : index
    %134 = vector.load %arg14[%c0_188, %c1_189, %c0_190] : memref<18x18x16xf32, #tpu.memory_space<vmem>>, vector<8x8x16xf32>
    %135 = vector.shape_cast %134 : vector<8x8x16xf32> to vector<64x16xf32>
    %c0_191 = arith.constant 0 : index
    %c2_192 = arith.constant 2 : index
    %c0_193 = arith.constant 0 : index
    %136 = vector.load %arg14[%c0_191, %c2_192, %c0_193] : memref<18x18x16xf32, #tpu.memory_space<vmem>>, vector<8x8x16xf32>
    %137 = vector.shape_cast %136 : vector<8x8x16xf32> to vector<64x16xf32>
    %c1_194 = arith.constant 1 : index
    %c0_195 = arith.constant 0 : index
    %c0_196 = arith.constant 0 : index
    %138 = vector.load %arg14[%c1_194, %c0_195, %c0_196] : memref<18x18x16xf32, #tpu.memory_space<vmem>>, vector<8x8x16xf32>
    %139 = vector.shape_cast %138 : vector<8x8x16xf32> to vector<64x16xf32>
    %c1_197 = arith.constant 1 : index
    %c1_198 = arith.constant 1 : index
    %c0_199 = arith.constant 0 : index
    %140 = vector.load %arg14[%c1_197, %c1_198, %c0_199] : memref<18x18x16xf32, #tpu.memory_space<vmem>>, vector<8x8x16xf32>
    %141 = vector.shape_cast %140 : vector<8x8x16xf32> to vector<64x16xf32>
    %c1_200 = arith.constant 1 : index
    %c2_201 = arith.constant 2 : index
    %c0_202 = arith.constant 0 : index
    %142 = vector.load %arg14[%c1_200, %c2_201, %c0_202] : memref<18x18x16xf32, #tpu.memory_space<vmem>>, vector<8x8x16xf32>
    %143 = vector.shape_cast %142 : vector<8x8x16xf32> to vector<64x16xf32>
    %c2_203 = arith.constant 2 : index
    %c0_204 = arith.constant 0 : index
    %c0_205 = arith.constant 0 : index
    %144 = vector.load %arg14[%c2_203, %c0_204, %c0_205] : memref<18x18x16xf32, #tpu.memory_space<vmem>>, vector<8x8x16xf32>
    %145 = vector.shape_cast %144 : vector<8x8x16xf32> to vector<64x16xf32>
    %c2_206 = arith.constant 2 : index
    %c1_207 = arith.constant 1 : index
    %c0_208 = arith.constant 0 : index
    %146 = vector.load %arg14[%c2_206, %c1_207, %c0_208] : memref<18x18x16xf32, #tpu.memory_space<vmem>>, vector<8x8x16xf32>
    %147 = vector.shape_cast %146 : vector<8x8x16xf32> to vector<64x16xf32>
    %c2_209 = arith.constant 2 : index
    %c2_210 = arith.constant 2 : index
    %c0_211 = arith.constant 0 : index
    %148 = vector.load %arg14[%c2_209, %c2_210, %c0_211] : memref<18x18x16xf32, #tpu.memory_space<vmem>>, vector<8x8x16xf32>
    %149 = vector.shape_cast %148 : vector<8x8x16xf32> to vector<64x16xf32>
    %150 = tpu.concatenate %133, %135, %137, %139, %141, %143, %145, %147, %149 in 1 : vector<64x16xf32>, vector<64x16xf32>, vector<64x16xf32>, vector<64x16xf32>, vector<64x16xf32>, vector<64x16xf32>, vector<64x16xf32>, vector<64x16xf32>, vector<64x16xf32> -> vector<64x144xf32>
    %151 = arith.truncf %150 : vector<64x144xf32> to vector<64x144xbf16>
    %c0_212 = arith.constant 0 : index
    %c0_213 = arith.constant 0 : index
    %152 = vector.load %arg10[%c0_212, %c0_213] : memref<144x16xbf16, #tpu.memory_space<vmem>>, vector<144x16xbf16>
    %cst_214 = arith.constant dense<0.000000e+00> : vector<64x16xf32>
    %153 = tpu.matmul %151, %152, %cst_214 {dimension_numbers = #tpu.dot_dimension_numbers<[1], [0], [0], [1], [0, 0, 1, 1], [], []>} : vector<64x144xbf16>, vector<144x16xbf16>, vector<64x16xf32> -> vector<64x16xf32>
    %c0_215 = arith.constant 0 : index
    %c0_216 = arith.constant 0 : index
    %154 = vector.load %arg11[%c0_215, %c0_216] : memref<1x16xf32, #tpu.memory_space<vmem>>, vector<1x16xf32>
    %155 = vector.broadcast %154 : vector<1x16xf32> to vector<64x16xf32>
    %156 = arith.addf %153, %155 : vector<64x16xf32>
    %157 = vector.shape_cast %156 : vector<64x16xf32> to vector<8x8x16xf32>
    %cst_217 = arith.constant 0.000000e+00 : f32
    %158 = vector.broadcast %cst_217 : f32 to vector<8x8x16xf32>
    %159 = arith.maximumf %157, %158 : vector<8x8x16xf32>
    %160 = vector.shape_cast %159 : vector<8x8x16xf32> to vector<4x2x8x16xf32>
    %cst_218 = arith.constant dense<0xFF800000> : vector<4x8x16xf32>
    %161 = vector.multi_reduction <maximumf>, %160, %cst_218 [1] : vector<4x2x8x16xf32> to vector<4x8x16xf32>
    %c0_219 = arith.constant 0 : index
    %c0_220 = arith.constant 0 : index
    %c0_221 = arith.constant 0 : index
    %162 = vector.load %arg15[%c0_219, %c0_220, %c0_221] : memref<8x16x16xf32, #tpu.memory_space<vmem>>, vector<4x8x16xf32>
    tpu.vector_store %arg15[%c0_219, %c0_220, %c0_221], %161 {strides = array<i32>} : memref<8x16x16xf32, #tpu.memory_space<vmem>>, vector<4x8x16xf32>,
    return
  }
  func.func @transform_0(%arg0: i32) -> (i32, i32, i32, i32) {
    %c0_i32 = arith.constant 0 : i32
    %c0_i32_0 = arith.constant 0 : i32
    %c0_i32_1 = arith.constant 0 : i32
    %c0_i32_2 = arith.constant 0 : i32
    return %arg0, %c0_i32, %c0_i32_0, %c0_i32_1 : i32, i32, i32, i32
  }
  func.func @transform_1(%arg0: i32) -> (i32, i32) {
    %c0_i32 = arith.constant 0 : i32
    %c0_i32_0 = arith.constant 0 : i32
    %c0_i32_1 = arith.constant 0 : i32
    return %c0_i32, %c0_i32_0 : i32, i32
  }
  func.func @transform_2(%arg0: i32) -> (i32, i32) {
    %c0_i32 = arith.constant 0 : i32
    %c0_i32_0 = arith.constant 0 : i32
    %c0_i32_1 = arith.constant 0 : i32
    return %c0_i32, %c0_i32_0 : i32, i32
  }
  func.func @transform_3(%arg0: i32) -> (i32, i32) {
    %c0_i32 = arith.constant 0 : i32
    %c0_i32_0 = arith.constant 0 : i32
    %c0_i32_1 = arith.constant 0 : i32
    return %c0_i32, %c0_i32_0 : i32, i32
  }
  func.func @transform_4(%arg0: i32) -> (i32, i32) {
    %c0_i32 = arith.constant 0 : i32
    %c0_i32_0 = arith.constant 0 : i32
    %c0_i32_1 = arith.constant 0 : i32
    return %c0_i32, %c0_i32_0 : i32, i32
  }
  func.func @transform_5(%arg0: i32) -> (i32, i32) {
    %c0_i32 = arith.constant 0 : i32
    %c0_i32_0 = arith.constant 0 : i32
    %c0_i32_1 = arith.constant 0 : i32
    return %c0_i32, %c0_i32_0 : i32, i32
  }
  func.func @transform_6(%arg0: i32) -> (i32, i32) {
    %c0_i32 = arith.constant 0 : i32
    %c0_i32_0 = arith.constant 0 : i32
    %c0_i32_1 = arith.constant 0 : i32
    return %c0_i32, %c0_i32_0 : i32, i32
  }
  func.func @transform_7(%arg0: i32) -> (i32, i32) {
    %c0_i32 = arith.constant 0 : i32
    %c0_i32_0 = arith.constant 0 : i32
    %c0_i32_1 = arith.constant 0 : i32
    return %c0_i32, %c0_i32_0 : i32, i32
  }
  func.func @transform_8(%arg0: i32) -> (i32, i32) {
    %c0_i32 = arith.constant 0 : i32
    %c0_i32_0 = arith.constant 0 : i32
    %c0_i32_1 = arith.constant 0 : i32
    return %c0_i32, %c0_i32_0 : i32, i32
  }
  func.func @transform_9(%arg0: i32) -> (i32, i32) {
    %c0_i32 = arith.constant 0 : i32
    %c0_i32_0 = arith.constant 0 : i32
    %c0_i32_1 = arith.constant 0 : i32
    return %c0_i32, %c0_i32_0 : i32, i32
  }
  func.func @transform_10(%arg0: i32) -> (i32, i32) {
    %c0_i32 = arith.constant 0 : i32
    %c0_i32_0 = arith.constant 0 : i32
    %c0_i32_1 = arith.constant 0 : i32
    return %c0_i32, %c0_i32_0 : i32, i32
  }
  func.func @transform_11(%arg0: i32) -> (i32, i32, i32) {
    %c0_i32 = arith.constant 0 : i32
    %c0_i32_0 = arith.constant 0 : i32
    %c0_i32_1 = arith.constant 0 : i32
    return %arg0, %c0_i32, %c0_i32_0 : i32, i32, i32
  }
  func.func @transform_12(%arg0: i32) -> (i32, i32, i32) {
    %c0_i32 = arith.constant 0 : i32
    %c0_i32_0 = arith.constant 0 : i32
    %c0_i32_1 = arith.constant 0 : i32
    return %arg0, %c0_i32, %c0_i32_0 : i32, i32, i32
  }
}

</mosaic_0001>

<llo_original>
// kernel: tpu_custom_call.1
$region0: #{tpu_custom_call.1}
  #allocation0 [shape = 'u32[]', space=smem, size = 0x4, offset = 0x4, fixed_abs, tag = 'smem constant byte address 0x4 - core index']
  #allocation1 [shape = 'u32[144,128]{1,0:T(1,128)}', space=vmem, size = 0x12000, scoped, tag = 'internal scratch']
  #allocation2 [shape = 'f32[18,18,16]{2,1,0:T(8,128)}', space=vmem, size = 0x36000, scoped, tag = 'scratch operand']
  #allocation3 [shape = 'f32[8,16,16]{2,1,0:T(8,128)}', space=vmem, size = 0x10000, scoped, tag = 'scratch operand']
  %s0 = inlined_call_operand.vmem [shape: f32[2,16,16,3], index: 0, kind: input, shape index: {}]
  %s1 = inlined_call_operand.vmem [shape: f32[1,3], index: 1, kind: input, shape index: {}]
  %s2 = inlined_call_operand.vmem [shape: f32[1,3], index: 2, kind: input, shape index: {}]
  %s3 = inlined_call_operand.vmem [shape: bf16[27,8], index: 3, kind: input, shape index: {}]
  %s4 = inlined_call_operand.vmem [shape: f32[1,8], index: 4, kind: input, shape index: {}]
  %s5 = inlined_call_operand.vmem [shape: bf16[72,8], index: 5, kind: input, shape index: {}]
  %s6 = inlined_call_operand.vmem [shape: f32[1,8], index: 6, kind: input, shape index: {}]
  %s7 = inlined_call_operand.vmem [shape: bf16[72,16], index: 7, kind: input, shape index: {}]
  %s8 = inlined_call_operand.vmem [shape: f32[1,16], index: 8, kind: input, shape index: {}]
  %s9 = inlined_call_operand.vmem [shape: bf16[144,16], index: 9, kind: input, shape index: {}]
  %s10 = inlined_call_operand.vmem [shape: f32[1,16], index: 10, kind: input, shape index: {}]
  %s11 = inlined_call_operand.hbm [shape: f32[2,16,128], index: 11, kind: output, shape index: {0}]
  %s12 = inlined_call_operand.hbm [shape: f32[2,8,128], index: 12, kind: output, shape index: {1}]
  %13 = xla_tuple %s11, %s12
  %s14 = sld [smem:[#allocation0]]
  $region85: #{tpu_custom_call.1} parent=0
    _
  %s16 = ssub.s32 1, %s14
  %s17 = scalar_select 0, %s16, %s14
  $region1: #{tpu_custom_call.1} parent=0
    #allocation4 [shape = 'u8[16384]{0}', space=vmem, size = 0x4000, scoped, tag = 'output window, operand 0']
    #allocation5 [shape = 's32[2]{0}', space=sflag, size = 0x8, scoped, tag = 'scoped memory for tpu_custom_call.1']
    #allocation6 [shape = 'u8[8192]{0}', space=vmem, size = 0x2000, scoped, tag = 'output window, operand 1']
    #allocation7 [shape = 's32[2]{0}', space=sflag, size = 0x8, scoped, tag = 'scoped memory for tpu_custom_call.1']
    %18 = vsyncpa [#allocation5], 0
    %s19 = scalar_lea.sflag [#allocation5], 1
    %20 = vsyncpa %s19, 0
    %21 = vsyncpa [#allocation7], 0
    %s22 = scalar_lea.sflag [#allocation7], 1
    %23 = vsyncpa %s22, 0
    loop: start=0, step=1, limit=4
    $region2: #{tpu_custom_call.1} parent=1 // loop_pre_header
      _
    $region3: #{tpu_custom_call.1} parent=1 // loop_header
      %s25 = sphi 0, %s29
      %p26 = scmp.ge.s32.totalorder %s25, 4
      %s35 = sphi 0, %s37
      %s38 = sphi 0, %s35
      %s39 = sphi 0, %s38
      %s55 = sphi 0, %s39
      %s59 = sphi 0, %s59
      %s61 = sphi 0, %s59
      %s62 = sphi 0, %s61
      %s76 = sphi 0, %s62
      %s80 = sphi 0, %s80
      %s82 = sphi 0, %s80
      %s83 = sphi 0, %s82
      %s97 = sphi 0, %s83
      %s101 = sphi 0, %s101
      %s103 = sphi 0, %s101
      %s104 = sphi 0, %s103
      %s118 = sphi 0, %s104
      %s122 = sphi 0, %s122
      %s124 = sphi 0, %s122
      %s125 = sphi 0, %s124
      %s139 = sphi 0, %s125
      %s143 = sphi 0, %s143
      %s145 = sphi 0, %s143
      %s146 = sphi 0, %s145
      %s160 = sphi 0, %s146
      %s164 = sphi 0, %s164
      %s166 = sphi 0, %s164
      %s167 = sphi 0, %s166
      %s181 = sphi 0, %s167
      %s185 = sphi 0, %s185
      %s187 = sphi 0, %s185
      %s188 = sphi 0, %s187
      %s202 = sphi 0, %s188
      %s206 = sphi 0, %s206
      %s208 = sphi 0, %s206
      %s209 = sphi 0, %s208
      %s223 = sphi 0, %s209
      %s227 = sphi 0, %s227
      %s229 = sphi 0, %s227
      %s230 = sphi 0, %s229
      %s244 = sphi 0, %s230
      %s248 = sphi 0, %s248
      %s250 = sphi 0, %s248
      %s251 = sphi 0, %s250
      %s265 = sphi 0, %s251
      %s271 = sphi 0, %s273
      %s274 = sphi 0, %s271
      %s275 = sphi 0, %s274
      %s291 = sphi 0, %s275
      %s297 = sphi 0, %s299
      %s300 = sphi 0, %s297
      %s301 = sphi 0, %s300
      %s317 = sphi 0, %s301
    $region4: #{tpu_custom_call.1} parent=1 // loop_header_branch
      %28 = sbr.rel (%p26) target = $region8
    $region5: #{tpu_custom_call.1} parent=1 // loop_body
      %s30 = ssub.s32 %s25, 1
      %s31 = ssub.s32 %s25, 2
      %s32 = sadd.s32 %s25, 1
      %s33 = ssub.s32 %s25, %s32
      %p34 = scmp.eq.s32.totalorder %s33, 0
      %s36 = sadd.s32 %s35, 1
      %s37 = scalar_select %p34, %s35, %s36
      %p40 = pneg %p34
      %p41 = scmp.eq.s32.totalorder %s25, 1
      %p42 = por %p40, %p41
      %p43 = scmp.ne.s32.totalorder %s35, %s38
      %p44 = scmp.eq.s32.totalorder %s25, 0
      %p45 = por %p43, %p44
      %p46 = scmp.ne.s32.totalorder %s35, %s38
      %p47 = scmp.eq.s32.totalorder %s30, 1
      %p48 = por %p46, %p47
      %p49 = scmp.ne.s32.totalorder %s38, %s39
      %p50 = scmp.eq.s32.totalorder %s30, 0
      %p51 = por %p49, %p50
      %p52 = scmp.ne.s32.totalorder %s38, %s39
      %p53 = scmp.eq.s32.totalorder %s31, 1
      %p54 = por %p52, %p53
      %p56 = scmp.ne.s32.totalorder %s39, %s55
      %p57 = scmp.eq.s32.totalorder %s31, 0
      %p58 = por %p56, %p57
      %s60 = sadd.s32 %s59, 1
      %p63 = scmp.eq.s32.totalorder %s25, 1
      %p64 = scmp.ne.s32.totalorder %s59, %s61
      %p65 = scmp.eq.s32.totalorder %s25, 0
      %p66 = por %p64, %p65
      %p67 = scmp.ne.s32.totalorder %s59, %s61
      %p68 = scmp.eq.s32.totalorder %s30, 1
      %p69 = por %p67, %p68
      %p70 = scmp.ne.s32.totalorder %s61, %s62
      %p71 = scmp.eq.s32.totalorder %s30, 0
      %p72 = por %p70, %p71
      %p73 = scmp.ne.s32.totalorder %s61, %s62
      %p74 = scmp.eq.s32.totalorder %s31, 1
      %p75 = por %p73, %p74
      %p77 = scmp.ne.s32.totalorder %s62, %s76
      %p78 = scmp.eq.s32.totalorder %s31, 0
      %p79 = por %p77, %p78
      %s81 = sadd.s32 %s80, 1
      %p84 = scmp.eq.s32.totalorder %s25, 1
      %p85 = scmp.ne.s32.totalorder %s80, %s82
      %p86 = scmp.eq.s32.totalorder %s25, 0
      %p87 = por %p85, %p86
      %p88 = scmp.ne.s32.totalorder %s80, %s82
      %p89 = scmp.eq.s32.totalorder %s30, 1
      %p90 = por %p88, %p89
      %p91 = scmp.ne.s32.totalorder %s82, %s83
      %p92 = scmp.eq.s32.totalorder %s30, 0
      %p93 = por %p91, %p92
      %p94 = scmp.ne.s32.totalorder %s82, %s83
      %p95 = scmp.eq.s32.totalorder %s31, 1
      %p96 = por %p94, %p95
      %p98 = scmp.ne.s32.totalorder %s83, %s97
      %p99 = scmp.eq.s32.totalorder %s31, 0
      %p100 = por %p98, %p99
      %s102 = sadd.s32 %s101, 1
      %p105 = scmp.eq.s32.totalorder %s25, 1
      %p106 = scmp.ne.s32.totalorder %s101, %s103
      %p107 = scmp.eq.s32.totalorder %s25, 0
      %p108 = por %p106, %p107
      %p109 = scmp.ne.s32.totalorder %s101, %s103
      %p110 = scmp.eq.s32.totalorder %s30, 1
      %p111 = por %p109, %p110
      %p112 = scmp.ne.s32.totalorder %s103, %s104
      %p113 = scmp.eq.s32.totalorder %s30, 0
      %p114 = por %p112, %p113
      %p115 = scmp.ne.s32.totalorder %s103, %s104
      %p116 = scmp.eq.s32.totalorder %s31, 1
      %p117 = por %p115, %p116
      %p119 = scmp.ne.s32.totalorder %s104, %s118
      %p120 = scmp.eq.s32.totalorder %s31, 0
      %p121 = por %p119, %p120
      %s123 = sadd.s32 %s122, 1
      %p126 = scmp.eq.s32.totalorder %s25, 1
      %p127 = scmp.ne.s32.totalorder %s122, %s124
      %p128 = scmp.eq.s32.totalorder %s25, 0
      %p129 = por %p127, %p128
      %p130 = scmp.ne.s32.totalorder %s122, %s124
      %p131 = scmp.eq.s32.totalorder %s30, 1
      %p132 = por %p130, %p131
      %p133 = scmp.ne.s32.totalorder %s124, %s125
      %p134 = scmp.eq.s32.totalorder %s30, 0
      %p135 = por %p133, %p134
      %p136 = scmp.ne.s32.totalorder %s124, %s125
      %p137 = scmp.eq.s32.totalorder %s31, 1
      %p138 = por %p136, %p137
      %p140 = scmp.ne.s32.totalorder %s125, %s139
      %p141 = scmp.eq.s32.totalorder %s31, 0
      %p142 = por %p140, %p141
      %s144 = sadd.s32 %s143, 1
      %p147 = scmp.eq.s32.totalorder %s25, 1
      %p148 = scmp.ne.s32.totalorder %s143, %s145
      %p149 = scmp.eq.s32.totalorder %s25, 0
      %p150 = por %p148, %p149
      %p151 = scmp.ne.s32.totalorder %s143, %s145
      %p152 = scmp.eq.s32.totalorder %s30, 1
      %p153 = por %p151, %p152
      %p154 = scmp.ne.s32.totalorder %s145, %s146
      %p155 = scmp.eq.s32.totalorder %s30, 0
      %p156 = por %p154, %p155
      %p157 = scmp.ne.s32.totalorder %s145, %s146
      %p158 = scmp.eq.s32.totalorder %s31, 1
      %p159 = por %p157, %p158
      %p161 = scmp.ne.s32.totalorder %s146, %s160
      %p162 = scmp.eq.s32.totalorder %s31, 0
      %p163 = por %p161, %p162
      %s165 = sadd.s32 %s164, 1
      %p168 = scmp.eq.s32.totalorder %s25, 1
      %p169 = scmp.ne.s32.totalorder %s164, %s166
      %p170 = scmp.eq.s32.totalorder %s25, 0
      %p171 = por %p169, %p170
      %p172 = scmp.ne.s32.totalorder %s164, %s166
      %p173 = scmp.eq.s32.totalorder %s30, 1
      %p174 = por %p172, %p173
      %p175 = scmp.ne.s32.totalorder %s166, %s167
      %p176 = scmp.eq.s32.totalorder %s30, 0
      %p177 = por %p175, %p176
      %p178 = scmp.ne.s32.totalorder %s166, %s167
      %p179 = scmp.eq.s32.totalorder %s31, 1
      %p180 = por %p178, %p179
      %p182 = scmp.ne.s32.totalorder %s167, %s181
      %p183 = scmp.eq.s32.totalorder %s31, 0
      %p184 = por %p182, %p183
      %s186 = sadd.s32 %s185, 1
      %p189 = scmp.eq.s32.totalorder %s25, 1
      %p190 = scmp.ne.s32.totalorder %s185, %s187
      %p191 = scmp.eq.s32.totalorder %s25, 0
      %p192 = por %p190, %p191
      %p193 = scmp.ne.s32.totalorder %s185, %s187
      %p194 = scmp.eq.s32.totalorder %s30, 1
      %p195 = por %p193, %p194
      %p196 = scmp.ne.s32.totalorder %s187, %s188
      %p197 = scmp.eq.s32.totalorder %s30, 0
      %p198 = por %p196, %p197
      %p199 = scmp.ne.s32.totalorder %s187, %s188
      %p200 = scmp.eq.s32.totalorder %s31, 1
      %p201 = por %p199, %p200
      %p203 = scmp.ne.s32.totalorder %s188, %s202
      %p204 = scmp.eq.s32.totalorder %s31, 0
      %p205 = por %p203, %p204
      %s207 = sadd.s32 %s206, 1
      %p210 = scmp.eq.s32.totalorder %s25, 1
      %p211 = scmp.ne.s32.totalorder %s206, %s208
      %p212 = scmp.eq.s32.totalorder %s25, 0
      %p213 = por %p211, %p212
      %p214 = scmp.ne.s32.totalorder %s206, %s208
      %p215 = scmp.eq.s32.totalorder %s30, 1
      %p216 = por %p214, %p215
      %p217 = scmp.ne.s32.totalorder %s208, %s209
      %p218 = scmp.eq.s32.totalorder %s30, 0
      %p219 = por %p217, %p218
      %p220 = scmp.ne.s32.totalorder %s208, %s209
      %p221 = scmp.eq.s32.totalorder %s31, 1
      %p222 = por %p220, %p221
      %p224 = scmp.ne.s32.totalorder %s209, %s223
      %p225 = scmp.eq.s32.totalorder %s31, 0
      %p226 = por %p224, %p225
      %s228 = sadd.s32 %s227, 1
      %p231 = scmp.eq.s32.totalorder %s25, 1
      %p232 = scmp.ne.s32.totalorder %s227, %s229
      %p233 = scmp.eq.s32.totalorder %s25, 0
      %p234 = por %p232, %p233
      %p235 = scmp.ne.s32.totalorder %s227, %s229
      %p236 = scmp.eq.s32.totalorder %s30, 1
      %p237 = por %p235, %p236
      %p238 = scmp.ne.s32.totalorder %s229, %s230
      %p239 = scmp.eq.s32.totalorder %s30, 0
      %p240 = por %p238, %p239
      %p241 = scmp.ne.s32.totalorder %s229, %s230
      %p242 = scmp.eq.s32.totalorder %s31, 1
      %p243 = por %p241, %p242
      %p245 = scmp.ne.s32.totalorder %s230, %s244
      %p246 = scmp.eq.s32.totalorder %s31, 0
      %p247 = por %p245, %p246
      %s249 = sadd.s32 %s248, 1
      %p252 = scmp.eq.s32.totalorder %s25, 1
      %p253 = scmp.ne.s32.totalorder %s248, %s250
      %p254 = scmp.eq.s32.totalorder %s25, 0
      %p255 = por %p253, %p254
      %p256 = scmp.ne.s32.totalorder %s248, %s250
      %p257 = scmp.eq.s32.totalorder %s30, 1
      %p258 = por %p256, %p257
      %p259 = scmp.ne.s32.totalorder %s250, %s251
      %p260 = scmp.eq.s32.totalorder %s30, 0
      %p261 = por %p259, %p260
      %p262 = scmp.ne.s32.totalorder %s250, %s251
      %p263 = scmp.eq.s32.totalorder %s31, 1
      %p264 = por %p262, %p263
      %p266 = scmp.ne.s32.totalorder %s251, %s265
      %p267 = scmp.eq.s32.totalorder %s31, 0
      %p268 = por %p266, %p267
      %s269 = ssub.s32 %s25, %s32
      %p270 = scmp.eq.s32.totalorder %s269, 0
      %s272 = sadd.s32 %s271, 1
      %s273 = scalar_select %p270, %s271, %s272
      %p276 = pneg %p270
      %p277 = scmp.eq.s32.totalorder %s25, 1
      %p278 = por %p276, %p277
      %p279 = scmp.ne.s32.totalorder %s271, %s274
      %p280 = scmp.eq.s32.totalorder %s25, 0
      %p281 = por %p279, %p280
      %p282 = scmp.ne.s32.totalorder %s271, %s274
      %p283 = scmp.eq.s32.totalorder %s30, 1
      %p284 = por %p282, %p283
      %p285 = scmp.ne.s32.totalorder %s274, %s275
      %p286 = scmp.eq.s32.totalorder %s30, 0
      %p287 = por %p285, %p286
      %p288 = scmp.ne.s32.totalorder %s274, %s275
      %p289 = scmp.eq.s32.totalorder %s31, 1
      %p290 = por %p288, %p289
      %p292 = scmp.ne.s32.totalorder %s275, %s291
      %p293 = scmp.eq.s32.totalorder %s31, 0
      %p294 = por %p292, %p293
      %s295 = ssub.s32 %s25, %s32
      %p296 = scmp.eq.s32.totalorder %s295, 0
      %s298 = sadd.s32 %s297, 1
      %s299 = scalar_select %p296, %s297, %s298
      %p302 = pneg %p296
      %p303 = scmp.eq.s32.totalorder %s25, 1
      %p304 = por %p302, %p303
      %p305 = scmp.ne.s32.totalorder %s297, %s300
      %p306 = scmp.eq.s32.totalorder %s25, 0
      %p307 = por %p305, %p306
      %p308 = scmp.ne.s32.totalorder %s297, %s300
      %p309 = scmp.eq.s32.totalorder %s30, 1
      %p310 = por %p308, %p309
      %p311 = scmp.ne.s32.totalorder %s300, %s301
      %p312 = scmp.eq.s32.totalorder %s30, 0
      %p313 = por %p311, %p312
      %p314 = scmp.ne.s32.totalorder %s300, %s301
      %p315 = scmp.eq.s32.totalorder %s31, 1
      %p316 = por %p314, %p315
      %p318 = scmp.ne.s32.totalorder %s301, %s317
      %p319 = scmp.eq.s32.totalorder %s31, 0
      %p320 = por %p318, %p319
      %p321 = scmp.le.s32.totalorder 1, %s25
      %p322 = scmp.lt.s32.totalorder %s25, 3
      %p323 = pnand %p321, %p322
      %p324 = pneg %p323
      // Predicated region
      $region9: #{tpu_custom_call.1} parent=5 // pred_check
        _
      $region10: #{tpu_custom_call.1} parent=5 // pred_check_branch
        %326 = sbr.rel (%p323) target = $region12
      $region11: #{tpu_custom_call.1} parent=5 // pred_region
        %s327 = ssub.s32 %s25, 1
        // Predicated region
        $region13: #{tpu_custom_call.1} parent=11 // pred_check
          %p328 = pneg %p72
        $region14: #{tpu_custom_call.1} parent=11 // pred_check_branch
          %330 = sbr.rel (%p328) target = $region16
        $region15: #{tpu_custom_call.1} parent=11 // pred_region
          _
        $region16: #{tpu_custom_call.1} parent=11 // pred_fallthru
          _
        // Predicated region
        $region17: #{tpu_custom_call.1} parent=11 // pred_check
          %p331 = pneg %p93
        $region18: #{tpu_custom_call.1} parent=11 // pred_check_branch
          %333 = sbr.rel (%p331) target = $region20
        $region19: #{tpu_custom_call.1} parent=11 // pred_region
          _
        $region20: #{tpu_custom_call.1} parent=11 // pred_fallthru
          _
        // Predicated region
        $region21: #{tpu_custom_call.1} parent=11 // pred_check
          %p334 = pneg %p114
        $region22: #{tpu_custom_call.1} parent=11 // pred_check_branch
          %336 = sbr.rel (%p334) target = $region24
        $region23: #{tpu_custom_call.1} parent=11 // pred_region
          _
        $region24: #{tpu_custom_call.1} parent=11 // pred_fallthru
          _
        // Predicated region
        $region25: #{tpu_custom_call.1} parent=11 // pred_check
          %p337 = pneg %p135
        $region26: #{tpu_custom_call.1} parent=11 // pred_check_branch
          %339 = sbr.rel (%p337) target = $region28
        $region27: #{tpu_custom_call.1} parent=11 // pred_region
          _
        $region28: #{tpu_custom_call.1} parent=11 // pred_fallthru
          _
        // Predicated region
        $region29: #{tpu_custom_call.1} parent=11 // pred_check
          %p340 = pneg %p156
        $region30: #{tpu_custom_call.1} parent=11 // pred_check_branch
          %342 = sbr.rel (%p340) target = $region32
        $region31: #{tpu_custom_call.1} parent=11 // pred_region
          _
        $region32: #{tpu_custom_call.1} parent=11 // pred_fallthru
          _
        // Predicated region
        $region33: #{tpu_custom_call.1} parent=11 // pred_check
          %p343 = pneg %p177
        $region34: #{tpu_custom_call.1} parent=11 // pred_check_branch
          %345 = sbr.rel (%p343) target = $region36
        $region35: #{tpu_custom_call.1} parent=11 // pred_region
          _
        $region36: #{tpu_custom_call.1} parent=11 // pred_fallthru
          _
        // Predicated region
        $region37: #{tpu_custom_call.1} parent=11 // pred_check
          %p346 = pneg %p198
        $region38: #{tpu_custom_call.1} parent=11 // pred_check_branch
          %348 = sbr.rel (%p346) target = $region40
        $region39: #{tpu_custom_call.1} parent=11 // pred_region
          _
        $region40: #{tpu_custom_call.1} parent=11 // pred_fallthru
          _
        // Predicated region
        $region41: #{tpu_custom_call.1} parent=11 // pred_check
          %p349 = pneg %p219
        $region42: #{tpu_custom_call.1} parent=11 // pred_check_branch
          %351 = sbr.rel (%p349) target = $region44
        $region43: #{tpu_custom_call.1} parent=11 // pred_region
          _
        $region44: #{tpu_custom_call.1} parent=11 // pred_fallthru
          _
        // Predicated region
        $region45: #{tpu_custom_call.1} parent=11 // pred_check
          %p352 = pneg %p240
        $region46: #{tpu_custom_call.1} parent=11 // pred_check_branch
          %354 = sbr.rel (%p352) target = $region48
        $region47: #{tpu_custom_call.1} parent=11 // pred_region
          _
        $region48: #{tpu_custom_call.1} parent=11 // pred_fallthru
          _
        // Predicated region
        $region49: #{tpu_custom_call.1} parent=11 // pred_check
          %p355 = pneg %p261
        $region50: #{tpu_custom_call.1} parent=11 // pred_check_branch
          %357 = sbr.rel (%p355) target = $region52
        $region51: #{tpu_custom_call.1} parent=11 // pred_region
          _
        $region52: #{tpu_custom_call.1} parent=11 // pred_fallthru
          _
      $region12: #{tpu_custom_call.1} parent=5 // pred_fallthru
        _
      %p358 = scmp.lt.s32.totalorder %s25, 2
      // Predicated region
      $region53: #{tpu_custom_call.1} parent=5 // pred_check
        %p359 = pneg %p358
      $region54: #{tpu_custom_call.1} parent=5 // pred_check_branch
        %361 = sbr.rel (%p359) target = $region56
      $region55: #{tpu_custom_call.1} parent=5 // pred_region
        // Predicated region
        $region57: #{tpu_custom_call.1} parent=55 // pred_check
          %p362 = pneg %p45
        $region58: #{tpu_custom_call.1} parent=55 // pred_check_branch
          %364 = sbr.rel (%p362) target = $region60
        $region59: #{tpu_custom_call.1} parent=55 // pred_region
          %p365 = scmp.lt.s32.totalorder %s25, 1
          %s366 = scalar_select %p365, %s25, 1
          %s367 = smul.addr %s366, 32
          %s368 = smul.addr %s367, 8
          %s369 = scalar_lea.vmem %s0, %s368
        $region60: #{tpu_custom_call.1} parent=55 // pred_fallthru
          _
      $region56: #{tpu_custom_call.1} parent=5 // pred_fallthru
        _
      %p370 = scmp.le.s32.totalorder 1, %s25
      %p371 = scmp.lt.s32.totalorder %s25, 3
      %p372 = pnand %p370, %p371
      %p373 = pneg %p372
      // Predicated region
      $region61: #{tpu_custom_call.1} parent=5 // pred_check
        _
      $region62: #{tpu_custom_call.1} parent=5 // pred_check_branch
        %375 = sbr.rel (%p372) target = $region64
      $region63: #{tpu_custom_call.1} parent=5 // pred_region
        %s376 = ssub.s32 %s25, 1
        %p377 = scmp.lt.s32.totalorder %s30, 1
        %s378 = scalar_select %p377, %s30, 1
        %s379 = smul.addr %s378, 32
        %s380 = smul.addr %s379, 8
        %s381 = scalar_lea.vmem %s0, %s380
        %p382 = pneg %p51
        %p383 = pneg %p48
        %p384 = pneg %p72
        %p385 = pneg %p69
        %p386 = pneg %p93
        %p387 = pneg %p90
        %p388 = pneg %p114
        %p389 = pneg %p111
        %p390 = pneg %p135
        %p391 = pneg %p132
        %p392 = pneg %p156
        %p393 = pneg %p153
        %p394 = pneg %p177
        %p395 = pneg %p174
        %p396 = pneg %p198
        %p397 = pneg %p195
        %p398 = pneg %p219
        %p399 = pneg %p216
        %p400 = pneg %p240
        %p401 = pneg %p237
        %p402 = pneg %p261
        %p403 = pneg %p258
        %p404 = pneg %p287
        %p405 = pneg %p284
        %s406 = sand.u32 %s274, 1
        %s407 = scalar_lea.sflag [#allocation5], %s406
        %s408 = sand.u32 %s274, 1
        %s409 = smul.addr %s408, 16
        %s410 = scalar_lea.vmem [#allocation4], %s409
        %p411 = pneg %p313
        %p412 = pneg %p310
        %s413 = sand.u32 %s300, 1
        %s414 = scalar_lea.sflag [#allocation7], %s413
        %s415 = sand.u32 %s300, 1
        %s416 = smul.addr %s415, 8
        %s417 = scalar_lea.vmem [#allocation6], %s416
        %p418 = scmp.lt.s32.totalorder %s30, 1
        %s419 = scalar_select %p418, %s30, 1
        %s420 = smul.addr %s419, 32
        %s421 = smul.addr %s420, 8
        %s422 = scalar_lea.vmem %s0, %s421
        %v424 = vld [vmem:[%s422] sm:$0xff]
        %v425 = vld [vmem:[%s422 + $0x8] sm:$0xff]
        %v426 = vld [vmem:[%s422 + $0x10] sm:$0xff]
        %v427 = vld [vmem:[%s422 + $0x18] sm:$0xff]
        %v428 = vld [vmem:[%s422 + $0x20] sm:$0xff]
        %v429 = vld [vmem:[%s422 + $0x28] sm:$0xff]
        %v430 = vld [vmem:[%s422 + $0x30] sm:$0xff]
        %v431 = vld [vmem:[%s422 + $0x38] sm:$0xff]
        %v432 = vld [vmem:[%s422 + $0x40] sm:$0xff]
        %v433 = vld [vmem:[%s422 + $0x48] sm:$0xff]
        %v434 = vld [vmem:[%s422 + $0x50] sm:$0xff]
        %v435 = vld [vmem:[%s422 + $0x58] sm:$0xff]
        %v436 = vld [vmem:[%s422 + $0x60] sm:$0xff]
        %v437 = vld [vmem:[%s422 + $0x68] sm:$0xff]
        %v438 = vld [vmem:[%s422 + $0x70] sm:$0xff]
        %v439 = vld [vmem:[%s422 + $0x78] sm:$0xff]
        %v440 = vld [vmem:[%s422 + $0x80] sm:$0xff]
        %v441 = vld [vmem:[%s422 + $0x88] sm:$0xff]
        %v442 = vld [vmem:[%s422 + $0x90] sm:$0xff]
        %v443 = vld [vmem:[%s422 + $0x98] sm:$0xff]
        %v444 = vld [vmem:[%s422 + $0xa0] sm:$0xff]
        %v445 = vld [vmem:[%s422 + $0xa8] sm:$0xff]
        %v446 = vld [vmem:[%s422 + $0xb0] sm:$0xff]
        %v447 = vld [vmem:[%s422 + $0xb8] sm:$0xff]
        %v448 = vld [vmem:[%s422 + $0xc0] sm:$0xff]
        %v449 = vld [vmem:[%s422 + $0xc8] sm:$0xff]
        %v450 = vld [vmem:[%s422 + $0xd0] sm:$0xff]
        %v451 = vld [vmem:[%s422 + $0xd8] sm:$0xff]
        %v452 = vld [vmem:[%s422 + $0xe0] sm:$0xff]
        %v453 = vld [vmem:[%s422 + $0xe8] sm:$0xff]
        %v454 = vld [vmem:[%s422 + $0xf0] sm:$0xff]
        %v455 = vld [vmem:[%s422 + $0xf8] sm:$0xff]
        %v456 = vld [vmem:[%s1] sm:$0x1]
        %v458 = vlaneseq
        %v459 = vshrl.u32 %v458, 7
        %v460 = vsub.s32 0, %v459
        %v461 = vrot.slane %v456, %v460
        %v463 = vsub.f32 %v424, %v461
        %v464 = vsub.f32 %v425, %v461
        %v465 = vsub.f32 %v426, %v461
        %v466 = vsub.f32 %v427, %v461
        %v467 = vsub.f32 %v428, %v461
        %v468 = vsub.f32 %v429, %v461
        %v469 = vsub.f32 %v430, %v461
        %v470 = vsub.f32 %v431, %v461
        %v471 = vsub.f32 %v432, %v461
        %v472 = vsub.f32 %v433, %v461
        %v473 = vsub.f32 %v434, %v461
        %v474 = vsub.f32 %v435, %v461
        %v475 = vsub.f32 %v436, %v461
        %v476 = vsub.f32 %v437, %v461
        %v477 = vsub.f32 %v438, %v461
        %v478 = vsub.f32 %v439, %v461
        %v479 = vsub.f32 %v440, %v461
        %v480 = vsub.f32 %v441, %v461
        %v481 = vsub.f32 %v442, %v461
        %v482 = vsub.f32 %v443, %v461
        %v483 = vsub.f32 %v444, %v461
        %v484 = vsub.f32 %v445, %v461
        %v485 = vsub.f32 %v446, %v461
        %v486 = vsub.f32 %v447, %v461
        %v487 = vsub.f32 %v448, %v461
        %v488 = vsub.f32 %v449, %v461
        %v489 = vsub.f32 %v450, %v461
        %v490 = vsub.f32 %v451, %v461
        %v491 = vsub.f32 %v452, %v461
        %v492 = vsub.f32 %v453, %v461
        %v493 = vsub.f32 %v454, %v461
        %v494 = vsub.f32 %v455, %v461
        %v495 = vld [vmem:[%s2] sm:$0x1]
        %v497 = vlaneseq
        %v498 = vshrl.u32 %v497, 7
        %v499 = vsub.s32 0, %v498
        %v500 = vrot.slane %v495, %v499
        %v502 = vmul.f32 %v463, %v500
        %v503 = vmul.f32 %v464, %v500
        %v504 = vmul.f32 %v465, %v500
        %v505 = vmul.f32 %v466, %v500
        %v506 = vmul.f32 %v467, %v500
        %v507 = vmul.f32 %v468, %v500
        %v508 = vmul.f32 %v469, %v500
        %v509 = vmul.f32 %v470, %v500
        %v510 = vmul.f32 %v471, %v500
        %v511 = vmul.f32 %v472, %v500
        %v512 = vmul.f32 %v473, %v500
        %v513 = vmul.f32 %v474, %v500
        %v514 = vmul.f32 %v475, %v500
        %v515 = vmul.f32 %v476, %v500
        %v516 = vmul.f32 %v477, %v500
        %v517 = vmul.f32 %v478, %v500
        %v518 = vmul.f32 %v479, %v500
        %v519 = vmul.f32 %v480, %v500
        %v520 = vmul.f32 %v481, %v500
        %v521 = vmul.f32 %v482, %v500
        %v522 = vmul.f32 %v483, %v500
        %v523 = vmul.f32 %v484, %v500
        %v524 = vmul.f32 %v485, %v500
        %v525 = vmul.f32 %v486, %v500
        %v526 = vmul.f32 %v487, %v500
        %v527 = vmul.f32 %v488, %v500
        %v528 = vmul.f32 %v489, %v500
        %v529 = vmul.f32 %v490, %v500
        %v530 = vmul.f32 %v491, %v500
        %v531 = vmul.f32 %v492, %v500
        %v532 = vmul.f32 %v493, %v500
        %v533 = vmul.f32 %v494, %v500
        %vm534 = vcmask 23552
        %535 = vst.msk [vmem:[#allocation2] sm:$0xff] %vm534, 0.0
        %536 = vst.msk [vmem:[#allocation2 + $0x8] sm:$0xff] %vm534, 0.0
        %vm537 = vcmask 17408
        %538 = vst.msk [vmem:[#allocation2 + $0x10] sm:$0x3] %vm537, 0.0
        %s539 = scalar_lea.vmem [#allocation2], 408
        %540 = vst.msk [vmem:[%s539] sm:$0xff] %vm534, 0.0
        %541 = vst.msk [vmem:[%s539 + $0x8] sm:$0xff] %vm534, 0.0
        %542 = vst.msk [vmem:[%s539 + $0x10] sm:$0x3] %vm537, 0.0
        %vm543 = vcmask 16384
        %544 = vst.msk [vmem:[#allocation2] sm:$0x1] %vm543, 0.0
        %545 = vst.msk [vmem:[#allocation2 + $0x18] sm:$0x1] %vm543, 0.0
        %546 = vst.msk [vmem:[#allocation2 + $0x30] sm:$0x1] %vm543, 0.0
        %547 = vst.msk [vmem:[#allocation2 + $0x48] sm:$0x1] %vm543, 0.0
        %548 = vst.msk [vmem:[#allocation2 + $0x60] sm:$0x1] %vm543, 0.0
        %549 = vst.msk [vmem:[#allocation2 + $0x78] sm:$0x1] %vm543, 0.0
        %550 = vst.msk [vmem:[#allocation2 + $0x90] sm:$0x1] %vm543, 0.0
        %551 = vst.msk [vmem:[#allocation2 + $0xa8] sm:$0x1] %vm543, 0.0
        %552 = vst.msk [vmem:[#allocation2 + $0xc0] sm:$0x1] %vm543, 0.0
        %553 = vst.msk [vmem:[#allocation2 + $0xd8] sm:$0x1] %vm543, 0.0
        %554 = vst.msk [vmem:[#allocation2 + $0xf0] sm:$0x1] %vm543, 0.0
        %555 = vst.msk [vmem:[#allocation2 + $0x108] sm:$0x1] %vm543, 0.0
        %556 = vst.msk [vmem:[#allocation2 + $0x120] sm:$0x1] %vm543, 0.0
        %557 = vst.msk [vmem:[#allocation2 + $0x138] sm:$0x1] %vm543, 0.0
        %558 = vst.msk [vmem:[#allocation2 + $0x150] sm:$0x1] %vm543, 0.0
        %559 = vst.msk [vmem:[#allocation2 + $0x168] sm:$0x1] %vm543, 0.0
        %560 = vst.msk [vmem:[#allocation2 + $0x180] sm:$0x1] %vm543, 0.0
        %561 = vst.msk [vmem:[#allocation2 + $0x198] sm:$0x1] %vm543, 0.0
        %562 = vst.msk [vmem:[#allocation2 + $0x11] sm:$0x1] %vm543, 0.0
        %563 = vst.msk [vmem:[#allocation2 + $0x29] sm:$0x1] %vm543, 0.0
        %564 = vst.msk [vmem:[#allocation2 + $0x41] sm:$0x1] %vm543, 0.0
        %565 = vst.msk [vmem:[#allocation2 + $0x59] sm:$0x1] %vm543, 0.0
        %566 = vst.msk [vmem:[#allocation2 + $0x71] sm:$0x1] %vm543, 0.0
        %567 = vst.msk [vmem:[#allocation2 + $0x89] sm:$0x1] %vm543, 0.0
        %568 = vst.msk [vmem:[#allocation2 + $0xa1] sm:$0x1] %vm543, 0.0
        %569 = vst.msk [vmem:[#allocation2 + $0xb9] sm:$0x1] %vm543, 0.0
        %570 = vst.msk [vmem:[#allocation2 + $0xd1] sm:$0x1] %vm543, 0.0
        %571 = vst.msk [vmem:[#allocation2 + $0xe9] sm:$0x1] %vm543, 0.0
        %572 = vst.msk [vmem:[#allocation2 + $0x101] sm:$0x1] %vm543, 0.0
        %573 = vst.msk [vmem:[#allocation2 + $0x119] sm:$0x1] %vm543, 0.0
        %574 = vst.msk [vmem:[#allocation2 + $0x131] sm:$0x1] %vm543, 0.0
        %575 = vst.msk [vmem:[#allocation2 + $0x149] sm:$0x1] %vm543, 0.0
        %576 = vst.msk [vmem:[#allocation2 + $0x161] sm:$0x1] %vm543, 0.0
        %577 = vst.msk [vmem:[#allocation2 + $0x179] sm:$0x1] %vm543, 0.0
        %578 = vst.msk [vmem:[#allocation2 + $0x191] sm:$0x1] %vm543, 0.0
        %579 = vst.msk [vmem:[#allocation2 + $0x1a9] sm:$0x1] %vm543, 0.0
        %s580 = scalar_lea.vmem [#allocation2], 24
        %581 = vst.msk [vmem:[%s580 + $0x1] sm:$0xff] %vm534, %v502
        %582 = vst.msk [vmem:[%s580 + $0x9] sm:$0xff] %vm534, %v503
        %583 = vst.msk [vmem:[%s580 + $0x19] sm:$0xff] %vm534, %v504
        %584 = vst.msk [vmem:[%s580 + $0x21] sm:$0xff] %vm534, %v505
        %585 = vst.msk [vmem:[%s580 + $0x31] sm:$0xff] %vm534, %v506
        %586 = vst.msk [vmem:[%s580 + $0x39] sm:$0xff] %vm534, %v507
        %587 = vst.msk [vmem:[%s580 + $0x49] sm:$0xff] %vm534, %v508
        %588 = vst.msk [vmem:[%s580 + $0x51] sm:$0xff] %vm534, %v509
        %589 = vst.msk [vmem:[%s580 + $0x61] sm:$0xff] %vm534, %v510
        %590 = vst.msk [vmem:[%s580 + $0x69] sm:$0xff] %vm534, %v511
        %591 = vst.msk [vmem:[%s580 + $0x79] sm:$0xff] %vm534, %v512
        %592 = vst.msk [vmem:[%s580 + $0x81] sm:$0xff] %vm534, %v513
        %593 = vst.msk [vmem:[%s580 + $0x91] sm:$0xff] %vm534, %v514
        %594 = vst.msk [vmem:[%s580 + $0x99] sm:$0xff] %vm534, %v515
        %595 = vst.msk [vmem:[%s580 + $0xa9] sm:$0xff] %vm534, %v516
        %596 = vst.msk [vmem:[%s580 + $0xb1] sm:$0xff] %vm534, %v517
        %597 = vst.msk [vmem:[%s580 + $0xc1] sm:$0xff] %vm534, %v518
        %598 = vst.msk [vmem:[%s580 + $0xc9] sm:$0xff] %vm534, %v519
        %599 = vst.msk [vmem:[%s580 + $0xd9] sm:$0xff] %vm534, %v520
        %600 = vst.msk [vmem:[%s580 + $0xe1] sm:$0xff] %vm534, %v521
        %601 = vst.msk [vmem:[%s580 + $0xf1] sm:$0xff] %vm534, %v522
        %602 = vst.msk [vmem:[%s580 + $0xf9] sm:$0xff] %vm534, %v523
        %603 = vst.msk [vmem:[%s580 + $0x109] sm:$0xff] %vm534, %v524
        %604 = vst.msk [vmem:[%s580 + $0x111] sm:$0xff] %vm534, %v525
        %605 = vst.msk [vmem:[%s580 + $0x121] sm:$0xff] %vm534, %v526
        %606 = vst.msk [vmem:[%s580 + $0x129] sm:$0xff] %vm534, %v527
        %607 = vst.msk [vmem:[%s580 + $0x139] sm:$0xff] %vm534, %v528
        %608 = vst.msk [vmem:[%s580 + $0x141] sm:$0xff] %vm534, %v529
        %609 = vst.msk [vmem:[%s580 + $0x151] sm:$0xff] %vm534, %v530
        %610 = vst.msk [vmem:[%s580 + $0x159] sm:$0xff] %vm534, %v531
        %611 = vst.msk [vmem:[%s580 + $0x169] sm:$0xff] %vm534, %v532
        %612 = vst.msk [vmem:[%s580 + $0x171] sm:$0xff] %vm534, %v533
        %v613 = vld [vmem:[#allocation2] sm:$0xff]
        %v614 = vld [vmem:[#allocation2 + $0x8] sm:$0xff]
        %v615 = vld [vmem:[#allocation2 + $0x18] sm:$0xff]
        %v616 = vld [vmem:[#allocation2 + $0x20] sm:$0xff]
        %v617 = vld [vmem:[#allocation2 + $0x30] sm:$0xff]
        %v618 = vld [vmem:[#allocation2 + $0x38] sm:$0xff]
        %v619 = vld [vmem:[#allocation2 + $0x48] sm:$0xff]
        %v620 = vld [vmem:[#allocation2 + $0x50] sm:$0xff]
        %v621 = vld [vmem:[#allocation2 + $0x60] sm:$0xff]
        %v622 = vld [vmem:[#allocation2 + $0x68] sm:$0xff]
        %v623 = vld [vmem:[#allocation2 + $0x78] sm:$0xff]
        %v624 = vld [vmem:[#allocation2 + $0x80] sm:$0xff]
        %v625 = vld [vmem:[#allocation2 + $0x90] sm:$0xff]
        %v626 = vld [vmem:[#allocation2 + $0x98] sm:$0xff]
        %v627 = vld [vmem:[#allocation2 + $0xa8] sm:$0xff]
        %v628 = vld [vmem:[#allocation2 + $0xb0] sm:$0xff]
        %v629 = vld [vmem:[#allocation2 + $0xc0] sm:$0xff]
        %v630 = vld [vmem:[#allocation2 + $0xc8] sm:$0xff]
        %v631 = vld [vmem:[#allocation2 + $0xd8] sm:$0xff]
        %v632 = vld [vmem:[#allocation2 + $0xe0] sm:$0xff]
        %v633 = vld [vmem:[#allocation2 + $0xf0] sm:$0xff]
        %v634 = vld [vmem:[#allocation2 + $0xf8] sm:$0xff]
        %v635 = vld [vmem:[#allocation2 + $0x108] sm:$0xff]
        %v636 = vld [vmem:[#allocation2 + $0x110] sm:$0xff]
        %v637 = vld [vmem:[#allocation2 + $0x120] sm:$0xff]
        %v638 = vld [vmem:[#allocation2 + $0x128] sm:$0xff]
        %v639 = vld [vmem:[#allocation2 + $0x138] sm:$0xff]
        %v640 = vld [vmem:[#allocation2 + $0x140] sm:$0xff]
        %v641 = vld [vmem:[#allocation2 + $0x150] sm:$0xff]
        %v642 = vld [vmem:[#allocation2 + $0x158] sm:$0xff]
        %v643 = vld [vmem:[#allocation2 + $0x168] sm:$0xff]
        %v644 = vld [vmem:[#allocation2 + $0x170] sm:$0xff]
        %v645 = vld [vmem:[#allocation2 + $0x1] sm:$0xff]
        %v646 = vld [vmem:[#allocation2 + $0x9] sm:$0xff]
        %v647 = vld [vmem:[#allocation2 + $0x19] sm:$0xff]
        %v648 = vld [vmem:[#allocation2 + $0x21] sm:$0xff]
        %v649 = vld [vmem:[#allocation2 + $0x31] sm:$0xff]
        %v650 = vld [vmem:[#allocation2 + $0x39] sm:$0xff]
        %v651 = vld [vmem:[#allocation2 + $0x49] sm:$0xff]
        %v652 = vld [vmem:[#allocation2 + $0x51] sm:$0xff]
        %v653 = vld [vmem:[#allocation2 + $0x61] sm:$0xff]
        %v654 = vld [vmem:[#allocation2 + $0x69] sm:$0xff]
        %v655 = vld [vmem:[#allocation2 + $0x79] sm:$0xff]
        %v656 = vld [vmem:[#allocation2 + $0x81] sm:$0xff]
        %v657 = vld [vmem:[#allocation2 + $0x91] sm:$0xff]
        %v658 = vld [vmem:[#allocation2 + $0x99] sm:$0xff]
        %v659 = vld [vmem:[#allocation2 + $0xa9] sm:$0xff]
        %v660 = vld [vmem:[#allocation2 + $0xb1] sm:$0xff]
        %v661 = vld [vmem:[#allocation2 + $0xc1] sm:$0xff]
        %v662 = vld [vmem:[#allocation2 + $0xc9] sm:$0xff]
        %v663 = vld [vmem:[#allocation2 + $0xd9] sm:$0xff]
        %v664 = vld [vmem:[#allocation2 + $0xe1] sm:$0xff]
        %v665 = vld [vmem:[#allocation2 + $0xf1] sm:$0xff]
        %v666 = vld [vmem:[#allocation2 + $0xf9] sm:$0xff]
        %v667 = vld [vmem:[#allocation2 + $0x109] sm:$0xff]
        %v668 = vld [vmem:[#allocation2 + $0x111] sm:$0xff]
        %v669 = vld [vmem:[#allocation2 + $0x121] sm:$0xff]
        %v670 = vld [vmem:[#allocation2 + $0x129] sm:$0xff]
        %v671 = vld [vmem:[#allocation2 + $0x139] sm:$0xff]
        %v672 = vld [vmem:[#allocation2 + $0x141] sm:$0xff]
        %v673 = vld [vmem:[#allocation2 + $0x151] sm:$0xff]
        %v674 = vld [vmem:[#allocation2 + $0x159] sm:$0xff]
        %v675 = vld [vmem:[#allocation2 + $0x169] sm:$0xff]
        %v676 = vld [vmem:[#allocation2 + $0x171] sm:$0xff]
        %v677 = vld [vmem:[#allocation2 + $0x2] sm:$0xff]
        %v678 = vld [vmem:[#allocation2 + $0xa] sm:$0xff]
        %v679 = vld [vmem:[#allocation2 + $0x1a] sm:$0xff]
        %v680 = vld [vmem:[#allocation2 + $0x22] sm:$0xff]
        %v681 = vld [vmem:[#allocation2 + $0x32] sm:$0xff]
        %v682 = vld [vmem:[#allocation2 + $0x3a] sm:$0xff]
        %v683 = vld [vmem:[#allocation2 + $0x4a] sm:$0xff]
        %v684 = vld [vmem:[#allocation2 + $0x52] sm:$0xff]
        %v685 = vld [vmem:[#allocation2 + $0x62] sm:$0xff]
        %v686 = vld [vmem:[#allocation2 + $0x6a] sm:$0xff]
        %v687 = vld [vmem:[#allocation2 + $0x7a] sm:$0xff]
        %v688 = vld [vmem:[#allocation2 + $0x82] sm:$0xff]
        %v689 = vld [vmem:[#allocation2 + $0x92] sm:$0xff]
        %v690 = vld [vmem:[#allocation2 + $0x9a] sm:$0xff]
        %v691 = vld [vmem:[#allocation2 + $0xaa] sm:$0xff]
        %v692 = vld [vmem:[#allocation2 + $0xb2] sm:$0xff]
        %v693 = vld [vmem:[#allocation2 + $0xc2] sm:$0xff]
        %v694 = vld [vmem:[#allocation2 + $0xca] sm:$0xff]
        %v695 = vld [vmem:[#allocation2 + $0xda] sm:$0xff]
        %v696 = vld [vmem:[#allocation2 + $0xe2] sm:$0xff]
        %v697 = vld [vmem:[#allocation2 + $0xf2] sm:$0xff]
        %v698 = vld [vmem:[#allocation2 + $0xfa] sm:$0xff]
        %v699 = vld [vmem:[#allocation2 + $0x10a] sm:$0xff]
        %v700 = vld [vmem:[#allocation2 + $0x112] sm:$0xff]
        %v701 = vld [vmem:[#allocation2 + $0x122] sm:$0xff]
        %v702 = vld [vmem:[#allocation2 + $0x12a] sm:$0xff]
        %v703 = vld [vmem:[#allocation2 + $0x13a] sm:$0xff]
        %v704 = vld [vmem:[#allocation2 + $0x142] sm:$0xff]
        %v705 = vld [vmem:[#allocation2 + $0x152] sm:$0xff]
        %v706 = vld [vmem:[#allocation2 + $0x15a] sm:$0xff]
        %v707 = vld [vmem:[#allocation2 + $0x16a] sm:$0xff]
        %v708 = vld [vmem:[#allocation2 + $0x172] sm:$0xff]
        %v709 = vld [vmem:[%s580] sm:$0xff]
        %v710 = vld [vmem:[%s580 + $0x8] sm:$0xff]
        %v711 = vld [vmem:[%s580 + $0x18] sm:$0xff]
        %v712 = vld [vmem:[%s580 + $0x20] sm:$0xff]
        %v713 = vld [vmem:[%s580 + $0x30] sm:$0xff]
        %v714 = vld [vmem:[%s580 + $0x38] sm:$0xff]
        %v715 = vld [vmem:[%s580 + $0x48] sm:$0xff]
        %v716 = vld [vmem:[%s580 + $0x50] sm:$0xff]
        %v717 = vld [vmem:[%s580 + $0x60] sm:$0xff]
        %v718 = vld [vmem:[%s580 + $0x68] sm:$0xff]
        %v719 = vld [vmem:[%s580 + $0x78] sm:$0xff]
        %v720 = vld [vmem:[%s580 + $0x80] sm:$0xff]
        %v721 = vld [vmem:[%s580 + $0x90] sm:$0xff]
        %v722 = vld [vmem:[%s580 + $0x98] sm:$0xff]
        %v723 = vld [vmem:[%s580 + $0xa8] sm:$0xff]
        %v724 = vld [vmem:[%s580 + $0xb0] sm:$0xff]
        %v725 = vld [vmem:[%s580 + $0xc0] sm:$0xff]
        %v726 = vld [vmem:[%s580 + $0xc8] sm:$0xff]
        %v727 = vld [vmem:[%s580 + $0xd8] sm:$0xff]
        %v728 = vld [vmem:[%s580 + $0xe0] sm:$0xff]
        %v729 = vld [vmem:[%s580 + $0xf0] sm:$0xff]
        %v730 = vld [vmem:[%s580 + $0xf8] sm:$0xff]
        %v731 = vld [vmem:[%s580 + $0x108] sm:$0xff]
        %v732 = vld [vmem:[%s580 + $0x110] sm:$0xff]
        %v733 = vld [vmem:[%s580 + $0x120] sm:$0xff]
        %v734 = vld [vmem:[%s580 + $0x128] sm:$0xff]
        %v735 = vld [vmem:[%s580 + $0x138] sm:$0xff]
        %v736 = vld [vmem:[%s580 + $0x140] sm:$0xff]
        %v737 = vld [vmem:[%s580 + $0x150] sm:$0xff]
        %v738 = vld [vmem:[%s580 + $0x158] sm:$0xff]
        %v739 = vld [vmem:[%s580 + $0x168] sm:$0xff]
        %v740 = vld [vmem:[%s580 + $0x170] sm:$0xff]
        %v741 = vld [vmem:[%s580 + $0x1] sm:$0xff]
        %v742 = vld [vmem:[%s580 + $0x9] sm:$0xff]
        %v743 = vld [vmem:[%s580 + $0x19] sm:$0xff]
        %v744 = vld [vmem:[%s580 + $0x21] sm:$0xff]
        %v745 = vld [vmem:[%s580 + $0x31] sm:$0xff]
        %v746 = vld [vmem:[%s580 + $0x39] sm:$0xff]
        %v747 = vld [vmem:[%s580 + $0x49] sm:$0xff]
        %v748 = vld [vmem:[%s580 + $0x51] sm:$0xff]
        %v749 = vld [vmem:[%s580 + $0x61] sm:$0xff]
        %v750 = vld [vmem:[%s580 + $0x69] sm:$0xff]
        %v751 = vld [vmem:[%s580 + $0x79] sm:$0xff]
        %v752 = vld [vmem:[%s580 + $0x81] sm:$0xff]
        %v753 = vld [vmem:[%s580 + $0x91] sm:$0xff]
        %v754 = vld [vmem:[%s580 + $0x99] sm:$0xff]
        %v755 = vld [vmem:[%s580 + $0xa9] sm:$0xff]
        %v756 = vld [vmem:[%s580 + $0xb1] sm:$0xff]
        %v757 = vld [vmem:[%s580 + $0xc1] sm:$0xff]
        %v758 = vld [vmem:[%s580 + $0xc9] sm:$0xff]
        %v759 = vld [vmem:[%s580 + $0xd9] sm:$0xff]
        %v760 = vld [vmem:[%s580 + $0xe1] sm:$0xff]
        %v761 = vld [vmem:[%s580 + $0xf1] sm:$0xff]
        %v762 = vld [vmem:[%s580 + $0xf9] sm:$0xff]
        %v763 = vld [vmem:[%s580 + $0x109] sm:$0xff]
        %v764 = vld [vmem:[%s580 + $0x111] sm:$0xff]
        %v765 = vld [vmem:[%s580 + $0x121] sm:$0xff]
        %v766 = vld [vmem:[%s580 + $0x129] sm:$0xff]
        %v767 = vld [vmem:[%s580 + $0x139] sm:$0xff]
        %v768 = vld [vmem:[%s580 + $0x141] sm:$0xff]
        %v769 = vld [vmem:[%s580 + $0x151] sm:$0xff]
        %v770 = vld [vmem:[%s580 + $0x159] sm:$0xff]
        %v771 = vld [vmem:[%s580 + $0x169] sm:$0xff]
        %v772 = vld [vmem:[%s580 + $0x171] sm:$0xff]
        %v773 = vld [vmem:[%s580 + $0x2] sm:$0xff]
        %v774 = vld [vmem:[%s580 + $0xa] sm:$0xff]
        %v775 = vld [vmem:[%s580 + $0x1a] sm:$0xff]
        %v776 = vld [vmem:[%s580 + $0x22] sm:$0xff]
        %v777 = vld [vmem:[%s580 + $0x32] sm:$0xff]
        %v778 = vld [vmem:[%s580 + $0x3a] sm:$0xff]
        %v779 = vld [vmem:[%s580 + $0x4a] sm:$0xff]
        %v780 = vld [vmem:[%s580 + $0x52] sm:$0xff]
        %v781 = vld [vmem:[%s580 + $0x62] sm:$0xff]
        %v782 = vld [vmem:[%s580 + $0x6a] sm:$0xff]
        %v783 = vld [vmem:[%s580 + $0x7a] sm:$0xff]
        %v784 = vld [vmem:[%s580 + $0x82] sm:$0xff]
        %v785 = vld [vmem:[%s580 + $0x92] sm:$0xff]
        %v786 = vld [vmem:[%s580 + $0x9a] sm:$0xff]
        %v787 = vld [vmem:[%s580 + $0xaa] sm:$0xff]
        %v788 = vld [vmem:[%s580 + $0xb2] sm:$0xff]
        %v789 = vld [vmem:[%s580 + $0xc2] sm:$0xff]
        %v790 = vld [vmem:[%s580 + $0xca] sm:$0xff]
        %v791 = vld [vmem:[%s580 + $0xda] sm:$0xff]
        %v792 = vld [vmem:[%s580 + $0xe2] sm:$0xff]
        %v793 = vld [vmem:[%s580 + $0xf2] sm:$0xff]
        %v794 = vld [vmem:[%s580 + $0xfa] sm:$0xff]
        %v795 = vld [vmem:[%s580 + $0x10a] sm:$0xff]
        %v796 = vld [vmem:[%s580 + $0x112] sm:$0xff]
        %v797 = vld [vmem:[%s580 + $0x122] sm:$0xff]
        %v798 = vld [vmem:[%s580 + $0x12a] sm:$0xff]
        %v799 = vld [vmem:[%s580 + $0x13a] sm:$0xff]
        %v800 = vld [vmem:[%s580 + $0x142] sm:$0xff]
        %v801 = vld [vmem:[%s580 + $0x152] sm:$0xff]
        %v802 = vld [vmem:[%s580 + $0x15a] sm:$0xff]
        %v803 = vld [vmem:[%s580 + $0x16a] sm:$0xff]
        %v804 = vld [vmem:[%s580 + $0x172] sm:$0xff]
        %s805 = scalar_lea.vmem [#allocation2], 48
        %v806 = vld [vmem:[%s805] sm:$0xff]
        %v807 = vld [vmem:[%s805 + $0x8] sm:$0xff]
        %v808 = vld [vmem:[%s805 + $0x18] sm:$0xff]
        %v809 = vld [vmem:[%s805 + $0x20] sm:$0xff]
        %v810 = vld [vmem:[%s805 + $0x30] sm:$0xff]
        %v811 = vld [vmem:[%s805 + $0x38] sm:$0xff]
        %v812 = vld [vmem:[%s805 + $0x48] sm:$0xff]
        %v813 = vld [vmem:[%s805 + $0x50] sm:$0xff]
        %v814 = vld [vmem:[%s805 + $0x60] sm:$0xff]
        %v815 = vld [vmem:[%s805 + $0x68] sm:$0xff]
        %v816 = vld [vmem:[%s805 + $0x78] sm:$0xff]
        %v817 = vld [vmem:[%s805 + $0x80] sm:$0xff]
        %v818 = vld [vmem:[%s805 + $0x90] sm:$0xff]
        %v819 = vld [vmem:[%s805 + $0x98] sm:$0xff]
        %v820 = vld [vmem:[%s805 + $0xa8] sm:$0xff]
        %v821 = vld [vmem:[%s805 + $0xb0] sm:$0xff]
        %v822 = vld [vmem:[%s805 + $0xc0] sm:$0xff]
        %v823 = vld [vmem:[%s805 + $0xc8] sm:$0xff]
        %v824 = vld [vmem:[%s805 + $0xd8] sm:$0xff]
        %v825 = vld [vmem:[%s805 + $0xe0] sm:$0xff]
        %v826 = vld [vmem:[%s805 + $0xf0] sm:$0xff]
        %v827 = vld [vmem:[%s805 + $0xf8] sm:$0xff]
        %v828 = vld [vmem:[%s805 + $0x108] sm:$0xff]
        %v829 = vld [vmem:[%s805 + $0x110] sm:$0xff]
        %v830 = vld [vmem:[%s805 + $0x120] sm:$0xff]
        %v831 = vld [vmem:[%s805 + $0x128] sm:$0xff]
        %v832 = vld [vmem:[%s805 + $0x138] sm:$0xff]
        %v833 = vld [vmem:[%s805 + $0x140] sm:$0xff]
        %v834 = vld [vmem:[%s805 + $0x150] sm:$0xff]
        %v835 = vld [vmem:[%s805 + $0x158] sm:$0xff]
        %v836 = vld [vmem:[%s805 + $0x168] sm:$0xff]
        %v837 = vld [vmem:[%s805 + $0x170] sm:$0xff]
        %v838 = vld [vmem:[%s805 + $0x1] sm:$0xff]
        %v839 = vld [vmem:[%s805 + $0x9] sm:$0xff]
        %v840 = vld [vmem:[%s805 + $0x19] sm:$0xff]
        %v841 = vld [vmem:[%s805 + $0x21] sm:$0xff]
        %v842 = vld [vmem:[%s805 + $0x31] sm:$0xff]
        %v843 = vld [vmem:[%s805 + $0x39] sm:$0xff]
        %v844 = vld [vmem:[%s805 + $0x49] sm:$0xff]
        %v845 = vld [vmem:[%s805 + $0x51] sm:$0xff]
        %v846 = vld [vmem:[%s805 + $0x61] sm:$0xff]
        %v847 = vld [vmem:[%s805 + $0x69] sm:$0xff]
        %v848 = vld [vmem:[%s805 + $0x79] sm:$0xff]
        %v849 = vld [vmem:[%s805 + $0x81] sm:$0xff]
        %v850 = vld [vmem:[%s805 + $0x91] sm:$0xff]
        %v851 = vld [vmem:[%s805 + $0x99] sm:$0xff]
        %v852 = vld [vmem:[%s805 + $0xa9] sm:$0xff]
        %v853 = vld [vmem:[%s805 + $0xb1] sm:$0xff]
        %v854 = vld [vmem:[%s805 + $0xc1] sm:$0xff]
        %v855 = vld [vmem:[%s805 + $0xc9] sm:$0xff]
        %v856 = vld [vmem:[%s805 + $0xd9] sm:$0xff]
        %v857 = vld [vmem:[%s805 + $0xe1] sm:$0xff]
        %v858 = vld [vmem:[%s805 + $0xf1] sm:$0xff]
        %v859 = vld [vmem:[%s805 + $0xf9] sm:$0xff]
        %v860 = vld [vmem:[%s805 + $0x109] sm:$0xff]
        %v861 = vld [vmem:[%s805 + $0x111] sm:$0xff]
        %v862 = vld [vmem:[%s805 + $0x121] sm:$0xff]
        %v863 = vld [vmem:[%s805 + $0x129] sm:$0xff]
        %v864 = vld [vmem:[%s805 + $0x139] sm:$0xff]
        %v865 = vld [vmem:[%s805 + $0x141] sm:$0xff]
        %v866 = vld [vmem:[%s805 + $0x151] sm:$0xff]
        %v867 = vld [vmem:[%s805 + $0x159] sm:$0xff]
        %v868 = vld [vmem:[%s805 + $0x169] sm:$0xff]
        %v869 = vld [vmem:[%s805 + $0x171] sm:$0xff]
        %v870 = vld [vmem:[%s805 + $0x2] sm:$0xff]
        %v871 = vld [vmem:[%s805 + $0xa] sm:$0xff]
        %v872 = vld [vmem:[%s805 + $0x1a] sm:$0xff]
        %v873 = vld [vmem:[%s805 + $0x22] sm:$0xff]
        %v874 = vld [vmem:[%s805 + $0x32] sm:$0xff]
        %v875 = vld [vmem:[%s805 + $0x3a] sm:$0xff]
        %v876 = vld [vmem:[%s805 + $0x4a] sm:$0xff]
        %v877 = vld [vmem:[%s805 + $0x52] sm:$0xff]
        %v878 = vld [vmem:[%s805 + $0x62] sm:$0xff]
        %v879 = vld [vmem:[%s805 + $0x6a] sm:$0xff]
        %v880 = vld [vmem:[%s805 + $0x7a] sm:$0xff]
        %v881 = vld [vmem:[%s805 + $0x82] sm:$0xff]
        %v882 = vld [vmem:[%s805 + $0x92] sm:$0xff]
        %v883 = vld [vmem:[%s805 + $0x9a] sm:$0xff]
        %v884 = vld [vmem:[%s805 + $0xaa] sm:$0xff]
        %v885 = vld [vmem:[%s805 + $0xb2] sm:$0xff]
        %v886 = vld [vmem:[%s805 + $0xc2] sm:$0xff]
        %v887 = vld [vmem:[%s805 + $0xca] sm:$0xff]
        %v888 = vld [vmem:[%s805 + $0xda] sm:$0xff]
        %v889 = vld [vmem:[%s805 + $0xe2] sm:$0xff]
        %v890 = vld [vmem:[%s805 + $0xf2] sm:$0xff]
        %v891 = vld [vmem:[%s805 + $0xfa] sm:$0xff]
        %v892 = vld [vmem:[%s805 + $0x10a] sm:$0xff]
        %v893 = vld [vmem:[%s805 + $0x112] sm:$0xff]
        %v894 = vld [vmem:[%s805 + $0x122] sm:$0xff]
        %v895 = vld [vmem:[%s805 + $0x12a] sm:$0xff]
        %v896 = vld [vmem:[%s805 + $0x13a] sm:$0xff]
        %v897 = vld [vmem:[%s805 + $0x142] sm:$0xff]
        %v898 = vld [vmem:[%s805 + $0x152] sm:$0xff]
        %v899 = vld [vmem:[%s805 + $0x15a] sm:$0xff]
        %v900 = vld [vmem:[%s805 + $0x16a] sm:$0xff]
        %v901 = vld [vmem:[%s805 + $0x172] sm:$0xff]
        %934 = vrot.lane.b32.xlu0 %v645, 3
        %v935 = vpop.permute.xlu0 %934
        %936 = vrot.lane.b32.xlu0 %v646, 3
        %v937 = vpop.permute.xlu0 %936
        %938 = vrot.lane.b32.xlu0 %v647, 3
        %v939 = vpop.permute.xlu0 %938
        %940 = vrot.lane.b32.xlu0 %v648, 3
        %v941 = vpop.permute.xlu0 %940
        %942 = vrot.lane.b32.xlu0 %v649, 3
        %v943 = vpop.permute.xlu0 %942
        %944 = vrot.lane.b32.xlu0 %v650, 3
        %v945 = vpop.permute.xlu0 %944
        %946 = vrot.lane.b32.xlu0 %v651, 3
        %v947 = vpop.permute.xlu0 %946
        %948 = vrot.lane.b32.xlu0 %v652, 3
        %v949 = vpop.permute.xlu0 %948
        %950 = vrot.lane.b32.xlu0 %v653, 3
        %v951 = vpop.permute.xlu0 %950
        %952 = vrot.lane.b32.xlu0 %v654, 3
        %v953 = vpop.permute.xlu0 %952
        %954 = vrot.lane.b32.xlu0 %v655, 3
        %v955 = vpop.permute.xlu0 %954
        %956 = vrot.lane.b32.xlu0 %v656, 3
        %v957 = vpop.permute.xlu0 %956
        %958 = vrot.lane.b32.xlu0 %v657, 3
        %v959 = vpop.permute.xlu0 %958
        %960 = vrot.lane.b32.xlu0 %v658, 3
        %v961 = vpop.permute.xlu0 %960
        %962 = vrot.lane.b32.xlu0 %v659, 3
        %v963 = vpop.permute.xlu0 %962
        %964 = vrot.lane.b32.xlu0 %v660, 3
        %v965 = vpop.permute.xlu0 %964
        %966 = vrot.lane.b32.xlu0 %v661, 3
        %v967 = vpop.permute.xlu0 %966
        %968 = vrot.lane.b32.xlu0 %v662, 3
        %v969 = vpop.permute.xlu0 %968
        %970 = vrot.lane.b32.xlu0 %v663, 3
        %v971 = vpop.permute.xlu0 %970
        %972 = vrot.lane.b32.xlu0 %v664, 3
        %v973 = vpop.permute.xlu0 %972
        %974 = vrot.lane.b32.xlu0 %v665, 3
        %v975 = vpop.permute.xlu0 %974
        %976 = vrot.lane.b32.xlu0 %v666, 3
        %v977 = vpop.permute.xlu0 %976
        %978 = vrot.lane.b32.xlu0 %v667, 3
        %v979 = vpop.permute.xlu0 %978
        %980 = vrot.lane.b32.xlu0 %v668, 3
        %v981 = vpop.permute.xlu0 %980
        %982 = vrot.lane.b32.xlu0 %v669, 3
        %v983 = vpop.permute.xlu0 %982
        %984 = vrot.lane.b32.xlu0 %v670, 3
        %v985 = vpop.permute.xlu0 %984
        %986 = vrot.lane.b32.xlu0 %v671, 3
        %v987 = vpop.permute.xlu0 %986
        %988 = vrot.lane.b32.xlu0 %v672, 3
        %v989 = vpop.permute.xlu0 %988
        %990 = vrot.lane.b32.xlu0 %v673, 3
        %v991 = vpop.permute.xlu0 %990
        %992 = vrot.lane.b32.xlu0 %v674, 3
        %v993 = vpop.permute.xlu0 %992
        %994 = vrot.lane.b32.xlu0 %v675, 3
        %v995 = vpop.permute.xlu0 %994
        %996 = vrot.lane.b32.xlu0 %v676, 3
        %v997 = vpop.permute.xlu0 %996
        %1062 = vrot.lane.b32.xlu0 %v677, 6
        %v1063 = vpop.permute.xlu0 %1062
        %1064 = vrot.lane.b32.xlu0 %v678, 6
        %v1065 = vpop.permute.xlu0 %1064
        %1066 = vrot.lane.b32.xlu0 %v679, 6
        %v1067 = vpop.permute.xlu0 %1066
        %1068 = vrot.lane.b32.xlu0 %v680, 6
        %v1069 = vpop.permute.xlu0 %1068
        %1070 = vrot.lane.b32.xlu0 %v681, 6
        %v1071 = vpop.permute.xlu0 %1070
        %1072 = vrot.lane.b32.xlu0 %v682, 6
        %v1073 = vpop.permute.xlu0 %1072
        %1074 = vrot.lane.b32.xlu0 %v683, 6
        %v1075 = vpop.permute.xlu0 %1074
        %1076 = vrot.lane.b32.xlu0 %v684, 6
        %v1077 = vpop.permute.xlu0 %1076
        %1078 = vrot.lane.b32.xlu0 %v685, 6
        %v1079 = vpop.permute.xlu0 %1078
        %1080 = vrot.lane.b32.xlu0 %v686, 6
        %v1081 = vpop.permute.xlu0 %1080
        %1082 = vrot.lane.b32.xlu0 %v687, 6
        %v1083 = vpop.permute.xlu0 %1082
        %1084 = vrot.lane.b32.xlu0 %v688, 6
        %v1085 = vpop.permute.xlu0 %1084
        %1086 = vrot.lane.b32.xlu0 %v689, 6
        %v1087 = vpop.permute.xlu0 %1086
        %1088 = vrot.lane.b32.xlu0 %v690, 6
        %v1089 = vpop.permute.xlu0 %1088
        %1090 = vrot.lane.b32.xlu0 %v691, 6
        %v1091 = vpop.permute.xlu0 %1090
        %1092 = vrot.lane.b32.xlu0 %v692, 6
        %v1093 = vpop.permute.xlu0 %1092
        %1094 = vrot.lane.b32.xlu0 %v693, 6
        %v1095 = vpop.permute.xlu0 %1094
        %1096 = vrot.lane.b32.xlu0 %v694, 6
        %v1097 = vpop.permute.xlu0 %1096
        %1098 = vrot.lane.b32.xlu0 %v695, 6
        %v1099 = vpop.permute.xlu0 %1098
        %1100 = vrot.lane.b32.xlu0 %v696, 6
        %v1101 = vpop.permute.xlu0 %1100
        %1102 = vrot.lane.b32.xlu0 %v697, 6
        %v1103 = vpop.permute.xlu0 %1102
        %1104 = vrot.lane.b32.xlu0 %v698, 6
        %v1105 = vpop.permute.xlu0 %1104
        %1106 = vrot.lane.b32.xlu0 %v699, 6
        %v1107 = vpop.permute.xlu0 %1106
        %1108 = vrot.lane.b32.xlu0 %v700, 6
        %v1109 = vpop.permute.xlu0 %1108
        %1110 = vrot.lane.b32.xlu0 %v701, 6
        %v1111 = vpop.permute.xlu0 %1110
        %1112 = vrot.lane.b32.xlu0 %v702, 6
        %v1113 = vpop.permute.xlu0 %1112
        %1114 = vrot.lane.b32.xlu0 %v703, 6
        %v1115 = vpop.permute.xlu0 %1114
        %1116 = vrot.lane.b32.xlu0 %v704, 6
        %v1117 = vpop.permute.xlu0 %1116
        %1118 = vrot.lane.b32.xlu0 %v705, 6
        %v1119 = vpop.permute.xlu0 %1118
        %1120 = vrot.lane.b32.xlu0 %v706, 6
        %v1121 = vpop.permute.xlu0 %1120
        %1122 = vrot.lane.b32.xlu0 %v707, 6
        %v1123 = vpop.permute.xlu0 %1122
        %1124 = vrot.lane.b32.xlu0 %v708, 6
        %v1125 = vpop.permute.xlu0 %1124
        %1190 = vrot.lane.b32.xlu0 %v709, 9
        %v1191 = vpop.permute.xlu0 %1190
        %1192 = vrot.lane.b32.xlu0 %v710, 9
        %v1193 = vpop.permute.xlu0 %1192
        %1194 = vrot.lane.b32.xlu0 %v711, 9
        %v1195 = vpop.permute.xlu0 %1194
        %1196 = vrot.lane.b32.xlu0 %v712, 9
        %v1197 = vpop.permute.xlu0 %1196
        %1198 = vrot.lane.b32.xlu0 %v713, 9
        %v1199 = vpop.permute.xlu0 %1198
        %1200 = vrot.lane.b32.xlu0 %v714, 9
        %v1201 = vpop.permute.xlu0 %1200
        %1202 = vrot.lane.b32.xlu0 %v715, 9
        %v1203 = vpop.permute.xlu0 %1202
        %1204 = vrot.lane.b32.xlu0 %v716, 9
        %v1205 = vpop.permute.xlu0 %1204
        %1206 = vrot.lane.b32.xlu0 %v717, 9
        %v1207 = vpop.permute.xlu0 %1206
        %1208 = vrot.lane.b32.xlu0 %v718, 9
        %v1209 = vpop.permute.xlu0 %1208
        %1210 = vrot.lane.b32.xlu0 %v719, 9
        %v1211 = vpop.permute.xlu0 %1210
        %1212 = vrot.lane.b32.xlu0 %v720, 9
        %v1213 = vpop.permute.xlu0 %1212
        %1214 = vrot.lane.b32.xlu0 %v721, 9
        %v1215 = vpop.permute.xlu0 %1214
        %1216 = vrot.lane.b32.xlu0 %v722, 9
        %v1217 = vpop.permute.xlu0 %1216
        %1218 = vrot.lane.b32.xlu0 %v723, 9
        %v1219 = vpop.permute.xlu0 %1218
        %1220 = vrot.lane.b32.xlu0 %v724, 9
        %v1221 = vpop.permute.xlu0 %1220
        %1222 = vrot.lane.b32.xlu0 %v725, 9
        %v1223 = vpop.permute.xlu0 %1222
        %1224 = vrot.lane.b32.xlu0 %v726, 9
        %v1225 = vpop.permute.xlu0 %1224
        %1226 = vrot.lane.b32.xlu0 %v727, 9
        %v1227 = vpop.permute.xlu0 %1226
        %1228 = vrot.lane.b32.xlu0 %v728, 9
        %v1229 = vpop.permute.xlu0 %1228
        %1230 = vrot.lane.b32.xlu0 %v729, 9
        %v1231 = vpop.permute.xlu0 %1230
        %1232 = vrot.lane.b32.xlu0 %v730, 9
        %v1233 = vpop.permute.xlu0 %1232
        %1234 = vrot.lane.b32.xlu0 %v731, 9
        %v1235 = vpop.permute.xlu0 %1234
        %1236 = vrot.lane.b32.xlu0 %v732, 9
        %v1237 = vpop.permute.xlu0 %1236
        %1238 = vrot.lane.b32.xlu0 %v733, 9
        %v1239 = vpop.permute.xlu0 %1238
        %1240 = vrot.lane.b32.xlu0 %v734, 9
        %v1241 = vpop.permute.xlu0 %1240
        %1242 = vrot.lane.b32.xlu0 %v735, 9
        %v1243 = vpop.permute.xlu0 %1242
        %1244 = vrot.lane.b32.xlu0 %v736, 9
        %v1245 = vpop.permute.xlu0 %1244
        %1246 = vrot.lane.b32.xlu0 %v737, 9
        %v1247 = vpop.permute.xlu0 %1246
        %1248 = vrot.lane.b32.xlu0 %v738, 9
        %v1249 = vpop.permute.xlu0 %1248
        %1250 = vrot.lane.b32.xlu0 %v739, 9
        %v1251 = vpop.permute.xlu0 %1250
        %1252 = vrot.lane.b32.xlu0 %v740, 9
        %v1253 = vpop.permute.xlu0 %1252
        %1318 = vrot.lane.b32.xlu0 %v741, 12
        %v1319 = vpop.permute.xlu0 %1318
        %1320 = vrot.lane.b32.xlu0 %v742, 12
        %v1321 = vpop.permute.xlu0 %1320
        %1322 = vrot.lane.b32.xlu0 %v743, 12
        %v1323 = vpop.permute.xlu0 %1322
        %1324 = vrot.lane.b32.xlu0 %v744, 12
        %v1325 = vpop.permute.xlu0 %1324
        %1326 = vrot.lane.b32.xlu0 %v745, 12
        %v1327 = vpop.permute.xlu0 %1326
        %1328 = vrot.lane.b32.xlu0 %v746, 12
        %v1329 = vpop.permute.xlu0 %1328
        %1330 = vrot.lane.b32.xlu0 %v747, 12
        %v1331 = vpop.permute.xlu0 %1330
        %1332 = vrot.lane.b32.xlu0 %v748, 12
        %v1333 = vpop.permute.xlu0 %1332
        %1334 = vrot.lane.b32.xlu0 %v749, 12
        %v1335 = vpop.permute.xlu0 %1334
        %1336 = vrot.lane.b32.xlu0 %v750, 12
        %v1337 = vpop.permute.xlu0 %1336
        %1338 = vrot.lane.b32.xlu0 %v751, 12
        %v1339 = vpop.permute.xlu0 %1338
        %1340 = vrot.lane.b32.xlu0 %v752, 12
        %v1341 = vpop.permute.xlu0 %1340
        %1342 = vrot.lane.b32.xlu0 %v753, 12
        %v1343 = vpop.permute.xlu0 %1342
        %1344 = vrot.lane.b32.xlu0 %v754, 12
        %v1345 = vpop.permute.xlu0 %1344
        %1346 = vrot.lane.b32.xlu0 %v755, 12
        %v1347 = vpop.permute.xlu0 %1346
        %1348 = vrot.lane.b32.xlu0 %v756, 12
        %v1349 = vpop.permute.xlu0 %1348
        %1350 = vrot.lane.b32.xlu0 %v757, 12
        %v1351 = vpop.permute.xlu0 %1350
        %1352 = vrot.lane.b32.xlu0 %v758, 12
        %v1353 = vpop.permute.xlu0 %1352
        %1354 = vrot.lane.b32.xlu0 %v759, 12
        %v1355 = vpop.permute.xlu0 %1354
        %1356 = vrot.lane.b32.xlu0 %v760, 12
        %v1357 = vpop.permute.xlu0 %1356
        %1358 = vrot.lane.b32.xlu0 %v761, 12
        %v1359 = vpop.permute.xlu0 %1358
        %1360 = vrot.lane.b32.xlu0 %v762, 12
        %v1361 = vpop.permute.xlu0 %1360
        %1362 = vrot.lane.b32.xlu0 %v763, 12
        %v1363 = vpop.permute.xlu0 %1362
        %1364 = vrot.lane.b32.xlu0 %v764, 12
        %v1365 = vpop.permute.xlu0 %1364
        %1366 = vrot.lane.b32.xlu0 %v765, 12
        %v1367 = vpop.permute.xlu0 %1366
        %1368 = vrot.lane.b32.xlu0 %v766, 12
        %v1369 = vpop.permute.xlu0 %1368
        %1370 = vrot.lane.b32.xlu0 %v767, 12
        %v1371 = vpop.permute.xlu0 %1370
        %1372 = vrot.lane.b32.xlu0 %v768, 12
        %v1373 = vpop.permute.xlu0 %1372
        %1374 = vrot.lane.b32.xlu0 %v769, 12
        %v1375 = vpop.permute.xlu0 %1374
        %1376 = vrot.lane.b32.xlu0 %v770, 12
        %v1377 = vpop.permute.xlu0 %1376
        %1378 = vrot.lane.b32.xlu0 %v771, 12
        %v1379 = vpop.permute.xlu0 %1378
        %1380 = vrot.lane.b32.xlu0 %v772, 12
        %v1381 = vpop.permute.xlu0 %1380
        %1446 = vrot.lane.b32.xlu0 %v773, 15
        %v1447 = vpop.permute.xlu0 %1446
        %1448 = vrot.lane.b32.xlu0 %v774, 15
        %v1449 = vpop.permute.xlu0 %1448
        %1450 = vrot.lane.b32.xlu0 %v775, 15
        %v1451 = vpop.permute.xlu0 %1450
        %1452 = vrot.lane.b32.xlu0 %v776, 15
        %v1453 = vpop.permute.xlu0 %1452
        %1454 = vrot.lane.b32.xlu0 %v777, 15
        %v1455 = vpop.permute.xlu0 %1454
        %1456 = vrot.lane.b32.xlu0 %v778, 15
        %v1457 = vpop.permute.xlu0 %1456
        %1458 = vrot.lane.b32.xlu0 %v779, 15
        %v1459 = vpop.permute.xlu0 %1458
        %1460 = vrot.lane.b32.xlu0 %v780, 15
        %v1461 = vpop.permute.xlu0 %1460
        %1462 = vrot.lane.b32.xlu0 %v781, 15
        %v1463 = vpop.permute.xlu0 %1462
        %1464 = vrot.lane.b32.xlu0 %v782, 15
        %v1465 = vpop.permute.xlu0 %1464
        %1466 = vrot.lane.b32.xlu0 %v783, 15
        %v1467 = vpop.permute.xlu0 %1466
        %1468 = vrot.lane.b32.xlu0 %v784, 15
        %v1469 = vpop.permute.xlu0 %1468
        %1470 = vrot.lane.b32.xlu0 %v785, 15
        %v1471 = vpop.permute.xlu0 %1470
        %1472 = vrot.lane.b32.xlu0 %v786, 15
        %v1473 = vpop.permute.xlu0 %1472
        %1474 = vrot.lane.b32.xlu0 %v787, 15
        %v1475 = vpop.permute.xlu0 %1474
        %1476 = vrot.lane.b32.xlu0 %v788, 15
        %v1477 = vpop.permute.xlu0 %1476
        %1478 = vrot.lane.b32.xlu0 %v789, 15
        %v1479 = vpop.permute.xlu0 %1478
        %1480 = vrot.lane.b32.xlu0 %v790, 15
        %v1481 = vpop.permute.xlu0 %1480
        %1482 = vrot.lane.b32.xlu0 %v791, 15
        %v1483 = vpop.permute.xlu0 %1482
        %1484 = vrot.lane.b32.xlu0 %v792, 15
        %v1485 = vpop.permute.xlu0 %1484
        %1486 = vrot.lane.b32.xlu0 %v793, 15
        %v1487 = vpop.permute.xlu0 %1486
        %1488 = vrot.lane.b32.xlu0 %v794, 15
        %v1489 = vpop.permute.xlu0 %1488
        %1490 = vrot.lane.b32.xlu0 %v795, 15
        %v1491 = vpop.permute.xlu0 %1490
        %1492 = vrot.lane.b32.xlu0 %v796, 15
        %v1493 = vpop.permute.xlu0 %1492
        %1494 = vrot.lane.b32.xlu0 %v797, 15
        %v1495 = vpop.permute.xlu0 %1494
        %1496 = vrot.lane.b32.xlu0 %v798, 15
        %v1497 = vpop.permute.xlu0 %1496
        %1498 = vrot.lane.b32.xlu0 %v799, 15
        %v1499 = vpop.permute.xlu0 %1498
        %1500 = vrot.lane.b32.xlu0 %v800, 15
        %v1501 = vpop.permute.xlu0 %1500
        %1502 = vrot.lane.b32.xlu0 %v801, 15
        %v1503 = vpop.permute.xlu0 %1502
        %1504 = vrot.lane.b32.xlu0 %v802, 15
        %v1505 = vpop.permute.xlu0 %1504
        %1506 = vrot.lane.b32.xlu0 %v803, 15
        %v1507 = vpop.permute.xlu0 %1506
        %1508 = vrot.lane.b32.xlu0 %v804, 15
        %v1509 = vpop.permute.xlu0 %1508
        %1574 = vrot.lane.b32.xlu0 %v806, 18
        %v1575 = vpop.permute.xlu0 %1574
        %1576 = vrot.lane.b32.xlu0 %v807, 18
        %v1577 = vpop.permute.xlu0 %1576
        %1578 = vrot.lane.b32.xlu0 %v808, 18
        %v1579 = vpop.permute.xlu0 %1578
        %1580 = vrot.lane.b32.xlu0 %v809, 18
        %v1581 = vpop.permute.xlu0 %1580
        %1582 = vrot.lane.b32.xlu0 %v810, 18
        %v1583 = vpop.permute.xlu0 %1582
        %1584 = vrot.lane.b32.xlu0 %v811, 18
        %v1585 = vpop.permute.xlu0 %1584
        %1586 = vrot.lane.b32.xlu0 %v812, 18
        %v1587 = vpop.permute.xlu0 %1586
        %1588 = vrot.lane.b32.xlu0 %v813, 18
        %v1589 = vpop.permute.xlu0 %1588
        %1590 = vrot.lane.b32.xlu0 %v814, 18
        %v1591 = vpop.permute.xlu0 %1590
        %1592 = vrot.lane.b32.xlu0 %v815, 18
        %v1593 = vpop.permute.xlu0 %1592
        %1594 = vrot.lane.b32.xlu0 %v816, 18
        %v1595 = vpop.permute.xlu0 %1594
        %1596 = vrot.lane.b32.xlu0 %v817, 18
        %v1597 = vpop.permute.xlu0 %1596
        %1598 = vrot.lane.b32.xlu0 %v818, 18
        %v1599 = vpop.permute.xlu0 %1598
        %1600 = vrot.lane.b32.xlu0 %v819, 18
        %v1601 = vpop.permute.xlu0 %1600
        %1602 = vrot.lane.b32.xlu0 %v820, 18
        %v1603 = vpop.permute.xlu0 %1602
        %1604 = vrot.lane.b32.xlu0 %v821, 18
        %v1605 = vpop.permute.xlu0 %1604
        %1606 = vrot.lane.b32.xlu0 %v822, 18
        %v1607 = vpop.permute.xlu0 %1606
        %1608 = vrot.lane.b32.xlu0 %v823, 18
        %v1609 = vpop.permute.xlu0 %1608
        %1610 = vrot.lane.b32.xlu0 %v824, 18
        %v1611 = vpop.permute.xlu0 %1610
        %1612 = vrot.lane.b32.xlu0 %v825, 18
        %v1613 = vpop.permute.xlu0 %1612
        %1614 = vrot.lane.b32.xlu0 %v826, 18
        %v1615 = vpop.permute.xlu0 %1614
        %1616 = vrot.lane.b32.xlu0 %v827, 18
        %v1617 = vpop.permute.xlu0 %1616
        %1618 = vrot.lane.b32.xlu0 %v828, 18
        %v1619 = vpop.permute.xlu0 %1618
        %1620 = vrot.lane.b32.xlu0 %v829, 18
        %v1621 = vpop.permute.xlu0 %1620
        %1622 = vrot.lane.b32.xlu0 %v830, 18
        %v1623 = vpop.permute.xlu0 %1622
        %1624 = vrot.lane.b32.xlu0 %v831, 18
        %v1625 = vpop.permute.xlu0 %1624
        %1626 = vrot.lane.b32.xlu0 %v832, 18
        %v1627 = vpop.permute.xlu0 %1626
        %1628 = vrot.lane.b32.xlu0 %v833, 18
        %v1629 = vpop.permute.xlu0 %1628
        %1630 = vrot.lane.b32.xlu0 %v834, 18
        %v1631 = vpop.permute.xlu0 %1630
        %1632 = vrot.lane.b32.xlu0 %v835, 18
        %v1633 = vpop.permute.xlu0 %1632
        %1634 = vrot.lane.b32.xlu0 %v836, 18
        %v1635 = vpop.permute.xlu0 %1634
        %1636 = vrot.lane.b32.xlu0 %v837, 18
        %v1637 = vpop.permute.xlu0 %1636
        %1702 = vrot.lane.b32.xlu0 %v838, 21
        %v1703 = vpop.permute.xlu0 %1702
        %1704 = vrot.lane.b32.xlu0 %v839, 21
        %v1705 = vpop.permute.xlu0 %1704
        %1706 = vrot.lane.b32.xlu0 %v840, 21
        %v1707 = vpop.permute.xlu0 %1706
        %1708 = vrot.lane.b32.xlu0 %v841, 21
        %v1709 = vpop.permute.xlu0 %1708
        %1710 = vrot.lane.b32.xlu0 %v842, 21
        %v1711 = vpop.permute.xlu0 %1710
        %1712 = vrot.lane.b32.xlu0 %v843, 21
        %v1713 = vpop.permute.xlu0 %1712
        %1714 = vrot.lane.b32.xlu0 %v844, 21
        %v1715 = vpop.permute.xlu0 %1714
        %1716 = vrot.lane.b32.xlu0 %v845, 21
        %v1717 = vpop.permute.xlu0 %1716
        %1718 = vrot.lane.b32.xlu0 %v846, 21
        %v1719 = vpop.permute.xlu0 %1718
        %1720 = vrot.lane.b32.xlu0 %v847, 21
        %v1721 = vpop.permute.xlu0 %1720
        %1722 = vrot.lane.b32.xlu0 %v848, 21
        %v1723 = vpop.permute.xlu0 %1722
        %1724 = vrot.lane.b32.xlu0 %v849, 21
        %v1725 = vpop.permute.xlu0 %1724
        %1726 = vrot.lane.b32.xlu0 %v850, 21
        %v1727 = vpop.permute.xlu0 %1726
        %1728 = vrot.lane.b32.xlu0 %v851, 21
        %v1729 = vpop.permute.xlu0 %1728
        %1730 = vrot.lane.b32.xlu0 %v852, 21
        %v1731 = vpop.permute.xlu0 %1730
        %1732 = vrot.lane.b32.xlu0 %v853, 21
        %v1733 = vpop.permute.xlu0 %1732
        %1734 = vrot.lane.b32.xlu0 %v854, 21
        %v1735 = vpop.permute.xlu0 %1734
        %1736 = vrot.lane.b32.xlu0 %v855, 21
        %v1737 = vpop.permute.xlu0 %1736
        %1738 = vrot.lane.b32.xlu0 %v856, 21
        %v1739 = vpop.permute.xlu0 %1738
        %1740 = vrot.lane.b32.xlu0 %v857, 21
        %v1741 = vpop.permute.xlu0 %1740
        %1742 = vrot.lane.b32.xlu0 %v858, 21
        %v1743 = vpop.permute.xlu0 %1742
        %1744 = vrot.lane.b32.xlu0 %v859, 21
        %v1745 = vpop.permute.xlu0 %1744
        %1746 = vrot.lane.b32.xlu0 %v860, 21
        %v1747 = vpop.permute.xlu0 %1746
        %1748 = vrot.lane.b32.xlu0 %v861, 21
        %v1749 = vpop.permute.xlu0 %1748
        %1750 = vrot.lane.b32.xlu0 %v862, 21
        %v1751 = vpop.permute.xlu0 %1750
        %1752 = vrot.lane.b32.xlu0 %v863, 21
        %v1753 = vpop.permute.xlu0 %1752
        %1754 = vrot.lane.b32.xlu0 %v864, 21
        %v1755 = vpop.permute.xlu0 %1754
        %1756 = vrot.lane.b32.xlu0 %v865, 21
        %v1757 = vpop.permute.xlu0 %1756
        %1758 = vrot.lane.b32.xlu0 %v866, 21
        %v1759 = vpop.permute.xlu0 %1758
        %1760 = vrot.lane.b32.xlu0 %v867, 21
        %v1761 = vpop.permute.xlu0 %1760
        %1762 = vrot.lane.b32.xlu0 %v868, 21
        %v1763 = vpop.permute.xlu0 %1762
        %1764 = vrot.lane.b32.xlu0 %v869, 21
        %v1765 = vpop.permute.xlu0 %1764
        %1830 = vrot.lane.b32.xlu0 %v870, 24
        %v1831 = vpop.permute.xlu0 %1830
        %1832 = vrot.lane.b32.xlu0 %v871, 24
        %v1833 = vpop.permute.xlu0 %1832
        %1834 = vrot.lane.b32.xlu0 %v872, 24
        %v1835 = vpop.permute.xlu0 %1834
        %1836 = vrot.lane.b32.xlu0 %v873, 24
        %v1837 = vpop.permute.xlu0 %1836
        %1838 = vrot.lane.b32.xlu0 %v874, 24
        %v1839 = vpop.permute.xlu0 %1838
        %1840 = vrot.lane.b32.xlu0 %v875, 24
        %v1841 = vpop.permute.xlu0 %1840
        %1842 = vrot.lane.b32.xlu0 %v876, 24
        %v1843 = vpop.permute.xlu0 %1842
        %1844 = vrot.lane.b32.xlu0 %v877, 24
        %v1845 = vpop.permute.xlu0 %1844
        %1846 = vrot.lane.b32.xlu0 %v878, 24
        %v1847 = vpop.permute.xlu0 %1846
        %1848 = vrot.lane.b32.xlu0 %v879, 24
        %v1849 = vpop.permute.xlu0 %1848
        %1850 = vrot.lane.b32.xlu0 %v880, 24
        %v1851 = vpop.permute.xlu0 %1850
        %1852 = vrot.lane.b32.xlu0 %v881, 24
        %v1853 = vpop.permute.xlu0 %1852
        %1854 = vrot.lane.b32.xlu0 %v882, 24
        %v1855 = vpop.permute.xlu0 %1854
        %1856 = vrot.lane.b32.xlu0 %v883, 24
        %v1857 = vpop.permute.xlu0 %1856
        %1858 = vrot.lane.b32.xlu0 %v884, 24
        %v1859 = vpop.permute.xlu0 %1858
        %1860 = vrot.lane.b32.xlu0 %v885, 24
        %v1861 = vpop.permute.xlu0 %1860
        %1862 = vrot.lane.b32.xlu0 %v886, 24
        %v1863 = vpop.permute.xlu0 %1862
        %1864 = vrot.lane.b32.xlu0 %v887, 24
        %v1865 = vpop.permute.xlu0 %1864
        %1866 = vrot.lane.b32.xlu0 %v888, 24
        %v1867 = vpop.permute.xlu0 %1866
        %1868 = vrot.lane.b32.xlu0 %v889, 24
        %v1869 = vpop.permute.xlu0 %1868
        %1870 = vrot.lane.b32.xlu0 %v890, 24
        %v1871 = vpop.permute.xlu0 %1870
        %1872 = vrot.lane.b32.xlu0 %v891, 24
        %v1873 = vpop.permute.xlu0 %1872
        %1874 = vrot.lane.b32.xlu0 %v892, 24
        %v1875 = vpop.permute.xlu0 %1874
        %1876 = vrot.lane.b32.xlu0 %v893, 24
        %v1877 = vpop.permute.xlu0 %1876
        %1878 = vrot.lane.b32.xlu0 %v894, 24
        %v1879 = vpop.permute.xlu0 %1878
        %1880 = vrot.lane.b32.xlu0 %v895, 24
        %v1881 = vpop.permute.xlu0 %1880
        %1882 = vrot.lane.b32.xlu0 %v896, 24
        %v1883 = vpop.permute.xlu0 %1882
        %1884 = vrot.lane.b32.xlu0 %v897, 24
        %v1885 = vpop.permute.xlu0 %1884
        %1886 = vrot.lane.b32.xlu0 %v898, 24
        %v1887 = vpop.permute.xlu0 %1886
        %1888 = vrot.lane.b32.xlu0 %v899, 24
        %v1889 = vpop.permute.xlu0 %1888
        %1890 = vrot.lane.b32.xlu0 %v900, 24
        %v1891 = vpop.permute.xlu0 %1890
        %1892 = vrot.lane.b32.xlu0 %v901, 24
        %v1893 = vpop.permute.xlu0 %1892
        %v1926 = vsel %vm534, %v613, %v935
        %v1927 = vsel %vm534, %v614, %v937
        %v1928 = vsel %vm534, %v615, %v939
        %v1929 = vsel %vm534, %v616, %v941
        %v1930 = vsel %vm534, %v617, %v943
        %v1931 = vsel %vm534, %v618, %v945
        %v1932 = vsel %vm534, %v619, %v947
        %v1933 = vsel %vm534, %v620, %v949
        %v1934 = vsel %vm534, %v621, %v951
        %v1935 = vsel %vm534, %v622, %v953
        %v1936 = vsel %vm534, %v623, %v955
        %v1937 = vsel %vm534, %v624, %v957
        %v1938 = vsel %vm534, %v625, %v959
        %v1939 = vsel %vm534, %v626, %v961
        %v1940 = vsel %vm534, %v627, %v963
        %v1941 = vsel %vm534, %v628, %v965
        %v1942 = vsel %vm534, %v629, %v967
        %v1943 = vsel %vm534, %v630, %v969
        %v1944 = vsel %vm534, %v631, %v971
        %v1945 = vsel %vm534, %v632, %v973
        %v1946 = vsel %vm534, %v633, %v975
        %v1947 = vsel %vm534, %v634, %v977
        %v1948 = vsel %vm534, %v635, %v979
        %v1949 = vsel %vm534, %v636, %v981
        %v1950 = vsel %vm534, %v637, %v983
        %v1951 = vsel %vm534, %v638, %v985
        %v1952 = vsel %vm534, %v639, %v987
        %v1953 = vsel %vm534, %v640, %v989
        %v1954 = vsel %vm534, %v641, %v991
        %v1955 = vsel %vm534, %v642, %v993
        %v1956 = vsel %vm534, %v643, %v995
        %v1957 = vsel %vm534, %v644, %v997
        %vm1958 = vcmask 48128
        %v1959 = vsel %vm1958, %v1926, %v1063
        %v1960 = vsel %vm1958, %v1927, %v1065
        %v1961 = vsel %vm1958, %v1928, %v1067
        %v1962 = vsel %vm1958, %v1929, %v1069
        %v1963 = vsel %vm1958, %v1930, %v1071
        %v1964 = vsel %vm1958, %v1931, %v1073
        %v1965 = vsel %vm1958, %v1932, %v1075
        %v1966 = vsel %vm1958, %v1933, %v1077
        %v1967 = vsel %vm1958, %v1934, %v1079
        %v1968 = vsel %vm1958, %v1935, %v1081
        %v1969 = vsel %vm1958, %v1936, %v1083
        %v1970 = vsel %vm1958, %v1937, %v1085
        %v1971 = vsel %vm1958, %v1938, %v1087
        %v1972 = vsel %vm1958, %v1939, %v1089
        %v1973 = vsel %vm1958, %v1940, %v1091
        %v1974 = vsel %vm1958, %v1941, %v1093
        %v1975 = vsel %vm1958, %v1942, %v1095
        %v1976 = vsel %vm1958, %v1943, %v1097
        %v1977 = vsel %vm1958, %v1944, %v1099
        %v1978 = vsel %vm1958, %v1945, %v1101
        %v1979 = vsel %vm1958, %v1946, %v1103
        %v1980 = vsel %vm1958, %v1947, %v1105
        %v1981 = vsel %vm1958, %v1948, %v1107
        %v1982 = vsel %vm1958, %v1949, %v1109
        %v1983 = vsel %vm1958, %v1950, %v1111
        %v1984 = vsel %vm1958, %v1951, %v1113
        %v1985 = vsel %vm1958, %v1952, %v1115
        %v1986 = vsel %vm1958, %v1953, %v1117
        %v1987 = vsel %vm1958, %v1954, %v1119
        %v1988 = vsel %vm1958, %v1955, %v1121
        %v1989 = vsel %vm1958, %v1956, %v1123
        %v1990 = vsel %vm1958, %v1957, %v1125
        %vm1991 = vcmask 72704
        %v1992 = vsel %vm1991, %v1959, %v1191
        %v1993 = vsel %vm1991, %v1960, %v1193
        %v1994 = vsel %vm1991, %v1961, %v1195
        %v1995 = vsel %vm1991, %v1962, %v1197
        %v1996 = vsel %vm1991, %v1963, %v1199
        %v1997 = vsel %vm1991, %v1964, %v1201
        %v1998 = vsel %vm1991, %v1965, %v1203
        %v1999 = vsel %vm1991, %v1966, %v1205
        %v2000 = vsel %vm1991, %v1967, %v1207
        %v2001 = vsel %vm1991, %v1968, %v1209
        %v2002 = vsel %vm1991, %v1969, %v1211
        %v2003 = vsel %vm1991, %v1970, %v1213
        %v2004 = vsel %vm1991, %v1971, %v1215
        %v2005 = vsel %vm1991, %v1972, %v1217
        %v2006 = vsel %vm1991, %v1973, %v1219
        %v2007 = vsel %vm1991, %v1974, %v1221
        %v2008 = vsel %vm1991, %v1975, %v1223
        %v2009 = vsel %vm1991, %v1976, %v1225
        %v2010 = vsel %vm1991, %v1977, %v1227
        %v2011 = vsel %vm1991, %v1978, %v1229
        %v2012 = vsel %vm1991, %v1979, %v1231
        %v2013 = vsel %vm1991, %v1980, %v1233
        %v2014 = vsel %vm1991, %v1981, %v1235
        %v2015 = vsel %vm1991, %v1982, %v1237
        %v2016 = vsel %vm1991, %v1983, %v1239
        %v2017 = vsel %vm1991, %v1984, %v1241
        %v2018 = vsel %vm1991, %v1985, %v1243
        %v2019 = vsel %vm1991, %v1986, %v1245
        %v2020 = vsel %vm1991, %v1987, %v1247
        %v2021 = vsel %vm1991, %v1988, %v1249
        %v2022 = vsel %vm1991, %v1989, %v1251
        %v2023 = vsel %vm1991, %v1990, %v1253
        %vm2024 = vcmask 97280
        %v2025 = vsel %vm2024, %v1992, %v1319
        %v2026 = vsel %vm2024, %v1993, %v1321
        %v2027 = vsel %vm2024, %v1994, %v1323
        %v2028 = vsel %vm2024, %v1995, %v1325
        %v2029 = vsel %vm2024, %v1996, %v1327
        %v2030 = vsel %vm2024, %v1997, %v1329
        %v2031 = vsel %vm2024, %v1998, %v1331
        %v2032 = vsel %vm2024, %v1999, %v1333
        %v2033 = vsel %vm2024, %v2000, %v1335
        %v2034 = vsel %vm2024, %v2001, %v1337
        %v2035 = vsel %vm2024, %v2002, %v1339
        %v2036 = vsel %vm2024, %v2003, %v1341
        %v2037 = vsel %vm2024, %v2004, %v1343
        %v2038 = vsel %vm2024, %v2005, %v1345
        %v2039 = vsel %vm2024, %v2006, %v1347
        %v2040 = vsel %vm2024, %v2007, %v1349
        %v2041 = vsel %vm2024, %v2008, %v1351
        %v2042 = vsel %vm2024, %v2009, %v1353
        %v2043 = vsel %vm2024, %v2010, %v1355
        %v2044 = vsel %vm2024, %v2011, %v1357
        %v2045 = vsel %vm2024, %v2012, %v1359
        %v2046 = vsel %vm2024, %v2013, %v1361
        %v2047 = vsel %vm2024, %v2014, %v1363
        %v2048 = vsel %vm2024, %v2015, %v1365
        %v2049 = vsel %vm2024, %v2016, %v1367
        %v2050 = vsel %vm2024, %v2017, %v1369
        %v2051 = vsel %vm2024, %v2018, %v1371
        %v2052 = vsel %vm2024, %v2019, %v1373
        %v2053 = vsel %vm2024, %v2020, %v1375
        %v2054 = vsel %vm2024, %v2021, %v1377
        %v2055 = vsel %vm2024, %v2022, %v1379
        %v2056 = vsel %vm2024, %v2023, %v1381
        %vm2057 = vcmask 121856
        %v2058 = vsel %vm2057, %v2025, %v1447
        %v2059 = vsel %vm2057, %v2026, %v1449
        %v2060 = vsel %vm2057, %v2027, %v1451
        %v2061 = vsel %vm2057, %v2028, %v1453
        %v2062 = vsel %vm2057, %v2029, %v1455
        %v2063 = vsel %vm2057, %v2030, %v1457
        %v2064 = vsel %vm2057, %v2031, %v1459
        %v2065 = vsel %vm2057, %v2032, %v1461
        %v2066 = vsel %vm2057, %v2033, %v1463
        %v2067 = vsel %vm2057, %v2034, %v1465
        %v2068 = vsel %vm2057, %v2035, %v1467
        %v2069 = vsel %vm2057, %v2036, %v1469
        %v2070 = vsel %vm2057, %v2037, %v1471
        %v2071 = vsel %vm2057, %v2038, %v1473
        %v2072 = vsel %vm2057, %v2039, %v1475
        %v2073 = vsel %vm2057, %v2040, %v1477
        %v2074 = vsel %vm2057, %v2041, %v1479
        %v2075 = vsel %vm2057, %v2042, %v1481
        %v2076 = vsel %vm2057, %v2043, %v1483
        %v2077 = vsel %vm2057, %v2044, %v1485
        %v2078 = vsel %vm2057, %v2045, %v1487
        %v2079 = vsel %vm2057, %v2046, %v1489
        %v2080 = vsel %vm2057, %v2047, %v1491
        %v2081 = vsel %vm2057, %v2048, %v1493
        %v2082 = vsel %vm2057, %v2049, %v1495
        %v2083 = vsel %vm2057, %v2050, %v1497
        %v2084 = vsel %vm2057, %v2051, %v1499
        %v2085 = vsel %vm2057, %v2052, %v1501
        %v2086 = vsel %vm2057, %v2053, %v1503
        %v2087 = vsel %vm2057, %v2054, %v1505
        %v2088 = vsel %vm2057, %v2055, %v1507
        %v2089 = vsel %vm2057, %v2056, %v1509
        %vm2090 = vcmask 146432
        %v2091 = vsel %vm2090, %v2058, %v1575
        %v2092 = vsel %vm2090, %v2059, %v1577
        %v2093 = vsel %vm2090, %v2060, %v1579
        %v2094 = vsel %vm2090, %v2061, %v1581
        %v2095 = vsel %vm2090, %v2062, %v1583
        %v2096 = vsel %vm2090, %v2063, %v1585
        %v2097 = vsel %vm2090, %v2064, %v1587
        %v2098 = vsel %vm2090, %v2065, %v1589
        %v2099 = vsel %vm2090, %v2066, %v1591
        %v2100 = vsel %vm2090, %v2067, %v1593
        %v2101 = vsel %vm2090, %v2068, %v1595
        %v2102 = vsel %vm2090, %v2069, %v1597
        %v2103 = vsel %vm2090, %v2070, %v1599
        %v2104 = vsel %vm2090, %v2071, %v1601
        %v2105 = vsel %vm2090, %v2072, %v1603
        %v2106 = vsel %vm2090, %v2073, %v1605
        %v2107 = vsel %vm2090, %v2074, %v1607
        %v2108 = vsel %vm2090, %v2075, %v1609
        %v2109 = vsel %vm2090, %v2076, %v1611
        %v2110 = vsel %vm2090, %v2077, %v1613
        %v2111 = vsel %vm2090, %v2078, %v1615
        %v2112 = vsel %vm2090, %v2079, %v1617
        %v2113 = vsel %vm2090, %v2080, %v1619
        %v2114 = vsel %vm2090, %v2081, %v1621
        %v2115 = vsel %vm2090, %v2082, %v1623
        %v2116 = vsel %vm2090, %v2083, %v1625
        %v2117 = vsel %vm2090, %v2084, %v1627
        %v2118 = vsel %vm2090, %v2085, %v1629
        %v2119 = vsel %vm2090, %v2086, %v1631
        %v2120 = vsel %vm2090, %v2087, %v1633
        %v2121 = vsel %vm2090, %v2088, %v1635
        %v2122 = vsel %vm2090, %v2089, %v1637
        %vm2123 = vcmask 171008
        %v2124 = vsel %vm2123, %v2091, %v1703
        %v2125 = vsel %vm2123, %v2092, %v1705
        %v2126 = vsel %vm2123, %v2093, %v1707
        %v2127 = vsel %vm2123, %v2094, %v1709
        %v2128 = vsel %vm2123, %v2095, %v1711
        %v2129 = vsel %vm2123, %v2096, %v1713
        %v2130 = vsel %vm2123, %v2097, %v1715
        %v2131 = vsel %vm2123, %v2098, %v1717
        %v2132 = vsel %vm2123, %v2099, %v1719
        %v2133 = vsel %vm2123, %v2100, %v1721
        %v2134 = vsel %vm2123, %v2101, %v1723
        %v2135 = vsel %vm2123, %v2102, %v1725
        %v2136 = vsel %vm2123, %v2103, %v1727
        %v2137 = vsel %vm2123, %v2104, %v1729
        %v2138 = vsel %vm2123, %v2105, %v1731
        %v2139 = vsel %vm2123, %v2106, %v1733
        %v2140 = vsel %vm2123, %v2107, %v1735
        %v2141 = vsel %vm2123, %v2108, %v1737
        %v2142 = vsel %vm2123, %v2109, %v1739
        %v2143 = vsel %vm2123, %v2110, %v1741
        %v2144 = vsel %vm2123, %v2111, %v1743
        %v2145 = vsel %vm2123, %v2112, %v1745
        %v2146 = vsel %vm2123, %v2113, %v1747
        %v2147 = vsel %vm2123, %v2114, %v1749
        %v2148 = vsel %vm2123, %v2115, %v1751
        %v2149 = vsel %vm2123, %v2116, %v1753
        %v2150 = vsel %vm2123, %v2117, %v1755
        %v2151 = vsel %vm2123, %v2118, %v1757
        %v2152 = vsel %vm2123, %v2119, %v1759
        %v2153 = vsel %vm2123, %v2120, %v1761
        %v2154 = vsel %vm2123, %v2121, %v1763
        %v2155 = vsel %vm2123, %v2122, %v1765
        %vm2156 = vcmask 195584
        %v2157 = vsel %vm2156, %v2124, %v1831
        %v2158 = vsel %vm2156, %v2125, %v1833
        %v2159 = vsel %vm2156, %v2126, %v1835
        %v2160 = vsel %vm2156, %v2127, %v1837
        %v2161 = vsel %vm2156, %v2128, %v1839
        %v2162 = vsel %vm2156, %v2129, %v1841
        %v2163 = vsel %vm2156, %v2130, %v1843
        %v2164 = vsel %vm2156, %v2131, %v1845
        %v2165 = vsel %vm2156, %v2132, %v1847
        %v2166 = vsel %vm2156, %v2133, %v1849
        %v2167 = vsel %vm2156, %v2134, %v1851
        %v2168 = vsel %vm2156, %v2135, %v1853
        %v2169 = vsel %vm2156, %v2136, %v1855
        %v2170 = vsel %vm2156, %v2137, %v1857
        %v2171 = vsel %vm2156, %v2138, %v1859
        %v2172 = vsel %vm2156, %v2139, %v1861
        %v2173 = vsel %vm2156, %v2140, %v1863
        %v2174 = vsel %vm2156, %v2141, %v1865
        %v2175 = vsel %vm2156, %v2142, %v1867
        %v2176 = vsel %vm2156, %v2143, %v1869
        %v2177 = vsel %vm2156, %v2144, %v1871
        %v2178 = vsel %vm2156, %v2145, %v1873
        %v2179 = vsel %vm2156, %v2146, %v1875
        %v2180 = vsel %vm2156, %v2147, %v1877
        %v2181 = vsel %vm2156, %v2148, %v1879
        %v2182 = vsel %vm2156, %v2149, %v1881
        %v2183 = vsel %vm2156, %v2150, %v1883
        %v2184 = vsel %vm2156, %v2151, %v1885
        %v2185 = vsel %vm2156, %v2152, %v1887
        %v2186 = vsel %vm2156, %v2153, %v1889
        %v2187 = vsel %vm2156, %v2154, %v1891
        %v2188 = vsel %vm2156, %v2155, %v1893
        %v2189 = vpack.c.bf16 %v2158, %v2157
        %v2190 = vpack.c.bf16 %v2160, %v2159
        %v2191 = vpack.c.bf16 %v2162, %v2161
        %v2192 = vpack.c.bf16 %v2164, %v2163
        %v2193 = vpack.c.bf16 %v2166, %v2165
        %v2194 = vpack.c.bf16 %v2168, %v2167
        %v2195 = vpack.c.bf16 %v2170, %v2169
        %v2196 = vpack.c.bf16 %v2172, %v2171
        %v2197 = vpack.c.bf16 %v2174, %v2173
        %v2198 = vpack.c.bf16 %v2176, %v2175
        %v2199 = vpack.c.bf16 %v2178, %v2177
        %v2200 = vpack.c.bf16 %v2180, %v2179
        %v2201 = vpack.c.bf16 %v2182, %v2181
        %v2202 = vpack.c.bf16 %v2184, %v2183
        %v2203 = vpack.c.bf16 %v2186, %v2185
        %v2204 = vpack.c.bf16 %v2188, %v2187
        %v2205 = vld [vmem:[%s3] sm:$0xf]
        %v2206 = vld [vmem:[%s3 + $0x4] sm:$0xf]
        %v2207 = vld [vmem:[%s3 + $0x8] sm:$0xf]
        %v2208 = vld [vmem:[%s3 + $0xc] sm:$0x3]
        %v2209 = vld [vmem:[%s4] sm:$0x1]
        %v2211 = vlaneseq
        %v2212 = vshrl.u32 %v2211, 7
        %v2213 = vsub.s32 0, %v2212
        %v2214 = vrot.slane %v2209, %v2213
        %v2220 = vunpack.c.l.b16 %v2205
        %v2221 = vunpack.c.l.b16 %v2206
        %v2222 = vunpack.c.l.b16 %v2207
        %v2223 = vunpack.c.l.b16 %v2208
        %v2224 = vpack.c.b16 %v2221, %v2220
        %v2225 = vpack.c.b16 %v2223, %v2222
        %vm2227 = vcmask 220160
        %v2229 = vsel %vm2227, %v2189, 0
        %v2232 = vsel %vm2227, %v2190, 0
        %v2235 = vsel %vm2227, %v2191, 0
        %v2238 = vsel %vm2227, %v2192, 0
        %v2241 = vsel %vm2227, %v2193, 0
        %v2244 = vsel %vm2227, %v2194, 0
        %v2247 = vsel %vm2227, %v2195, 0
        %v2250 = vsel %vm2227, %v2196, 0
        %v2253 = vsel %vm2227, %v2197, 0
        %v2256 = vsel %vm2227, %v2198, 0
        %v2259 = vsel %vm2227, %v2199, 0
        %v2262 = vsel %vm2227, %v2200, 0
        %v2265 = vsel %vm2227, %v2201, 0
        %v2268 = vsel %vm2227, %v2202, 0
        %v2271 = vsel %vm2227, %v2203, 0
        %v2274 = vsel %vm2227, %v2204, 0
        %vm2276 = vcmask 1044480
        %vm2277 = vcmask 1045504
        %v2278 = vsel %vm2276, 4294967295, 65535
        %v2279 = vsel %vm2277, %v2278, 0
        %v2281 = vand.u32 %v2225, %v2279
        %2283 = vmatprep.subr.bf16.mxu0 0
        %2284 = vmatpush1.bf16.msra.mxu0 0
        %2285 = vmatprep.subr.bf16.mxu0 0
        %2286 = vmatpush1.bf16.msra.mxu0 0
        %2287 = vmatprep.subr.bf16.mxu0 0
        %2288 = vmatpush1.bf16.msra.mxu0 0
        %2289 = vmatprep.subr.bf16.mxu0 0
        %2290 = vmatpush1.bf16.msra.mxu0 0
        %2291 = vmatprep.subr.bf16.mxu0 0
        %2292 = vmatpush1.bf16.msra.mxu0 0
        %2293 = vmatprep.subr.bf16.mxu0 0
        %2294 = vmatpush1.bf16.msra.mxu0 0
        %2295 = vmatprep.subr.bf16.mxu0 0
        %2296 = vmatpush1.bf16.msra.mxu0 %v2281
        %2297 = vmatprep.subr.bf16.mxu0 0
        %2298 = vmatpush1.bf16.msra.mxu0 %v2224
        %2299 = vmatprep.subr.bf16.mxu0 0
        %2300 = vmatpush2.bf16.msra.mxu0 0
        %2301 = vmatprep.subr.bf16.mxu0 0
        %2302 = vmatpush2.bf16.msra.mxu0 0
        %2303 = vmatprep.subr.bf16.mxu0 0
        %2304 = vmatpush2.bf16.msra.mxu0 0
        %2305 = vmatprep.subr.bf16.mxu0 0
        %2306 = vmatpush2.bf16.msra.mxu0 0
        %2307 = vmatprep.subr.bf16.mxu0 0
        %2308 = vmatpush2.bf16.msra.mxu0 0
        %2309 = vmatprep.subr.bf16.mxu0 0
        %2310 = vmatpush2.bf16.msra.mxu0 0
        %2311 = vmatprep.subr.bf16.mxu0 0
        %2312 = vmatpush2.bf16.msra.mxu0 0
        %2313 = vmatprep.subr.bf16.mxu0 0
        %2314 = vmatpush2.bf16.msra.mxu0 0
        %2315 = vmatprep.mubr.bf16.mxu0 0
        %2316 = vmatmul.mubr.bf16.gmra.mxu0 %v2229
        %v2317 = vpop.f32.mrf.mxu0
        %v2318 = vadd.f32 %v2214, %v2317
        %v2319 = vpop.f32.mrf.mxu0
        %v2320 = vpop.f32.mrf.mxu0
        %v2321 = vadd.f32 %v2214, %v2320
        %v2322 = vpop.f32.mrf.mxu0
        %2323 = vmatprep.mubr.bf16.mxu0 0
        %2324 = vmatmul.mubr.bf16.gmra.mxu0 %v2232
        %v2325 = vpop.f32.mrf.mxu0
        %v2326 = vadd.f32 %v2214, %v2325
        %v2327 = vpop.f32.mrf.mxu0
        %v2328 = vpop.f32.mrf.mxu0
        %v2329 = vadd.f32 %v2214, %v2328
        %v2330 = vpop.f32.mrf.mxu0
        %2331 = vmatprep.mubr.bf16.mxu0 0
        %2332 = vmatmul.mubr.bf16.gmra.mxu0 %v2235
        %v2333 = vpop.f32.mrf.mxu0
        %v2334 = vadd.f32 %v2214, %v2333
        %v2335 = vpop.f32.mrf.mxu0
        %v2336 = vpop.f32.mrf.mxu0
        %v2337 = vadd.f32 %v2214, %v2336
        %v2338 = vpop.f32.mrf.mxu0
        %2339 = vmatprep.mubr.bf16.mxu0 0
        %2340 = vmatmul.mubr.bf16.gmra.mxu0 %v2238
        %v2341 = vpop.f32.mrf.mxu0
        %v2342 = vadd.f32 %v2214, %v2341
        %v2343 = vpop.f32.mrf.mxu0
        %v2344 = vpop.f32.mrf.mxu0
        %v2345 = vadd.f32 %v2214, %v2344
        %v2346 = vpop.f32.mrf.mxu0
        %2347 = vmatprep.mubr.bf16.mxu0 0
        %2348 = vmatmul.mubr.bf16.gmra.mxu0 %v2241
        %v2349 = vpop.f32.mrf.mxu0
        %v2350 = vadd.f32 %v2214, %v2349
        %v2351 = vpop.f32.mrf.mxu0
        %v2352 = vpop.f32.mrf.mxu0
        %v2353 = vadd.f32 %v2214, %v2352
        %v2354 = vpop.f32.mrf.mxu0
        %2355 = vmatprep.mubr.bf16.mxu0 0
        %2356 = vmatmul.mubr.bf16.gmra.mxu0 %v2244
        %v2357 = vpop.f32.mrf.mxu0
        %v2358 = vadd.f32 %v2214, %v2357
        %v2359 = vpop.f32.mrf.mxu0
        %v2360 = vpop.f32.mrf.mxu0
        %v2361 = vadd.f32 %v2214, %v2360
        %v2362 = vpop.f32.mrf.mxu0
        %2363 = vmatprep.mubr.bf16.mxu0 0
        %2364 = vmatmul.mubr.bf16.gmra.mxu0 %v2247
        %v2365 = vpop.f32.mrf.mxu0
        %v2366 = vadd.f32 %v2214, %v2365
        %v2367 = vpop.f32.mrf.mxu0
        %v2368 = vpop.f32.mrf.mxu0
        %v2369 = vadd.f32 %v2214, %v2368
        %v2370 = vpop.f32.mrf.mxu0
        %2371 = vmatprep.mubr.bf16.mxu0 0
        %2372 = vmatmul.mubr.bf16.gmra.mxu0 %v2250
        %v2373 = vpop.f32.mrf.mxu0
        %v2374 = vadd.f32 %v2214, %v2373
        %v2375 = vpop.f32.mrf.mxu0
        %v2376 = vpop.f32.mrf.mxu0
        %v2377 = vadd.f32 %v2214, %v2376
        %v2378 = vpop.f32.mrf.mxu0
        %2379 = vmatprep.mubr.bf16.mxu0 0
        %2380 = vmatmul.mubr.bf16.gmra.mxu0 %v2253
        %v2381 = vpop.f32.mrf.mxu0
        %v2382 = vadd.f32 %v2214, %v2381
        %v2383 = vpop.f32.mrf.mxu0
        %v2384 = vpop.f32.mrf.mxu0
        %v2385 = vadd.f32 %v2214, %v2384
        %v2386 = vpop.f32.mrf.mxu0
        %2387 = vmatprep.mubr.bf16.mxu0 0
        %2388 = vmatmul.mubr.bf16.gmra.mxu0 %v2256
        %v2389 = vpop.f32.mrf.mxu0
        %v2390 = vadd.f32 %v2214, %v2389
        %v2391 = vpop.f32.mrf.mxu0
        %v2392 = vpop.f32.mrf.mxu0
        %v2393 = vadd.f32 %v2214, %v2392
        %v2394 = vpop.f32.mrf.mxu0
        %2395 = vmatprep.mubr.bf16.mxu0 0
        %2396 = vmatmul.mubr.bf16.gmra.mxu0 %v2259
        %v2397 = vpop.f32.mrf.mxu0
        %v2398 = vadd.f32 %v2214, %v2397
        %v2399 = vpop.f32.mrf.mxu0
        %v2400 = vpop.f32.mrf.mxu0
        %v2401 = vadd.f32 %v2214, %v2400
        %v2402 = vpop.f32.mrf.mxu0
        %2403 = vmatprep.mubr.bf16.mxu0 0
        %2404 = vmatmul.mubr.bf16.gmra.mxu0 %v2262
        %v2405 = vpop.f32.mrf.mxu0
        %v2406 = vadd.f32 %v2214, %v2405
        %v2407 = vpop.f32.mrf.mxu0
        %v2408 = vpop.f32.mrf.mxu0
        %v2409 = vadd.f32 %v2214, %v2408
        %v2410 = vpop.f32.mrf.mxu0
        %2411 = vmatprep.mubr.bf16.mxu0 0
        %2412 = vmatmul.mubr.bf16.gmra.mxu0 %v2265
        %v2413 = vpop.f32.mrf.mxu0
        %v2414 = vadd.f32 %v2214, %v2413
        %v2415 = vpop.f32.mrf.mxu0
        %v2416 = vpop.f32.mrf.mxu0
        %v2417 = vadd.f32 %v2214, %v2416
        %v2418 = vpop.f32.mrf.mxu0
        %2419 = vmatprep.mubr.bf16.mxu0 0
        %2420 = vmatmul.mubr.bf16.gmra.mxu0 %v2268
        %v2421 = vpop.f32.mrf.mxu0
        %v2422 = vadd.f32 %v2214, %v2421
        %v2423 = vpop.f32.mrf.mxu0
        %v2424 = vpop.f32.mrf.mxu0
        %v2425 = vadd.f32 %v2214, %v2424
        %v2426 = vpop.f32.mrf.mxu0
        %2427 = vmatprep.mubr.bf16.mxu0 0
        %2428 = vmatmul.mubr.bf16.gmra.mxu0 %v2271
        %v2429 = vpop.f32.mrf.mxu0
        %v2430 = vadd.f32 %v2214, %v2429
        %v2431 = vpop.f32.mrf.mxu0
        %v2432 = vpop.f32.mrf.mxu0
        %v2433 = vadd.f32 %v2214, %v2432
        %v2434 = vpop.f32.mrf.mxu0
        %2435 = vmatprep.mubr.bf16.mxu0 0
        %2436 = vmatmul.mubr.bf16.gmra.mxu0 %v2274
        %v2437 = vpop.f32.mrf.mxu0
        %v2438 = vadd.f32 %v2214, %v2437
        %v2439 = vpop.f32.mrf.mxu0
        %v2440 = vpop.f32.mrf.mxu0
        %v2441 = vadd.f32 %v2214, %v2440
        %v2442 = vpop.f32.mrf.mxu0
        %2443 = vdwg.mxu0
        %v2444 = vmax.f32 %v2318, 0.0
        %v2445 = vmax.f32 %v2321, 0.0
        %v2446 = vmax.f32 %v2326, 0.0
        %v2447 = vmax.f32 %v2329, 0.0
        %v2448 = vmax.f32 %v2334, 0.0
        %v2449 = vmax.f32 %v2337, 0.0
        %v2450 = vmax.f32 %v2342, 0.0
        %v2451 = vmax.f32 %v2345, 0.0
        %v2452 = vmax.f32 %v2350, 0.0
        %v2453 = vmax.f32 %v2353, 0.0
        %v2454 = vmax.f32 %v2358, 0.0
        %v2455 = vmax.f32 %v2361, 0.0
        %v2456 = vmax.f32 %v2366, 0.0
        %v2457 = vmax.f32 %v2369, 0.0
        %v2458 = vmax.f32 %v2374, 0.0
        %v2459 = vmax.f32 %v2377, 0.0
        %v2460 = vmax.f32 %v2382, 0.0
        %v2461 = vmax.f32 %v2385, 0.0
        %v2462 = vmax.f32 %v2390, 0.0
        %v2463 = vmax.f32 %v2393, 0.0
        %v2464 = vmax.f32 %v2398, 0.0
        %v2465 = vmax.f32 %v2401, 0.0
        %v2466 = vmax.f32 %v2406, 0.0
        %v2467 = vmax.f32 %v2409, 0.0
        %v2468 = vmax.f32 %v2414, 0.0
        %v2469 = vmax.f32 %v2417, 0.0
        %v2470 = vmax.f32 %v2422, 0.0
        %v2471 = vmax.f32 %v2425, 0.0
        %v2472 = vmax.f32 %v2430, 0.0
        %v2473 = vmax.f32 %v2433, 0.0
        %v2474 = vmax.f32 %v2438, 0.0
        %v2475 = vmax.f32 %v2441, 0.0
        %vm2476 = vcmask 64512
        %2477 = vst.msk [vmem:[#allocation2] sm:$0xff] %vm2476, 0.0
        %2478 = vst.msk [vmem:[#allocation2 + $0x8] sm:$0xff] %vm2476, 0.0
        %vm2479 = vcmask 58368
        %2480 = vst.msk [vmem:[#allocation2 + $0x10] sm:$0x3] %vm2479, 0.0
        %2481 = vst.msk [vmem:[%s539] sm:$0xff] %vm2476, 0.0
        %2482 = vst.msk [vmem:[%s539 + $0x8] sm:$0xff] %vm2476, 0.0
        %2483 = vst.msk [vmem:[%s539 + $0x10] sm:$0x3] %vm2479, 0.0
        %vm2484 = vcmask 57344
        %2485 = vst.msk [vmem:[#allocation2] sm:$0x1] %vm2484, 0.0
        %2486 = vst.msk [vmem:[#allocation2 + $0x18] sm:$0x1] %vm2484, 0.0
        %2487 = vst.msk [vmem:[#allocation2 + $0x30] sm:$0x1] %vm2484, 0.0
        %2488 = vst.msk [vmem:[#allocation2 + $0x48] sm:$0x1] %vm2484, 0.0
        %2489 = vst.msk [vmem:[#allocation2 + $0x60] sm:$0x1] %vm2484, 0.0
        %2490 = vst.msk [vmem:[#allocation2 + $0x78] sm:$0x1] %vm2484, 0.0
        %2491 = vst.msk [vmem:[#allocation2 + $0x90] sm:$0x1] %vm2484, 0.0
        %2492 = vst.msk [vmem:[#allocation2 + $0xa8] sm:$0x1] %vm2484, 0.0
        %2493 = vst.msk [vmem:[#allocation2 + $0xc0] sm:$0x1] %vm2484, 0.0
        %2494 = vst.msk [vmem:[#allocation2 + $0xd8] sm:$0x1] %vm2484, 0.0
        %2495 = vst.msk [vmem:[#allocation2 + $0xf0] sm:$0x1] %vm2484, 0.0
        %2496 = vst.msk [vmem:[#allocation2 + $0x108] sm:$0x1] %vm2484, 0.0
        %2497 = vst.msk [vmem:[#allocation2 + $0x120] sm:$0x1] %vm2484, 0.0
        %2498 = vst.msk [vmem:[#allocation2 + $0x138] sm:$0x1] %vm2484, 0.0
        %2499 = vst.msk [vmem:[#allocation2 + $0x150] sm:$0x1] %vm2484, 0.0
        %2500 = vst.msk [vmem:[#allocation2 + $0x168] sm:$0x1] %vm2484, 0.0
        %2501 = vst.msk [vmem:[#allocation2 + $0x180] sm:$0x1] %vm2484, 0.0
        %2502 = vst.msk [vmem:[#allocation2 + $0x198] sm:$0x1] %vm2484, 0.0
        %2503 = vst.msk [vmem:[#allocation2 + $0x11] sm:$0x1] %vm2484, 0.0
        %2504 = vst.msk [vmem:[#allocation2 + $0x29] sm:$0x1] %vm2484, 0.0
        %2505 = vst.msk [vmem:[#allocation2 + $0x41] sm:$0x1] %vm2484, 0.0
        %2506 = vst.msk [vmem:[#allocation2 + $0x59] sm:$0x1] %vm2484, 0.0
        %2507 = vst.msk [vmem:[#allocation2 + $0x71] sm:$0x1] %vm2484, 0.0
        %2508 = vst.msk [vmem:[#allocation2 + $0x89] sm:$0x1] %vm2484, 0.0
        %2509 = vst.msk [vmem:[#allocation2 + $0xa1] sm:$0x1] %vm2484, 0.0
        %2510 = vst.msk [vmem:[#allocation2 + $0xb9] sm:$0x1] %vm2484, 0.0
        %2511 = vst.msk [vmem:[#allocation2 + $0xd1] sm:$0x1] %vm2484, 0.0
        %2512 = vst.msk [vmem:[#allocation2 + $0xe9] sm:$0x1] %vm2484, 0.0
        %2513 = vst.msk [vmem:[#allocation2 + $0x101] sm:$0x1] %vm2484, 0.0
        %2514 = vst.msk [vmem:[#allocation2 + $0x119] sm:$0x1] %vm2484, 0.0
        %2515 = vst.msk [vmem:[#allocation2 + $0x131] sm:$0x1] %vm2484, 0.0
        %2516 = vst.msk [vmem:[#allocation2 + $0x149] sm:$0x1] %vm2484, 0.0
        %2517 = vst.msk [vmem:[#allocation2 + $0x161] sm:$0x1] %vm2484, 0.0
        %2518 = vst.msk [vmem:[#allocation2 + $0x179] sm:$0x1] %vm2484, 0.0
        %2519 = vst.msk [vmem:[#allocation2 + $0x191] sm:$0x1] %vm2484, 0.0
        %2520 = vst.msk [vmem:[#allocation2 + $0x1a9] sm:$0x1] %vm2484, 0.0
        %2521 = vst.msk [vmem:[%s580 + $0x1] sm:$0xff] %vm2476, %v2444
        %2522 = vst.msk [vmem:[%s580 + $0x9] sm:$0xff] %vm2476, %v2445
        %2523 = vst.msk [vmem:[%s580 + $0x19] sm:$0xff] %vm2476, %v2446
        %2524 = vst.msk [vmem:[%s580 + $0x21] sm:$0xff] %vm2476, %v2447
        %2525 = vst.msk [vmem:[%s580 + $0x31] sm:$0xff] %vm2476, %v2448
        %2526 = vst.msk [vmem:[%s580 + $0x39] sm:$0xff] %vm2476, %v2449
        %2527 = vst.msk [vmem:[%s580 + $0x49] sm:$0xff] %vm2476, %v2450
        %2528 = vst.msk [vmem:[%s580 + $0x51] sm:$0xff] %vm2476, %v2451
        %2529 = vst.msk [vmem:[%s580 + $0x61] sm:$0xff] %vm2476, %v2452
        %2530 = vst.msk [vmem:[%s580 + $0x69] sm:$0xff] %vm2476, %v2453
        %2531 = vst.msk [vmem:[%s580 + $0x79] sm:$0xff] %vm2476, %v2454
        %2532 = vst.msk [vmem:[%s580 + $0x81] sm:$0xff] %vm2476, %v2455
        %2533 = vst.msk [vmem:[%s580 + $0x91] sm:$0xff] %vm2476, %v2456
        %2534 = vst.msk [vmem:[%s580 + $0x99] sm:$0xff] %vm2476, %v2457
        %2535 = vst.msk [vmem:[%s580 + $0xa9] sm:$0xff] %vm2476, %v2458
        %2536 = vst.msk [vmem:[%s580 + $0xb1] sm:$0xff] %vm2476, %v2459
        %2537 = vst.msk [vmem:[%s580 + $0xc1] sm:$0xff] %vm2476, %v2460
        %2538 = vst.msk [vmem:[%s580 + $0xc9] sm:$0xff] %vm2476, %v2461
        %2539 = vst.msk [vmem:[%s580 + $0xd9] sm:$0xff] %vm2476, %v2462
        %2540 = vst.msk [vmem:[%s580 + $0xe1] sm:$0xff] %vm2476, %v2463
        %2541 = vst.msk [vmem:[%s580 + $0xf1] sm:$0xff] %vm2476, %v2464
        %2542 = vst.msk [vmem:[%s580 + $0xf9] sm:$0xff] %vm2476, %v2465
        %2543 = vst.msk [vmem:[%s580 + $0x109] sm:$0xff] %vm2476, %v2466
        %2544 = vst.msk [vmem:[%s580 + $0x111] sm:$0xff] %vm2476, %v2467
        %2545 = vst.msk [vmem:[%s580 + $0x121] sm:$0xff] %vm2476, %v2468
        %2546 = vst.msk [vmem:[%s580 + $0x129] sm:$0xff] %vm2476, %v2469
        %2547 = vst.msk [vmem:[%s580 + $0x139] sm:$0xff] %vm2476, %v2470
        %2548 = vst.msk [vmem:[%s580 + $0x141] sm:$0xff] %vm2476, %v2471
        %2549 = vst.msk [vmem:[%s580 + $0x151] sm:$0xff] %vm2476, %v2472
        %2550 = vst.msk [vmem:[%s580 + $0x159] sm:$0xff] %vm2476, %v2473
        %2551 = vst.msk [vmem:[%s580 + $0x169] sm:$0xff] %vm2476, %v2474
        %2552 = vst.msk [vmem:[%s580 + $0x171] sm:$0xff] %vm2476, %v2475
        %v2553 = vld [vmem:[#allocation2] sm:$0xff]
        %v2554 = vld [vmem:[#allocation2 + $0x8] sm:$0xff]
        %v2555 = vld [vmem:[#allocation2 + $0x18] sm:$0xff]
        %v2556 = vld [vmem:[#allocation2 + $0x20] sm:$0xff]
        %v2557 = vld [vmem:[#allocation2 + $0x30] sm:$0xff]
        %v2558 = vld [vmem:[#allocation2 + $0x38] sm:$0xff]
        %v2559 = vld [vmem:[#allocation2 + $0x48] sm:$0xff]
        %v2560 = vld [vmem:[#allocation2 + $0x50] sm:$0xff]
        %v2561 = vld [vmem:[#allocation2 + $0x60] sm:$0xff]
        %v2562 = vld [vmem:[#allocation2 + $0x68] sm:$0xff]
        %v2563 = vld [vmem:[#allocation2 + $0x78] sm:$0xff]
        %v2564 = vld [vmem:[#allocation2 + $0x80] sm:$0xff]
        %v2565 = vld [vmem:[#allocation2 + $0x90] sm:$0xff]
        %v2566 = vld [vmem:[#allocation2 + $0x98] sm:$0xff]
        %v2567 = vld [vmem:[#allocation2 + $0xa8] sm:$0xff]
        %v2568 = vld [vmem:[#allocation2 + $0xb0] sm:$0xff]
        %v2569 = vld [vmem:[#allocation2 + $0xc0] sm:$0xff]
        %v2570 = vld [vmem:[#allocation2 + $0xc8] sm:$0xff]
        %v2571 = vld [vmem:[#allocation2 + $0xd8] sm:$0xff]
        %v2572 = vld [vmem:[#allocation2 + $0xe0] sm:$0xff]
        %v2573 = vld [vmem:[#allocation2 + $0xf0] sm:$0xff]
        %v2574 = vld [vmem:[#allocation2 + $0xf8] sm:$0xff]
        %v2575 = vld [vmem:[#allocation2 + $0x108] sm:$0xff]
        %v2576 = vld [vmem:[#allocation2 + $0x110] sm:$0xff]
        %v2577 = vld [vmem:[#allocation2 + $0x120] sm:$0xff]
        %v2578 = vld [vmem:[#allocation2 + $0x128] sm:$0xff]
        %v2579 = vld [vmem:[#allocation2 + $0x138] sm:$0xff]
        %v2580 = vld [vmem:[#allocation2 + $0x140] sm:$0xff]
        %v2581 = vld [vmem:[#allocation2 + $0x150] sm:$0xff]
        %v2582 = vld [vmem:[#allocation2 + $0x158] sm:$0xff]
        %v2583 = vld [vmem:[#allocation2 + $0x168] sm:$0xff]
        %v2584 = vld [vmem:[#allocation2 + $0x170] sm:$0xff]
        %v2585 = vld [vmem:[#allocation2 + $0x1] sm:$0xff]
        %v2586 = vld [vmem:[#allocation2 + $0x9] sm:$0xff]
        %v2587 = vld [vmem:[#allocation2 + $0x19] sm:$0xff]
        %v2588 = vld [vmem:[#allocation2 + $0x21] sm:$0xff]
        %v2589 = vld [vmem:[#allocation2 + $0x31] sm:$0xff]
        %v2590 = vld [vmem:[#allocation2 + $0x39] sm:$0xff]
        %v2591 = vld [vmem:[#allocation2 + $0x49] sm:$0xff]
        %v2592 = vld [vmem:[#allocation2 + $0x51] sm:$0xff]
        %v2593 = vld [vmem:[#allocation2 + $0x61] sm:$0xff]
        %v2594 = vld [vmem:[#allocation2 + $0x69] sm:$0xff]
        %v2595 = vld [vmem:[#allocation2 + $0x79] sm:$0xff]
        %v2596 = vld [vmem:[#allocation2 + $0x81] sm:$0xff]
        %v2597 = vld [vmem:[#allocation2 + $0x91] sm:$0xff]
        %v2598 = vld [vmem:[#allocation2 + $0x99] sm:$0xff]
        %v2599 = vld [vmem:[#allocation2 + $0xa9] sm:$0xff]
        %v2600 = vld [vmem:[#allocation2 + $0xb1] sm:$0xff]
        %v2601 = vld [vmem:[#allocation2 + $0xc1] sm:$0xff]
        %v2602 = vld [vmem:[#allocation2 + $0xc9] sm:$0xff]
        %v2603 = vld [vmem:[#allocation2 + $0xd9] sm:$0xff]
        %v2604 = vld [vmem:[#allocation2 + $0xe1] sm:$0xff]
        %v2605 = vld [vmem:[#allocation2 + $0xf1] sm:$0xff]
        %v2606 = vld [vmem:[#allocation2 + $0xf9] sm:$0xff]
        %v2607 = vld [vmem:[#allocation2 + $0x109] sm:$0xff]
        %v2608 = vld [vmem:[#allocation2 + $0x111] sm:$0xff]
        %v2609 = vld [vmem:[#allocation2 + $0x121] sm:$0xff]
        %v2610 = vld [vmem:[#allocation2 + $0x129] sm:$0xff]
        %v2611 = vld [vmem:[#allocation2 + $0x139] sm:$0xff]
        %v2612 = vld [vmem:[#allocation2 + $0x141] sm:$0xff]
        %v2613 = vld [vmem:[#allocation2 + $0x151] sm:$0xff]
        %v2614 = vld [vmem:[#allocation2 + $0x159] sm:$0xff]
        %v2615 = vld [vmem:[#allocation2 + $0x169] sm:$0xff]
        %v2616 = vld [vmem:[#allocation2 + $0x171] sm:$0xff]
        %v2617 = vld [vmem:[#allocation2 + $0x2] sm:$0xff]
        %v2618 = vld [vmem:[#allocation2 + $0xa] sm:$0xff]
        %v2619 = vld [vmem:[#allocation2 + $0x1a] sm:$0xff]
        %v2620 = vld [vmem:[#allocation2 + $0x22] sm:$0xff]
        %v2621 = vld [vmem:[#allocation2 + $0x32] sm:$0xff]
        %v2622 = vld [vmem:[#allocation2 + $0x3a] sm:$0xff]
        %v2623 = vld [vmem:[#allocation2 + $0x4a] sm:$0xff]
        %v2624 = vld [vmem:[#allocation2 + $0x52] sm:$0xff]
        %v2625 = vld [vmem:[#allocation2 + $0x62] sm:$0xff]
        %v2626 = vld [vmem:[#allocation2 + $0x6a] sm:$0xff]
        %v2627 = vld [vmem:[#allocation2 + $0x7a] sm:$0xff]
        %v2628 = vld [vmem:[#allocation2 + $0x82] sm:$0xff]
        %v2629 = vld [vmem:[#allocation2 + $0x92] sm:$0xff]
        %v2630 = vld [vmem:[#allocation2 + $0x9a] sm:$0xff]
        %v2631 = vld [vmem:[#allocation2 + $0xaa] sm:$0xff]
        %v2632 = vld [vmem:[#allocation2 + $0xb2] sm:$0xff]
        %v2633 = vld [vmem:[#allocation2 + $0xc2] sm:$0xff]
        %v2634 = vld [vmem:[#allocation2 + $0xca] sm:$0xff]
        %v2635 = vld [vmem:[#allocation2 + $0xda] sm:$0xff]
        %v2636 = vld [vmem:[#allocation2 + $0xe2] sm:$0xff]
        %v2637 = vld [vmem:[#allocation2 + $0xf2] sm:$0xff]
        %v2638 = vld [vmem:[#allocation2 + $0xfa] sm:$0xff]
        %v2639 = vld [vmem:[#allocation2 + $0x10a] sm:$0xff]
        %v2640 = vld [vmem:[#allocation2 + $0x112] sm:$0xff]
        %v2641 = vld [vmem:[#allocation2 + $0x122] sm:$0xff]
        %v2642 = vld [vmem:[#allocation2 + $0x12a] sm:$0xff]
        %v2643 = vld [vmem:[#allocation2 + $0x13a] sm:$0xff]
        %v2644 = vld [vmem:[#allocation2 + $0x142] sm:$0xff]
        %v2645 = vld [vmem:[#allocation2 + $0x152] sm:$0xff]
        %v2646 = vld [vmem:[#allocation2 + $0x15a] sm:$0xff]
        %v2647 = vld [vmem:[#allocation2 + $0x16a] sm:$0xff]
        %v2648 = vld [vmem:[#allocation2 + $0x172] sm:$0xff]
        %v2649 = vld [vmem:[%s580] sm:$0xff]
        %v2650 = vld [vmem:[%s580 + $0x8] sm:$0xff]
        %v2651 = vld [vmem:[%s580 + $0x18] sm:$0xff]
        %v2652 = vld [vmem:[%s580 + $0x20] sm:$0xff]
        %v2653 = vld [vmem:[%s580 + $0x30] sm:$0xff]
        %v2654 = vld [vmem:[%s580 + $0x38] sm:$0xff]
        %v2655 = vld [vmem:[%s580 + $0x48] sm:$0xff]
        %v2656 = vld [vmem:[%s580 + $0x50] sm:$0xff]
        %v2657 = vld [vmem:[%s580 + $0x60] sm:$0xff]
        %v2658 = vld [vmem:[%s580 + $0x68] sm:$0xff]
        %v2659 = vld [vmem:[%s580 + $0x78] sm:$0xff]
        %v2660 = vld [vmem:[%s580 + $0x80] sm:$0xff]
        %v2661 = vld [vmem:[%s580 + $0x90] sm:$0xff]
        %v2662 = vld [vmem:[%s580 + $0x98] sm:$0xff]
        %v2663 = vld [vmem:[%s580 + $0xa8] sm:$0xff]
        %v2664 = vld [vmem:[%s580 + $0xb0] sm:$0xff]
        %v2665 = vld [vmem:[%s580 + $0xc0] sm:$0xff]
        %v2666 = vld [vmem:[%s580 + $0xc8] sm:$0xff]
        %v2667 = vld [vmem:[%s580 + $0xd8] sm:$0xff]
        %v2668 = vld [vmem:[%s580 + $0xe0] sm:$0xff]
        %v2669 = vld [vmem:[%s580 + $0xf0] sm:$0xff]
        %v2670 = vld [vmem:[%s580 + $0xf8] sm:$0xff]
        %v2671 = vld [vmem:[%s580 + $0x108] sm:$0xff]
        %v2672 = vld [vmem:[%s580 + $0x110] sm:$0xff]
        %v2673 = vld [vmem:[%s580 + $0x120] sm:$0xff]
        %v2674 = vld [vmem:[%s580 + $0x128] sm:$0xff]
        %v2675 = vld [vmem:[%s580 + $0x138] sm:$0xff]
        %v2676 = vld [vmem:[%s580 + $0x140] sm:$0xff]
        %v2677 = vld [vmem:[%s580 + $0x150] sm:$0xff]
        %v2678 = vld [vmem:[%s580 + $0x158] sm:$0xff]
        %v2679 = vld [vmem:[%s580 + $0x168] sm:$0xff]
        %v2680 = vld [vmem:[%s580 + $0x170] sm:$0xff]
        %v2681 = vld [vmem:[%s580 + $0x1] sm:$0xff]
        %v2682 = vld [vmem:[%s580 + $0x9] sm:$0xff]
        %v2683 = vld [vmem:[%s580 + $0x19] sm:$0xff]
        %v2684 = vld [vmem:[%s580 + $0x21] sm:$0xff]
        %v2685 = vld [vmem:[%s580 + $0x31] sm:$0xff]
        %v2686 = vld [vmem:[%s580 + $0x39] sm:$0xff]
        %v2687 = vld [vmem:[%s580 + $0x49] sm:$0xff]
        %v2688 = vld [vmem:[%s580 + $0x51] sm:$0xff]
        %v2689 = vld [vmem:[%s580 + $0x61] sm:$0xff]
        %v2690 = vld [vmem:[%s580 + $0x69] sm:$0xff]
        %v2691 = vld [vmem:[%s580 + $0x79] sm:$0xff]
        %v2692 = vld [vmem:[%s580 + $0x81] sm:$0xff]
        %v2693 = vld [vmem:[%s580 + $0x91] sm:$0xff]
        %v2694 = vld [vmem:[%s580 + $0x99] sm:$0xff]
        %v2695 = vld [vmem:[%s580 + $0xa9] sm:$0xff]
        %v2696 = vld [vmem:[%s580 + $0xb1] sm:$0xff]
        %v2697 = vld [vmem:[%s580 + $0xc1] sm:$0xff]
        %v2698 = vld [vmem:[%s580 + $0xc9] sm:$0xff]
        %v2699 = vld [vmem:[%s580 + $0xd9] sm:$0xff]
        %v2700 = vld [vmem:[%s580 + $0xe1] sm:$0xff]
        %v2701 = vld [vmem:[%s580 + $0xf1] sm:$0xff]
        %v2702 = vld [vmem:[%s580 + $0xf9] sm:$0xff]
        %v2703 = vld [vmem:[%s580 + $0x109] sm:$0xff]
        %v2704 = vld [vmem:[%s580 + $0x111] sm:$0xff]
        %v2705 = vld [vmem:[%s580 + $0x121] sm:$0xff]
        %v2706 = vld [vmem:[%s580 + $0x129] sm:$0xff]
        %v2707 = vld [vmem:[%s580 + $0x139] sm:$0xff]
        %v2708 = vld [vmem:[%s580 + $0x141] sm:$0xff]
        %v2709 = vld [vmem:[%s580 + $0x151] sm:$0xff]
        %v2710 = vld [vmem:[%s580 + $0x159] sm:$0xff]
        %v2711 = vld [vmem:[%s580 + $0x169] sm:$0xff]
        %v2712 = vld [vmem:[%s580 + $0x171] sm:$0xff]
        %v2713 = vld [vmem:[%s580 + $0x2] sm:$0xff]
        %v2714 = vld [vmem:[%s580 + $0xa] sm:$0xff]
        %v2715 = vld [vmem:[%s580 + $0x1a] sm:$0xff]
        %v2716 = vld [vmem:[%s580 + $0x22] sm:$0xff]
        %v2717 = vld [vmem:[%s580 + $0x32] sm:$0xff]
        %v2718 = vld [vmem:[%s580 + $0x3a] sm:$0xff]
        %v2719 = vld [vmem:[%s580 + $0x4a] sm:$0xff]
        %v2720 = vld [vmem:[%s580 + $0x52] sm:$0xff]
        %v2721 = vld [vmem:[%s580 + $0x62] sm:$0xff]
        %v2722 = vld [vmem:[%s580 + $0x6a] sm:$0xff]
        %v2723 = vld [vmem:[%s580 + $0x7a] sm:$0xff]
        %v2724 = vld [vmem:[%s580 + $0x82] sm:$0xff]
        %v2725 = vld [vmem:[%s580 + $0x92] sm:$0xff]
        %v2726 = vld [vmem:[%s580 + $0x9a] sm:$0xff]
        %v2727 = vld [vmem:[%s580 + $0xaa] sm:$0xff]
        %v2728 = vld [vmem:[%s580 + $0xb2] sm:$0xff]
        %v2729 = vld [vmem:[%s580 + $0xc2] sm:$0xff]
        %v2730 = vld [vmem:[%s580 + $0xca] sm:$0xff]
        %v2731 = vld [vmem:[%s580 + $0xda] sm:$0xff]
        %v2732 = vld [vmem:[%s580 + $0xe2] sm:$0xff]
        %v2733 = vld [vmem:[%s580 + $0xf2] sm:$0xff]
        %v2734 = vld [vmem:[%s580 + $0xfa] sm:$0xff]
        %v2735 = vld [vmem:[%s580 + $0x10a] sm:$0xff]
        %v2736 = vld [vmem:[%s580 + $0x112] sm:$0xff]
        %v2737 = vld [vmem:[%s580 + $0x122] sm:$0xff]
        %v2738 = vld [vmem:[%s580 + $0x12a] sm:$0xff]
        %v2739 = vld [vmem:[%s580 + $0x13a] sm:$0xff]
        %v2740 = vld [vmem:[%s580 + $0x142] sm:$0xff]
        %v2741 = vld [vmem:[%s580 + $0x152] sm:$0xff]
        %v2742 = vld [vmem:[%s580 + $0x15a] sm:$0xff]
        %v2743 = vld [vmem:[%s580 + $0x16a] sm:$0xff]
        %v2744 = vld [vmem:[%s580 + $0x172] sm:$0xff]
        %v2745 = vld [vmem:[%s805] sm:$0xff]
        %v2746 = vld [vmem:[%s805 + $0x8] sm:$0xff]
        %v2747 = vld [vmem:[%s805 + $0x18] sm:$0xff]
        %v2748 = vld [vmem:[%s805 + $0x20] sm:$0xff]
        %v2749 = vld [vmem:[%s805 + $0x30] sm:$0xff]
        %v2750 = vld [vmem:[%s805 + $0x38] sm:$0xff]
        %v2751 = vld [vmem:[%s805 + $0x48] sm:$0xff]
        %v2752 = vld [vmem:[%s805 + $0x50] sm:$0xff]
        %v2753 = vld [vmem:[%s805 + $0x60] sm:$0xff]
        %v2754 = vld [vmem:[%s805 + $0x68] sm:$0xff]
        %v2755 = vld [vmem:[%s805 + $0x78] sm:$0xff]
        %v2756 = vld [vmem:[%s805 + $0x80] sm:$0xff]
        %v2757 = vld [vmem:[%s805 + $0x90] sm:$0xff]
        %v2758 = vld [vmem:[%s805 + $0x98] sm:$0xff]
        %v2759 = vld [vmem:[%s805 + $0xa8] sm:$0xff]
        %v2760 = vld [vmem:[%s805 + $0xb0] sm:$0xff]
        %v2761 = vld [vmem:[%s805 + $0xc0] sm:$0xff]
        %v2762 = vld [vmem:[%s805 + $0xc8] sm:$0xff]
        %v2763 = vld [vmem:[%s805 + $0xd8] sm:$0xff]
        %v2764 = vld [vmem:[%s805 + $0xe0] sm:$0xff]
        %v2765 = vld [vmem:[%s805 + $0xf0] sm:$0xff]
        %v2766 = vld [vmem:[%s805 + $0xf8] sm:$0xff]
        %v2767 = vld [vmem:[%s805 + $0x108] sm:$0xff]
        %v2768 = vld [vmem:[%s805 + $0x110] sm:$0xff]
        %v2769 = vld [vmem:[%s805 + $0x120] sm:$0xff]
        %v2770 = vld [vmem:[%s805 + $0x128] sm:$0xff]
        %v2771 = vld [vmem:[%s805 + $0x138] sm:$0xff]
        %v2772 = vld [vmem:[%s805 + $0x140] sm:$0xff]
        %v2773 = vld [vmem:[%s805 + $0x150] sm:$0xff]
        %v2774 = vld [vmem:[%s805 + $0x158] sm:$0xff]
        %v2775 = vld [vmem:[%s805 + $0x168] sm:$0xff]
        %v2776 = vld [vmem:[%s805 + $0x170] sm:$0xff]
        %v2777 = vld [vmem:[%s805 + $0x1] sm:$0xff]
        %v2778 = vld [vmem:[%s805 + $0x9] sm:$0xff]
        %v2779 = vld [vmem:[%s805 + $0x19] sm:$0xff]
        %v2780 = vld [vmem:[%s805 + $0x21] sm:$0xff]
        %v2781 = vld [vmem:[%s805 + $0x31] sm:$0xff]
        %v2782 = vld [vmem:[%s805 + $0x39] sm:$0xff]
        %v2783 = vld [vmem:[%s805 + $0x49] sm:$0xff]
        %v2784 = vld [vmem:[%s805 + $0x51] sm:$0xff]
        %v2785 = vld [vmem:[%s805 + $0x61] sm:$0xff]
        %v2786 = vld [vmem:[%s805 + $0x69] sm:$0xff]
        %v2787 = vld [vmem:[%s805 + $0x79] sm:$0xff]
        %v2788 = vld [vmem:[%s805 + $0x81] sm:$0xff]
        %v2789 = vld [vmem:[%s805 + $0x91] sm:$0xff]
        %v2790 = vld [vmem:[%s805 + $0x99] sm:$0xff]
        %v2791 = vld [vmem:[%s805 + $0xa9] sm:$0xff]
        %v2792 = vld [vmem:[%s805 + $0xb1] sm:$0xff]
        %v2793 = vld [vmem:[%s805 + $0xc1] sm:$0xff]
        %v2794 = vld [vmem:[%s805 + $0xc9] sm:$0xff]
        %v2795 = vld [vmem:[%s805 + $0xd9] sm:$0xff]
        %v2796 = vld [vmem:[%s805 + $0xe1] sm:$0xff]
        %v2797 = vld [vmem:[%s805 + $0xf1] sm:$0xff]
        %v2798 = vld [vmem:[%s805 + $0xf9] sm:$0xff]
        %v2799 = vld [vmem:[%s805 + $0x109] sm:$0xff]
        %v2800 = vld [vmem:[%s805 + $0x111] sm:$0xff]
        %v2801 = vld [vmem:[%s805 + $0x121] sm:$0xff]
        %v2802 = vld [vmem:[%s805 + $0x129] sm:$0xff]
        %v2803 = vld [vmem:[%s805 + $0x139] sm:$0xff]
        %v2804 = vld [vmem:[%s805 + $0x141] sm:$0xff]
        %v2805 = vld [vmem:[%s805 + $0x151] sm:$0xff]
        %v2806 = vld [vmem:[%s805 + $0x159] sm:$0xff]
        %v2807 = vld [vmem:[%s805 + $0x169] sm:$0xff]
        %v2808 = vld [vmem:[%s805 + $0x171] sm:$0xff]
        %v2809 = vld [vmem:[%s805 + $0x2] sm:$0xff]
        %v2810 = vld [vmem:[%s805 + $0xa] sm:$0xff]
        %v2811 = vld [vmem:[%s805 + $0x1a] sm:$0xff]
        %v2812 = vld [vmem:[%s805 + $0x22] sm:$0xff]
        %v2813 = vld [vmem:[%s805 + $0x32] sm:$0xff]
        %v2814 = vld [vmem:[%s805 + $0x3a] sm:$0xff]
        %v2815 = vld [vmem:[%s805 + $0x4a] sm:$0xff]
        %v2816 = vld [vmem:[%s805 + $0x52] sm:$0xff]
        %v2817 = vld [vmem:[%s805 + $0x62] sm:$0xff]
        %v2818 = vld [vmem:[%s805 + $0x6a] sm:$0xff]
        %v2819 = vld [vmem:[%s805 + $0x7a] sm:$0xff]
        %v2820 = vld [vmem:[%s805 + $0x82] sm:$0xff]
        %v2821 = vld [vmem:[%s805 + $0x92] sm:$0xff]
        %v2822 = vld [vmem:[%s805 + $0x9a] sm:$0xff]
        %v2823 = vld [vmem:[%s805 + $0xaa] sm:$0xff]
        %v2824 = vld [vmem:[%s805 + $0xb2] sm:$0xff]
        %v2825 = vld [vmem:[%s805 + $0xc2] sm:$0xff]
        %v2826 = vld [vmem:[%s805 + $0xca] sm:$0xff]
        %v2827 = vld [vmem:[%s805 + $0xda] sm:$0xff]
        %v2828 = vld [vmem:[%s805 + $0xe2] sm:$0xff]
        %v2829 = vld [vmem:[%s805 + $0xf2] sm:$0xff]
        %v2830 = vld [vmem:[%s805 + $0xfa] sm:$0xff]
        %v2831 = vld [vmem:[%s805 + $0x10a] sm:$0xff]
        %v2832 = vld [vmem:[%s805 + $0x112] sm:$0xff]
        %v2833 = vld [vmem:[%s805 + $0x122] sm:$0xff]
        %v2834 = vld [vmem:[%s805 + $0x12a] sm:$0xff]
        %v2835 = vld [vmem:[%s805 + $0x13a] sm:$0xff]
        %v2836 = vld [vmem:[%s805 + $0x142] sm:$0xff]
        %v2837 = vld [vmem:[%s805 + $0x152] sm:$0xff]
        %v2838 = vld [vmem:[%s805 + $0x15a] sm:$0xff]
        %v2839 = vld [vmem:[%s805 + $0x16a] sm:$0xff]
        %v2840 = vld [vmem:[%s805 + $0x172] sm:$0xff]
        %2873 = vrot.lane.b32.xlu0 %v2585, 8
        %v2874 = vpop.permute.xlu0 %2873
        %2875 = vrot.lane.b32.xlu0 %v2586, 8
        %v2876 = vpop.permute.xlu0 %2875
        %2877 = vrot.lane.b32.xlu0 %v2587, 8
        %v2878 = vpop.permute.xlu0 %2877
        %2879 = vrot.lane.b32.xlu0 %v2588, 8
        %v2880 = vpop.permute.xlu0 %2879
        %2881 = vrot.lane.b32.xlu0 %v2589, 8
        %v2882 = vpop.permute.xlu0 %2881
        %2883 = vrot.lane.b32.xlu0 %v2590, 8
        %v2884 = vpop.permute.xlu0 %2883
        %2885 = vrot.lane.b32.xlu0 %v2591, 8
        %v2886 = vpop.permute.xlu0 %2885
        %2887 = vrot.lane.b32.xlu0 %v2592, 8
        %v2888 = vpop.permute.xlu0 %2887
        %2889 = vrot.lane.b32.xlu0 %v2593, 8
        %v2890 = vpop.permute.xlu0 %2889
        %2891 = vrot.lane.b32.xlu0 %v2594, 8
        %v2892 = vpop.permute.xlu0 %2891
        %2893 = vrot.lane.b32.xlu0 %v2595, 8
        %v2894 = vpop.permute.xlu0 %2893
        %2895 = vrot.lane.b32.xlu0 %v2596, 8
        %v2896 = vpop.permute.xlu0 %2895
        %2897 = vrot.lane.b32.xlu0 %v2597, 8
        %v2898 = vpop.permute.xlu0 %2897
        %2899 = vrot.lane.b32.xlu0 %v2598, 8
        %v2900 = vpop.permute.xlu0 %2899
        %2901 = vrot.lane.b32.xlu0 %v2599, 8
        %v2902 = vpop.permute.xlu0 %2901
        %2903 = vrot.lane.b32.xlu0 %v2600, 8
        %v2904 = vpop.permute.xlu0 %2903
        %2905 = vrot.lane.b32.xlu0 %v2601, 8
        %v2906 = vpop.permute.xlu0 %2905
        %2907 = vrot.lane.b32.xlu0 %v2602, 8
        %v2908 = vpop.permute.xlu0 %2907
        %2909 = vrot.lane.b32.xlu0 %v2603, 8
        %v2910 = vpop.permute.xlu0 %2909
        %2911 = vrot.lane.b32.xlu0 %v2604, 8
        %v2912 = vpop.permute.xlu0 %2911
        %2913 = vrot.lane.b32.xlu0 %v2605, 8
        %v2914 = vpop.permute.xlu0 %2913
        %2915 = vrot.lane.b32.xlu0 %v2606, 8
        %v2916 = vpop.permute.xlu0 %2915
        %2917 = vrot.lane.b32.xlu0 %v2607, 8
        %v2918 = vpop.permute.xlu0 %2917
        %2919 = vrot.lane.b32.xlu0 %v2608, 8
        %v2920 = vpop.permute.xlu0 %2919
        %2921 = vrot.lane.b32.xlu0 %v2609, 8
        %v2922 = vpop.permute.xlu0 %2921
        %2923 = vrot.lane.b32.xlu0 %v2610, 8
        %v2924 = vpop.permute.xlu0 %2923
        %2925 = vrot.lane.b32.xlu0 %v2611, 8
        %v2926 = vpop.permute.xlu0 %2925
        %2927 = vrot.lane.b32.xlu0 %v2612, 8
        %v2928 = vpop.permute.xlu0 %2927
        %2929 = vrot.lane.b32.xlu0 %v2613, 8
        %v2930 = vpop.permute.xlu0 %2929
        %2931 = vrot.lane.b32.xlu0 %v2614, 8
        %v2932 = vpop.permute.xlu0 %2931
        %2933 = vrot.lane.b32.xlu0 %v2615, 8
        %v2934 = vpop.permute.xlu0 %2933
        %2935 = vrot.lane.b32.xlu0 %v2616, 8
        %v2936 = vpop.permute.xlu0 %2935
        %3001 = vrot.lane.b32.xlu0 %v2617, 16
        %v3002 = vpop.permute.xlu0 %3001
        %3003 = vrot.lane.b32.xlu0 %v2618, 16
        %v3004 = vpop.permute.xlu0 %3003
        %3005 = vrot.lane.b32.xlu0 %v2619, 16
        %v3006 = vpop.permute.xlu0 %3005
        %3007 = vrot.lane.b32.xlu0 %v2620, 16
        %v3008 = vpop.permute.xlu0 %3007
        %3009 = vrot.lane.b32.xlu0 %v2621, 16
        %v3010 = vpop.permute.xlu0 %3009
        %3011 = vrot.lane.b32.xlu0 %v2622, 16
        %v3012 = vpop.permute.xlu0 %3011
        %3013 = vrot.lane.b32.xlu0 %v2623, 16
        %v3014 = vpop.permute.xlu0 %3013
        %3015 = vrot.lane.b32.xlu0 %v2624, 16
        %v3016 = vpop.permute.xlu0 %3015
        %3017 = vrot.lane.b32.xlu0 %v2625, 16
        %v3018 = vpop.permute.xlu0 %3017
        %3019 = vrot.lane.b32.xlu0 %v2626, 16
        %v3020 = vpop.permute.xlu0 %3019
        %3021 = vrot.lane.b32.xlu0 %v2627, 16
        %v3022 = vpop.permute.xlu0 %3021
        %3023 = vrot.lane.b32.xlu0 %v2628, 16
        %v3024 = vpop.permute.xlu0 %3023
        %3025 = vrot.lane.b32.xlu0 %v2629, 16
        %v3026 = vpop.permute.xlu0 %3025
        %3027 = vrot.lane.b32.xlu0 %v2630, 16
        %v3028 = vpop.permute.xlu0 %3027
        %3029 = vrot.lane.b32.xlu0 %v2631, 16
        %v3030 = vpop.permute.xlu0 %3029
        %3031 = vrot.lane.b32.xlu0 %v2632, 16
        %v3032 = vpop.permute.xlu0 %3031
        %3033 = vrot.lane.b32.xlu0 %v2633, 16
        %v3034 = vpop.permute.xlu0 %3033
        %3035 = vrot.lane.b32.xlu0 %v2634, 16
        %v3036 = vpop.permute.xlu0 %3035
        %3037 = vrot.lane.b32.xlu0 %v2635, 16
        %v3038 = vpop.permute.xlu0 %3037
        %3039 = vrot.lane.b32.xlu0 %v2636, 16
        %v3040 = vpop.permute.xlu0 %3039
        %3041 = vrot.lane.b32.xlu0 %v2637, 16
        %v3042 = vpop.permute.xlu0 %3041
        %3043 = vrot.lane.b32.xlu0 %v2638, 16
        %v3044 = vpop.permute.xlu0 %3043
        %3045 = vrot.lane.b32.xlu0 %v2639, 16
        %v3046 = vpop.permute.xlu0 %3045
        %3047 = vrot.lane.b32.xlu0 %v2640, 16
        %v3048 = vpop.permute.xlu0 %3047
        %3049 = vrot.lane.b32.xlu0 %v2641, 16
        %v3050 = vpop.permute.xlu0 %3049
        %3051 = vrot.lane.b32.xlu0 %v2642, 16
        %v3052 = vpop.permute.xlu0 %3051
        %3053 = vrot.lane.b32.xlu0 %v2643, 16
        %v3054 = vpop.permute.xlu0 %3053
        %3055 = vrot.lane.b32.xlu0 %v2644, 16
        %v3056 = vpop.permute.xlu0 %3055
        %3057 = vrot.lane.b32.xlu0 %v2645, 16
        %v3058 = vpop.permute.xlu0 %3057
        %3059 = vrot.lane.b32.xlu0 %v2646, 16
        %v3060 = vpop.permute.xlu0 %3059
        %3061 = vrot.lane.b32.xlu0 %v2647, 16
        %v3062 = vpop.permute.xlu0 %3061
        %3063 = vrot.lane.b32.xlu0 %v2648, 16
        %v3064 = vpop.permute.xlu0 %3063
        %3129 = vrot.lane.b32.xlu0 %v2649, 24
        %v3130 = vpop.permute.xlu0 %3129
        %3131 = vrot.lane.b32.xlu0 %v2650, 24
        %v3132 = vpop.permute.xlu0 %3131
        %3133 = vrot.lane.b32.xlu0 %v2651, 24
        %v3134 = vpop.permute.xlu0 %3133
        %3135 = vrot.lane.b32.xlu0 %v2652, 24
        %v3136 = vpop.permute.xlu0 %3135
        %3137 = vrot.lane.b32.xlu0 %v2653, 24
        %v3138 = vpop.permute.xlu0 %3137
        %3139 = vrot.lane.b32.xlu0 %v2654, 24
        %v3140 = vpop.permute.xlu0 %3139
        %3141 = vrot.lane.b32.xlu0 %v2655, 24
        %v3142 = vpop.permute.xlu0 %3141
        %3143 = vrot.lane.b32.xlu0 %v2656, 24
        %v3144 = vpop.permute.xlu0 %3143
        %3145 = vrot.lane.b32.xlu0 %v2657, 24
        %v3146 = vpop.permute.xlu0 %3145
        %3147 = vrot.lane.b32.xlu0 %v2658, 24
        %v3148 = vpop.permute.xlu0 %3147
        %3149 = vrot.lane.b32.xlu0 %v2659, 24
        %v3150 = vpop.permute.xlu0 %3149
        %3151 = vrot.lane.b32.xlu0 %v2660, 24
        %v3152 = vpop.permute.xlu0 %3151
        %3153 = vrot.lane.b32.xlu0 %v2661, 24
        %v3154 = vpop.permute.xlu0 %3153
        %3155 = vrot.lane.b32.xlu0 %v2662, 24
        %v3156 = vpop.permute.xlu0 %3155
        %3157 = vrot.lane.b32.xlu0 %v2663, 24
        %v3158 = vpop.permute.xlu0 %3157
        %3159 = vrot.lane.b32.xlu0 %v2664, 24
        %v3160 = vpop.permute.xlu0 %3159
        %3161 = vrot.lane.b32.xlu0 %v2665, 24
        %v3162 = vpop.permute.xlu0 %3161
        %3163 = vrot.lane.b32.xlu0 %v2666, 24
        %v3164 = vpop.permute.xlu0 %3163
        %3165 = vrot.lane.b32.xlu0 %v2667, 24
        %v3166 = vpop.permute.xlu0 %3165
        %3167 = vrot.lane.b32.xlu0 %v2668, 24
        %v3168 = vpop.permute.xlu0 %3167
        %3169 = vrot.lane.b32.xlu0 %v2669, 24
        %v3170 = vpop.permute.xlu0 %3169
        %3171 = vrot.lane.b32.xlu0 %v2670, 24
        %v3172 = vpop.permute.xlu0 %3171
        %3173 = vrot.lane.b32.xlu0 %v2671, 24
        %v3174 = vpop.permute.xlu0 %3173
        %3175 = vrot.lane.b32.xlu0 %v2672, 24
        %v3176 = vpop.permute.xlu0 %3175
        %3177 = vrot.lane.b32.xlu0 %v2673, 24
        %v3178 = vpop.permute.xlu0 %3177
        %3179 = vrot.lane.b32.xlu0 %v2674, 24
        %v3180 = vpop.permute.xlu0 %3179
        %3181 = vrot.lane.b32.xlu0 %v2675, 24
        %v3182 = vpop.permute.xlu0 %3181
        %3183 = vrot.lane.b32.xlu0 %v2676, 24
        %v3184 = vpop.permute.xlu0 %3183
        %3185 = vrot.lane.b32.xlu0 %v2677, 24
        %v3186 = vpop.permute.xlu0 %3185
        %3187 = vrot.lane.b32.xlu0 %v2678, 24
        %v3188 = vpop.permute.xlu0 %3187
        %3189 = vrot.lane.b32.xlu0 %v2679, 24
        %v3190 = vpop.permute.xlu0 %3189
        %3191 = vrot.lane.b32.xlu0 %v2680, 24
        %v3192 = vpop.permute.xlu0 %3191
        %3257 = vrot.lane.b32.xlu0 %v2681, 32
        %v3258 = vpop.permute.xlu0 %3257
        %3259 = vrot.lane.b32.xlu0 %v2682, 32
        %v3260 = vpop.permute.xlu0 %3259
        %3261 = vrot.lane.b32.xlu0 %v2683, 32
        %v3262 = vpop.permute.xlu0 %3261
        %3263 = vrot.lane.b32.xlu0 %v2684, 32
        %v3264 = vpop.permute.xlu0 %3263
        %3265 = vrot.lane.b32.xlu0 %v2685, 32
        %v3266 = vpop.permute.xlu0 %3265
        %3267 = vrot.lane.b32.xlu0 %v2686, 32
        %v3268 = vpop.permute.xlu0 %3267
        %3269 = vrot.lane.b32.xlu0 %v2687, 32
        %v3270 = vpop.permute.xlu0 %3269
        %3271 = vrot.lane.b32.xlu0 %v2688, 32
        %v3272 = vpop.permute.xlu0 %3271
        %3273 = vrot.lane.b32.xlu0 %v2689, 32
        %v3274 = vpop.permute.xlu0 %3273
        %3275 = vrot.lane.b32.xlu0 %v2690, 32
        %v3276 = vpop.permute.xlu0 %3275
        %3277 = vrot.lane.b32.xlu0 %v2691, 32
        %v3278 = vpop.permute.xlu0 %3277
        %3279 = vrot.lane.b32.xlu0 %v2692, 32
        %v3280 = vpop.permute.xlu0 %3279
        %3281 = vrot.lane.b32.xlu0 %v2693, 32
        %v3282 = vpop.permute.xlu0 %3281
        %3283 = vrot.lane.b32.xlu0 %v2694, 32
        %v3284 = vpop.permute.xlu0 %3283
        %3285 = vrot.lane.b32.xlu0 %v2695, 32
        %v3286 = vpop.permute.xlu0 %3285
        %3287 = vrot.lane.b32.xlu0 %v2696, 32
        %v3288 = vpop.permute.xlu0 %3287
        %3289 = vrot.lane.b32.xlu0 %v2697, 32
        %v3290 = vpop.permute.xlu0 %3289
        %3291 = vrot.lane.b32.xlu0 %v2698, 32
        %v3292 = vpop.permute.xlu0 %3291
        %3293 = vrot.lane.b32.xlu0 %v2699, 32
        %v3294 = vpop.permute.xlu0 %3293
        %3295 = vrot.lane.b32.xlu0 %v2700, 32
        %v3296 = vpop.permute.xlu0 %3295
        %3297 = vrot.lane.b32.xlu0 %v2701, 32
        %v3298 = vpop.permute.xlu0 %3297
        %3299 = vrot.lane.b32.xlu0 %v2702, 32
        %v3300 = vpop.permute.xlu0 %3299
        %3301 = vrot.lane.b32.xlu0 %v2703, 32
        %v3302 = vpop.permute.xlu0 %3301
        %3303 = vrot.lane.b32.xlu0 %v2704, 32
        %v3304 = vpop.permute.xlu0 %3303
        %3305 = vrot.lane.b32.xlu0 %v2705, 32
        %v3306 = vpop.permute.xlu0 %3305
        %3307 = vrot.lane.b32.xlu0 %v2706, 32
        %v3308 = vpop.permute.xlu0 %3307
        %3309 = vrot.lane.b32.xlu0 %v2707, 32
        %v3310 = vpop.permute.xlu0 %3309
        %3311 = vrot.lane.b32.xlu0 %v2708, 32
        %v3312 = vpop.permute.xlu0 %3311
        %3313 = vrot.lane.b32.xlu0 %v2709, 32
        %v3314 = vpop.permute.xlu0 %3313
        %3315 = vrot.lane.b32.xlu0 %v2710, 32
        %v3316 = vpop.permute.xlu0 %3315
        %3317 = vrot.lane.b32.xlu0 %v2711, 32
        %v3318 = vpop.permute.xlu0 %3317
        %3319 = vrot.lane.b32.xlu0 %v2712, 32
        %v3320 = vpop.permute.xlu0 %3319
        %3385 = vrot.lane.b32.xlu0 %v2713, 40
        %v3386 = vpop.permute.xlu0 %3385
        %3387 = vrot.lane.b32.xlu0 %v2714, 40
        %v3388 = vpop.permute.xlu0 %3387
        %3389 = vrot.lane.b32.xlu0 %v2715, 40
        %v3390 = vpop.permute.xlu0 %3389
        %3391 = vrot.lane.b32.xlu0 %v2716, 40
        %v3392 = vpop.permute.xlu0 %3391
        %3393 = vrot.lane.b32.xlu0 %v2717, 40
        %v3394 = vpop.permute.xlu0 %3393
        %3395 = vrot.lane.b32.xlu0 %v2718, 40
        %v3396 = vpop.permute.xlu0 %3395
        %3397 = vrot.lane.b32.xlu0 %v2719, 40
        %v3398 = vpop.permute.xlu0 %3397
        %3399 = vrot.lane.b32.xlu0 %v2720, 40
        %v3400 = vpop.permute.xlu0 %3399
        %3401 = vrot.lane.b32.xlu0 %v2721, 40
        %v3402 = vpop.permute.xlu0 %3401
        %3403 = vrot.lane.b32.xlu0 %v2722, 40
        %v3404 = vpop.permute.xlu0 %3403
        %3405 = vrot.lane.b32.xlu0 %v2723, 40
        %v3406 = vpop.permute.xlu0 %3405
        %3407 = vrot.lane.b32.xlu0 %v2724, 40
        %v3408 = vpop.permute.xlu0 %3407
        %3409 = vrot.lane.b32.xlu0 %v2725, 40
        %v3410 = vpop.permute.xlu0 %3409
        %3411 = vrot.lane.b32.xlu0 %v2726, 40
        %v3412 = vpop.permute.xlu0 %3411
        %3413 = vrot.lane.b32.xlu0 %v2727, 40
        %v3414 = vpop.permute.xlu0 %3413
        %3415 = vrot.lane.b32.xlu0 %v2728, 40
        %v3416 = vpop.permute.xlu0 %3415
        %3417 = vrot.lane.b32.xlu0 %v2729, 40
        %v3418 = vpop.permute.xlu0 %3417
        %3419 = vrot.lane.b32.xlu0 %v2730, 40
        %v3420 = vpop.permute.xlu0 %3419
        %3421 = vrot.lane.b32.xlu0 %v2731, 40
        %v3422 = vpop.permute.xlu0 %3421
        %3423 = vrot.lane.b32.xlu0 %v2732, 40
        %v3424 = vpop.permute.xlu0 %3423
        %3425 = vrot.lane.b32.xlu0 %v2733, 40
        %v3426 = vpop.permute.xlu0 %3425
        %3427 = vrot.lane.b32.xlu0 %v2734, 40
        %v3428 = vpop.permute.xlu0 %3427
        %3429 = vrot.lane.b32.xlu0 %v2735, 40
        %v3430 = vpop.permute.xlu0 %3429
        %3431 = vrot.lane.b32.xlu0 %v2736, 40
        %v3432 = vpop.permute.xlu0 %3431
        %3433 = vrot.lane.b32.xlu0 %v2737, 40
        %v3434 = vpop.permute.xlu0 %3433
        %3435 = vrot.lane.b32.xlu0 %v2738, 40
        %v3436 = vpop.permute.xlu0 %3435
        %3437 = vrot.lane.b32.xlu0 %v2739, 40
        %v3438 = vpop.permute.xlu0 %3437
        %3439 = vrot.lane.b32.xlu0 %v2740, 40
        %v3440 = vpop.permute.xlu0 %3439
        %3441 = vrot.lane.b32.xlu0 %v2741, 40
        %v3442 = vpop.permute.xlu0 %3441
        %3443 = vrot.lane.b32.xlu0 %v2742, 40
        %v3444 = vpop.permute.xlu0 %3443
        %3445 = vrot.lane.b32.xlu0 %v2743, 40
        %v3446 = vpop.permute.xlu0 %3445
        %3447 = vrot.lane.b32.xlu0 %v2744, 40
        %v3448 = vpop.permute.xlu0 %3447
        %3513 = vrot.lane.b32.xlu0 %v2745, 48
        %v3514 = vpop.permute.xlu0 %3513
        %3515 = vrot.lane.b32.xlu0 %v2746, 48
        %v3516 = vpop.permute.xlu0 %3515
        %3517 = vrot.lane.b32.xlu0 %v2747, 48
        %v3518 = vpop.permute.xlu0 %3517
        %3519 = vrot.lane.b32.xlu0 %v2748, 48
        %v3520 = vpop.permute.xlu0 %3519
        %3521 = vrot.lane.b32.xlu0 %v2749, 48
        %v3522 = vpop.permute.xlu0 %3521
        %3523 = vrot.lane.b32.xlu0 %v2750, 48
        %v3524 = vpop.permute.xlu0 %3523
        %3525 = vrot.lane.b32.xlu0 %v2751, 48
        %v3526 = vpop.permute.xlu0 %3525
        %3527 = vrot.lane.b32.xlu0 %v2752, 48
        %v3528 = vpop.permute.xlu0 %3527
        %3529 = vrot.lane.b32.xlu0 %v2753, 48
        %v3530 = vpop.permute.xlu0 %3529
        %3531 = vrot.lane.b32.xlu0 %v2754, 48
        %v3532 = vpop.permute.xlu0 %3531
        %3533 = vrot.lane.b32.xlu0 %v2755, 48
        %v3534 = vpop.permute.xlu0 %3533
        %3535 = vrot.lane.b32.xlu0 %v2756, 48
        %v3536 = vpop.permute.xlu0 %3535
        %3537 = vrot.lane.b32.xlu0 %v2757, 48
        %v3538 = vpop.permute.xlu0 %3537
        %3539 = vrot.lane.b32.xlu0 %v2758, 48
        %v3540 = vpop.permute.xlu0 %3539
        %3541 = vrot.lane.b32.xlu0 %v2759, 48
        %v3542 = vpop.permute.xlu0 %3541
        %3543 = vrot.lane.b32.xlu0 %v2760, 48
        %v3544 = vpop.permute.xlu0 %3543
        %3545 = vrot.lane.b32.xlu0 %v2761, 48
        %v3546 = vpop.permute.xlu0 %3545
        %3547 = vrot.lane.b32.xlu0 %v2762, 48
        %v3548 = vpop.permute.xlu0 %3547
        %3549 = vrot.lane.b32.xlu0 %v2763, 48
        %v3550 = vpop.permute.xlu0 %3549
        %3551 = vrot.lane.b32.xlu0 %v2764, 48
        %v3552 = vpop.permute.xlu0 %3551
        %3553 = vrot.lane.b32.xlu0 %v2765, 48
        %v3554 = vpop.permute.xlu0 %3553
        %3555 = vrot.lane.b32.xlu0 %v2766, 48
        %v3556 = vpop.permute.xlu0 %3555
        %3557 = vrot.lane.b32.xlu0 %v2767, 48
        %v3558 = vpop.permute.xlu0 %3557
        %3559 = vrot.lane.b32.xlu0 %v2768, 48
        %v3560 = vpop.permute.xlu0 %3559
        %3561 = vrot.lane.b32.xlu0 %v2769, 48
        %v3562 = vpop.permute.xlu0 %3561
        %3563 = vrot.lane.b32.xlu0 %v2770, 48
        %v3564 = vpop.permute.xlu0 %3563
        %3565 = vrot.lane.b32.xlu0 %v2771, 48
        %v3566 = vpop.permute.xlu0 %3565
        %3567 = vrot.lane.b32.xlu0 %v2772, 48
        %v3568 = vpop.permute.xlu0 %3567
        %3569 = vrot.lane.b32.xlu0 %v2773, 48
        %v3570 = vpop.permute.xlu0 %3569
        %3571 = vrot.lane.b32.xlu0 %v2774, 48
        %v3572 = vpop.permute.xlu0 %3571
        %3573 = vrot.lane.b32.xlu0 %v2775, 48
        %v3574 = vpop.permute.xlu0 %3573
        %3575 = vrot.lane.b32.xlu0 %v2776, 48
        %v3576 = vpop.permute.xlu0 %3575
        %3641 = vrot.lane.b32.xlu0 %v2777, 56
        %v3642 = vpop.permute.xlu0 %3641
        %3643 = vrot.lane.b32.xlu0 %v2778, 56
        %v3644 = vpop.permute.xlu0 %3643
        %3645 = vrot.lane.b32.xlu0 %v2779, 56
        %v3646 = vpop.permute.xlu0 %3645
        %3647 = vrot.lane.b32.xlu0 %v2780, 56
        %v3648 = vpop.permute.xlu0 %3647
        %3649 = vrot.lane.b32.xlu0 %v2781, 56
        %v3650 = vpop.permute.xlu0 %3649
        %3651 = vrot.lane.b32.xlu0 %v2782, 56
        %v3652 = vpop.permute.xlu0 %3651
        %3653 = vrot.lane.b32.xlu0 %v2783, 56
        %v3654 = vpop.permute.xlu0 %3653
        %3655 = vrot.lane.b32.xlu0 %v2784, 56
        %v3656 = vpop.permute.xlu0 %3655
        %3657 = vrot.lane.b32.xlu0 %v2785, 56
        %v3658 = vpop.permute.xlu0 %3657
        %3659 = vrot.lane.b32.xlu0 %v2786, 56
        %v3660 = vpop.permute.xlu0 %3659
        %3661 = vrot.lane.b32.xlu0 %v2787, 56
        %v3662 = vpop.permute.xlu0 %3661
        %3663 = vrot.lane.b32.xlu0 %v2788, 56
        %v3664 = vpop.permute.xlu0 %3663
        %3665 = vrot.lane.b32.xlu0 %v2789, 56
        %v3666 = vpop.permute.xlu0 %3665
        %3667 = vrot.lane.b32.xlu0 %v2790, 56
        %v3668 = vpop.permute.xlu0 %3667
        %3669 = vrot.lane.b32.xlu0 %v2791, 56
        %v3670 = vpop.permute.xlu0 %3669
        %3671 = vrot.lane.b32.xlu0 %v2792, 56
        %v3672 = vpop.permute.xlu0 %3671
        %3673 = vrot.lane.b32.xlu0 %v2793, 56
        %v3674 = vpop.permute.xlu0 %3673
        %3675 = vrot.lane.b32.xlu0 %v2794, 56
        %v3676 = vpop.permute.xlu0 %3675
        %3677 = vrot.lane.b32.xlu0 %v2795, 56
        %v3678 = vpop.permute.xlu0 %3677
        %3679 = vrot.lane.b32.xlu0 %v2796, 56
        %v3680 = vpop.permute.xlu0 %3679
        %3681 = vrot.lane.b32.xlu0 %v2797, 56
        %v3682 = vpop.permute.xlu0 %3681
        %3683 = vrot.lane.b32.xlu0 %v2798, 56
        %v3684 = vpop.permute.xlu0 %3683
        %3685 = vrot.lane.b32.xlu0 %v2799, 56
        %v3686 = vpop.permute.xlu0 %3685
        %3687 = vrot.lane.b32.xlu0 %v2800, 56
        %v3688 = vpop.permute.xlu0 %3687
        %3689 = vrot.lane.b32.xlu0 %v2801, 56
        %v3690 = vpop.permute.xlu0 %3689
        %3691 = vrot.lane.b32.xlu0 %v2802, 56
        %v3692 = vpop.permute.xlu0 %3691
        %3693 = vrot.lane.b32.xlu0 %v2803, 56
        %v3694 = vpop.permute.xlu0 %3693
        %3695 = vrot.lane.b32.xlu0 %v2804, 56
        %v3696 = vpop.permute.xlu0 %3695
        %3697 = vrot.lane.b32.xlu0 %v2805, 56
        %v3698 = vpop.permute.xlu0 %3697
        %3699 = vrot.lane.b32.xlu0 %v2806, 56
        %v3700 = vpop.permute.xlu0 %3699
        %3701 = vrot.lane.b32.xlu0 %v2807, 56
        %v3702 = vpop.permute.xlu0 %3701
        %3703 = vrot.lane.b32.xlu0 %v2808, 56
        %v3704 = vpop.permute.xlu0 %3703
        %3769 = vrot.lane.b32.xlu0 %v2809, 64
        %v3770 = vpop.permute.xlu0 %3769
        %3771 = vrot.lane.b32.xlu0 %v2810, 64
        %v3772 = vpop.permute.xlu0 %3771
        %3773 = vrot.lane.b32.xlu0 %v2811, 64
        %v3774 = vpop.permute.xlu0 %3773
        %3775 = vrot.lane.b32.xlu0 %v2812, 64
        %v3776 = vpop.permute.xlu0 %3775
        %3777 = vrot.lane.b32.xlu0 %v2813, 64
        %v3778 = vpop.permute.xlu0 %3777
        %3779 = vrot.lane.b32.xlu0 %v2814, 64
        %v3780 = vpop.permute.xlu0 %3779
        %3781 = vrot.lane.b32.xlu0 %v2815, 64
        %v3782 = vpop.permute.xlu0 %3781
        %3783 = vrot.lane.b32.xlu0 %v2816, 64
        %v3784 = vpop.permute.xlu0 %3783
        %3785 = vrot.lane.b32.xlu0 %v2817, 64
        %v3786 = vpop.permute.xlu0 %3785
        %3787 = vrot.lane.b32.xlu0 %v2818, 64
        %v3788 = vpop.permute.xlu0 %3787
        %3789 = vrot.lane.b32.xlu0 %v2819, 64
        %v3790 = vpop.permute.xlu0 %3789
        %3791 = vrot.lane.b32.xlu0 %v2820, 64
        %v3792 = vpop.permute.xlu0 %3791
        %3793 = vrot.lane.b32.xlu0 %v2821, 64
        %v3794 = vpop.permute.xlu0 %3793
        %3795 = vrot.lane.b32.xlu0 %v2822, 64
        %v3796 = vpop.permute.xlu0 %3795
        %3797 = vrot.lane.b32.xlu0 %v2823, 64
        %v3798 = vpop.permute.xlu0 %3797
        %3799 = vrot.lane.b32.xlu0 %v2824, 64
        %v3800 = vpop.permute.xlu0 %3799
        %3801 = vrot.lane.b32.xlu0 %v2825, 64
        %v3802 = vpop.permute.xlu0 %3801
        %3803 = vrot.lane.b32.xlu0 %v2826, 64
        %v3804 = vpop.permute.xlu0 %3803
        %3805 = vrot.lane.b32.xlu0 %v2827, 64
        %v3806 = vpop.permute.xlu0 %3805
        %3807 = vrot.lane.b32.xlu0 %v2828, 64
        %v3808 = vpop.permute.xlu0 %3807
        %3809 = vrot.lane.b32.xlu0 %v2829, 64
        %v3810 = vpop.permute.xlu0 %3809
        %3811 = vrot.lane.b32.xlu0 %v2830, 64
        %v3812 = vpop.permute.xlu0 %3811
        %3813 = vrot.lane.b32.xlu0 %v2831, 64
        %v3814 = vpop.permute.xlu0 %3813
        %3815 = vrot.lane.b32.xlu0 %v2832, 64
        %v3816 = vpop.permute.xlu0 %3815
        %3817 = vrot.lane.b32.xlu0 %v2833, 64
        %v3818 = vpop.permute.xlu0 %3817
        %3819 = vrot.lane.b32.xlu0 %v2834, 64
        %v3820 = vpop.permute.xlu0 %3819
        %3821 = vrot.lane.b32.xlu0 %v2835, 64
        %v3822 = vpop.permute.xlu0 %3821
        %3823 = vrot.lane.b32.xlu0 %v2836, 64
        %v3824 = vpop.permute.xlu0 %3823
        %3825 = vrot.lane.b32.xlu0 %v2837, 64
        %v3826 = vpop.permute.xlu0 %3825
        %3827 = vrot.lane.b32.xlu0 %v2838, 64
        %v3828 = vpop.permute.xlu0 %3827
        %3829 = vrot.lane.b32.xlu0 %v2839, 64
        %v3830 = vpop.permute.xlu0 %3829
        %3831 = vrot.lane.b32.xlu0 %v2840, 64
        %v3832 = vpop.permute.xlu0 %3831
        %v3865 = vsel %vm2476, %v2553, %v2874
        %v3866 = vsel %vm2476, %v2554, %v2876
        %v3867 = vsel %vm2476, %v2555, %v2878
        %v3868 = vsel %vm2476, %v2556, %v2880
        %v3869 = vsel %vm2476, %v2557, %v2882
        %v3870 = vsel %vm2476, %v2558, %v2884
        %v3871 = vsel %vm2476, %v2559, %v2886
        %v3872 = vsel %vm2476, %v2560, %v2888
        %v3873 = vsel %vm2476, %v2561, %v2890
        %v3874 = vsel %vm2476, %v2562, %v2892
        %v3875 = vsel %vm2476, %v2563, %v2894
        %v3876 = vsel %vm2476, %v2564, %v2896
        %v3877 = vsel %vm2476, %v2565, %v2898
        %v3878 = vsel %vm2476, %v2566, %v2900
        %v3879 = vsel %vm2476, %v2567, %v2902
        %v3880 = vsel %vm2476, %v2568, %v2904
        %v3881 = vsel %vm2476, %v2569, %v2906
        %v3882 = vsel %vm2476, %v2570, %v2908
        %v3883 = vsel %vm2476, %v2571, %v2910
        %v3884 = vsel %vm2476, %v2572, %v2912
        %v3885 = vsel %vm2476, %v2573, %v2914
        %v3886 = vsel %vm2476, %v2574, %v2916
        %v3887 = vsel %vm2476, %v2575, %v2918
        %v3888 = vsel %vm2476, %v2576, %v2920
        %v3889 = vsel %vm2476, %v2577, %v2922
        %v3890 = vsel %vm2476, %v2578, %v2924
        %v3891 = vsel %vm2476, %v2579, %v2926
        %v3892 = vsel %vm2476, %v2580, %v2928
        %v3893 = vsel %vm2476, %v2581, %v2930
        %v3894 = vsel %vm2476, %v2582, %v2932
        %v3895 = vsel %vm2476, %v2583, %v2934
        %v3896 = vsel %vm2476, %v2584, %v2936
        %vm3897 = vcmask 130048
        %v3898 = vsel %vm3897, %v3865, %v3002
        %v3899 = vsel %vm3897, %v3866, %v3004
        %v3900 = vsel %vm3897, %v3867, %v3006
        %v3901 = vsel %vm3897, %v3868, %v3008
        %v3902 = vsel %vm3897, %v3869, %v3010
        %v3903 = vsel %vm3897, %v3870, %v3012
        %v3904 = vsel %vm3897, %v3871, %v3014
        %v3905 = vsel %vm3897, %v3872, %v3016
        %v3906 = vsel %vm3897, %v3873, %v3018
        %v3907 = vsel %vm3897, %v3874, %v3020
        %v3908 = vsel %vm3897, %v3875, %v3022
        %v3909 = vsel %vm3897, %v3876, %v3024
        %v3910 = vsel %vm3897, %v3877, %v3026
        %v3911 = vsel %vm3897, %v3878, %v3028
        %v3912 = vsel %vm3897, %v3879, %v3030
        %v3913 = vsel %vm3897, %v3880, %v3032
        %v3914 = vsel %vm3897, %v3881, %v3034
        %v3915 = vsel %vm3897, %v3882, %v3036
        %v3916 = vsel %vm3897, %v3883, %v3038
        %v3917 = vsel %vm3897, %v3884, %v3040
        %v3918 = vsel %vm3897, %v3885, %v3042
        %v3919 = vsel %vm3897, %v3886, %v3044
        %v3920 = vsel %vm3897, %v3887, %v3046
        %v3921 = vsel %vm3897, %v3888, %v3048
        %v3922 = vsel %vm3897, %v3889, %v3050
        %v3923 = vsel %vm3897, %v3890, %v3052
        %v3924 = vsel %vm3897, %v3891, %v3054
        %v3925 = vsel %vm3897, %v3892, %v3056
        %v3926 = vsel %vm3897, %v3893, %v3058
        %v3927 = vsel %vm3897, %v3894, %v3060
        %v3928 = vsel %vm3897, %v3895, %v3062
        %v3929 = vsel %vm3897, %v3896, %v3064
        %v3930 = vsel %vm2156, %v3898, %v3130
        %v3931 = vsel %vm2156, %v3899, %v3132
        %v3932 = vsel %vm2156, %v3900, %v3134
        %v3933 = vsel %vm2156, %v3901, %v3136
        %v3934 = vsel %vm2156, %v3902, %v3138
        %v3935 = vsel %vm2156, %v3903, %v3140
        %v3936 = vsel %vm2156, %v3904, %v3142
        %v3937 = vsel %vm2156, %v3905, %v3144
        %v3938 = vsel %vm2156, %v3906, %v3146
        %v3939 = vsel %vm2156, %v3907, %v3148
        %v3940 = vsel %vm2156, %v3908, %v3150
        %v3941 = vsel %vm2156, %v3909, %v3152
        %v3942 = vsel %vm2156, %v3910, %v3154
        %v3943 = vsel %vm2156, %v3911, %v3156
        %v3944 = vsel %vm2156, %v3912, %v3158
        %v3945 = vsel %vm2156, %v3913, %v3160
        %v3946 = vsel %vm2156, %v3914, %v3162
        %v3947 = vsel %vm2156, %v3915, %v3164
        %v3948 = vsel %vm2156, %v3916, %v3166
        %v3949 = vsel %vm2156, %v3917, %v3168
        %v3950 = vsel %vm2156, %v3918, %v3170
        %v3951 = vsel %vm2156, %v3919, %v3172
        %v3952 = vsel %vm2156, %v3920, %v3174
        %v3953 = vsel %vm2156, %v3921, %v3176
        %v3954 = vsel %vm2156, %v3922, %v3178
        %v3955 = vsel %vm2156, %v3923, %v3180
        %v3956 = vsel %vm2156, %v3924, %v3182
        %v3957 = vsel %vm2156, %v3925, %v3184
        %v3958 = vsel %vm2156, %v3926, %v3186
        %v3959 = vsel %vm2156, %v3927, %v3188
        %v3960 = vsel %vm2156, %v3928, %v3190
        %v3961 = vsel %vm2156, %v3929, %v3192
        %vm3962 = vcmask 261120
        %v3963 = vsel %vm3962, %v3930, %v3258
        %v3964 = vsel %vm3962, %v3931, %v3260
        %v3965 = vsel %vm3962, %v3932, %v3262
        %v3966 = vsel %vm3962, %v3933, %v3264
        %v3967 = vsel %vm3962, %v3934, %v3266
        %v3968 = vsel %vm3962, %v3935, %v3268
        %v3969 = vsel %vm3962, %v3936, %v3270
        %v3970 = vsel %vm3962, %v3937, %v3272
        %v3971 = vsel %vm3962, %v3938, %v3274
        %v3972 = vsel %vm3962, %v3939, %v3276
        %v3973 = vsel %vm3962, %v3940, %v3278
        %v3974 = vsel %vm3962, %v3941, %v3280
        %v3975 = vsel %vm3962, %v3942, %v3282
        %v3976 = vsel %vm3962, %v3943, %v3284
        %v3977 = vsel %vm3962, %v3944, %v3286
        %v3978 = vsel %vm3962, %v3945, %v3288
        %v3979 = vsel %vm3962, %v3946, %v3290
        %v3980 = vsel %vm3962, %v3947, %v3292
        %v3981 = vsel %vm3962, %v3948, %v3294
        %v3982 = vsel %vm3962, %v3949, %v3296
        %v3983 = vsel %vm3962, %v3950, %v3298
        %v3984 = vsel %vm3962, %v3951, %v3300
        %v3985 = vsel %vm3962, %v3952, %v3302
        %v3986 = vsel %vm3962, %v3953, %v3304
        %v3987 = vsel %vm3962, %v3954, %v3306
        %v3988 = vsel %vm3962, %v3955, %v3308
        %v3989 = vsel %vm3962, %v3956, %v3310
        %v3990 = vsel %vm3962, %v3957, %v3312
        %v3991 = vsel %vm3962, %v3958, %v3314
        %v3992 = vsel %vm3962, %v3959, %v3316
        %v3993 = vsel %vm3962, %v3960, %v3318
        %v3994 = vsel %vm3962, %v3961, %v3320
        %vm3995 = vcmask 326656
        %v3996 = vsel %vm3995, %v3963, %v3386
        %v3997 = vsel %vm3995, %v3964, %v3388
        %v3998 = vsel %vm3995, %v3965, %v3390
        %v3999 = vsel %vm3995, %v3966, %v3392
        %v4000 = vsel %vm3995, %v3967, %v3394
        %v4001 = vsel %vm3995, %v3968, %v3396
        %v4002 = vsel %vm3995, %v3969, %v3398
        %v4003 = vsel %vm3995, %v3970, %v3400
        %v4004 = vsel %vm3995, %v3971, %v3402
        %v4005 = vsel %vm3995, %v3972, %v3404
        %v4006 = vsel %vm3995, %v3973, %v3406
        %v4007 = vsel %vm3995, %v3974, %v3408
        %v4008 = vsel %vm3995, %v3975, %v3410
        %v4009 = vsel %vm3995, %v3976, %v3412
        %v4010 = vsel %vm3995, %v3977, %v3414
        %v4011 = vsel %vm3995, %v3978, %v3416
        %v4012 = vsel %vm3995, %v3979, %v3418
        %v4013 = vsel %vm3995, %v3980, %v3420
        %v4014 = vsel %vm3995, %v3981, %v3422
        %v4015 = vsel %vm3995, %v3982, %v3424
        %v4016 = vsel %vm3995, %v3983, %v3426
        %v4017 = vsel %vm3995, %v3984, %v3428
        %v4018 = vsel %vm3995, %v3985, %v3430
        %v4019 = vsel %vm3995, %v3986, %v3432
        %v4020 = vsel %vm3995, %v3987, %v3434
        %v4021 = vsel %vm3995, %v3988, %v3436
        %v4022 = vsel %vm3995, %v3989, %v3438
        %v4023 = vsel %vm3995, %v3990, %v3440
        %v4024 = vsel %vm3995, %v3991, %v3442
        %v4025 = vsel %vm3995, %v3992, %v3444
        %v4026 = vsel %vm3995, %v3993, %v3446
        %v4027 = vsel %vm3995, %v3994, %v3448
        %vm4028 = vcmask 392192
        %v4029 = vsel %vm4028, %v3996, %v3514
        %v4030 = vsel %vm4028, %v3997, %v3516
        %v4031 = vsel %vm4028, %v3998, %v3518
        %v4032 = vsel %vm4028, %v3999, %v3520
        %v4033 = vsel %vm4028, %v4000, %v3522
        %v4034 = vsel %vm4028, %v4001, %v3524
        %v4035 = vsel %vm4028, %v4002, %v3526
        %v4036 = vsel %vm4028, %v4003, %v3528
        %v4037 = vsel %vm4028, %v4004, %v3530
        %v4038 = vsel %vm4028, %v4005, %v3532
        %v4039 = vsel %vm4028, %v4006, %v3534
        %v4040 = vsel %vm4028, %v4007, %v3536
        %v4041 = vsel %vm4028, %v4008, %v3538
        %v4042 = vsel %vm4028, %v4009, %v3540
        %v4043 = vsel %vm4028, %v4010, %v3542
        %v4044 = vsel %vm4028, %v4011, %v3544
        %v4045 = vsel %vm4028, %v4012, %v3546
        %v4046 = vsel %vm4028, %v4013, %v3548
        %v4047 = vsel %vm4028, %v4014, %v3550
        %v4048 = vsel %vm4028, %v4015, %v3552
        %v4049 = vsel %vm4028, %v4016, %v3554
        %v4050 = vsel %vm4028, %v4017, %v3556
        %v4051 = vsel %vm4028, %v4018, %v3558
        %v4052 = vsel %vm4028, %v4019, %v3560
        %v4053 = vsel %vm4028, %v4020, %v3562
        %v4054 = vsel %vm4028, %v4021, %v3564
        %v4055 = vsel %vm4028, %v4022, %v3566
        %v4056 = vsel %vm4028, %v4023, %v3568
        %v4057 = vsel %vm4028, %v4024, %v3570
        %v4058 = vsel %vm4028, %v4025, %v3572
        %v4059 = vsel %vm4028, %v4026, %v3574
        %v4060 = vsel %vm4028, %v4027, %v3576
        %vm4061 = vcmask 457728
        %v4062 = vsel %vm4061, %v4029, %v3642
        %v4063 = vsel %vm4061, %v4030, %v3644
        %v4064 = vsel %vm4061, %v4031, %v3646
        %v4065 = vsel %vm4061, %v4032, %v3648
        %v4066 = vsel %vm4061, %v4033, %v3650
        %v4067 = vsel %vm4061, %v4034, %v3652
        %v4068 = vsel %vm4061, %v4035, %v3654
        %v4069 = vsel %vm4061, %v4036, %v3656
        %v4070 = vsel %vm4061, %v4037, %v3658
        %v4071 = vsel %vm4061, %v4038, %v3660
        %v4072 = vsel %vm4061, %v4039, %v3662
        %v4073 = vsel %vm4061, %v4040, %v3664
        %v4074 = vsel %vm4061, %v4041, %v3666
        %v4075 = vsel %vm4061, %v4042, %v3668
        %v4076 = vsel %vm4061, %v4043, %v3670
        %v4077 = vsel %vm4061, %v4044, %v3672
        %v4078 = vsel %vm4061, %v4045, %v3674
        %v4079 = vsel %vm4061, %v4046, %v3676
        %v4080 = vsel %vm4061, %v4047, %v3678
        %v4081 = vsel %vm4061, %v4048, %v3680
        %v4082 = vsel %vm4061, %v4049, %v3682
        %v4083 = vsel %vm4061, %v4050, %v3684
        %v4084 = vsel %vm4061, %v4051, %v3686
        %v4085 = vsel %vm4061, %v4052, %v3688
        %v4086 = vsel %vm4061, %v4053, %v3690
        %v4087 = vsel %vm4061, %v4054, %v3692
        %v4088 = vsel %vm4061, %v4055, %v3694
        %v4089 = vsel %vm4061, %v4056, %v3696
        %v4090 = vsel %vm4061, %v4057, %v3698
        %v4091 = vsel %vm4061, %v4058, %v3700
        %v4092 = vsel %vm4061, %v4059, %v3702
        %v4093 = vsel %vm4061, %v4060, %v3704
        %vm4094 = vcmask 523264
        %v4095 = vsel %vm4094, %v4062, %v3770
        %v4096 = vsel %vm4094, %v4063, %v3772
        %v4097 = vsel %vm4094, %v4064, %v3774
        %v4098 = vsel %vm4094, %v4065, %v3776
        %v4099 = vsel %vm4094, %v4066, %v3778
        %v4100 = vsel %vm4094, %v4067, %v3780
        %v4101 = vsel %vm4094, %v4068, %v3782
        %v4102 = vsel %vm4094, %v4069, %v3784
        %v4103 = vsel %vm4094, %v4070, %v3786
        %v4104 = vsel %vm4094, %v4071, %v3788
        %v4105 = vsel %vm4094, %v4072, %v3790
        %v4106 = vsel %vm4094, %v4073, %v3792
        %v4107 = vsel %vm4094, %v4074, %v3794
        %v4108 = vsel %vm4094, %v4075, %v3796
        %v4109 = vsel %vm4094, %v4076, %v3798
        %v4110 = vsel %vm4094, %v4077, %v3800
        %v4111 = vsel %vm4094, %v4078, %v3802
        %v4112 = vsel %vm4094, %v4079, %v3804
        %v4113 = vsel %vm4094, %v4080, %v3806
        %v4114 = vsel %vm4094, %v4081, %v3808
        %v4115 = vsel %vm4094, %v4082, %v3810
        %v4116 = vsel %vm4094, %v4083, %v3812
        %v4117 = vsel %vm4094, %v4084, %v3814
        %v4118 = vsel %vm4094, %v4085, %v3816
        %v4119 = vsel %vm4094, %v4086, %v3818
        %v4120 = vsel %vm4094, %v4087, %v3820
        %v4121 = vsel %vm4094, %v4088, %v3822
        %v4122 = vsel %vm4094, %v4089, %v3824
        %v4123 = vsel %vm4094, %v4090, %v3826
        %v4124 = vsel %vm4094, %v4091, %v3828
        %v4125 = vsel %vm4094, %v4092, %v3830
        %v4126 = vsel %vm4094, %v4093, %v3832
        %v4127 = vpack.c.bf16 %v4096, %v4095
        %v4128 = vpack.c.bf16 %v4098, %v4097
        %v4129 = vpack.c.bf16 %v4100, %v4099
        %v4130 = vpack.c.bf16 %v4102, %v4101
        %v4131 = vpack.c.bf16 %v4104, %v4103
        %v4132 = vpack.c.bf16 %v4106, %v4105
        %v4133 = vpack.c.bf16 %v4108, %v4107
        %v4134 = vpack.c.bf16 %v4110, %v4109
        %v4135 = vpack.c.bf16 %v4112, %v4111
        %v4136 = vpack.c.bf16 %v4114, %v4113
        %v4137 = vpack.c.bf16 %v4116, %v4115
        %v4138 = vpack.c.bf16 %v4118, %v4117
        %v4139 = vpack.c.bf16 %v4120, %v4119
        %v4140 = vpack.c.bf16 %v4122, %v4121
        %v4141 = vpack.c.bf16 %v4124, %v4123
        %v4142 = vpack.c.bf16 %v4126, %v4125
        %v4143 = vld [vmem:[%s5] sm:$0xf]
        %v4144 = vld [vmem:[%s5 + $0x4] sm:$0xf]
        %v4145 = vld [vmem:[%s5 + $0x8] sm:$0xf]
        %v4146 = vld [vmem:[%s5 + $0xc] sm:$0xf]
        %v4147 = vld [vmem:[%s5 + $0x10] sm:$0xf]
        %v4148 = vld [vmem:[%s5 + $0x14] sm:$0xf]
        %v4149 = vld [vmem:[%s5 + $0x18] sm:$0xf]
        %v4150 = vld [vmem:[%s5 + $0x1c] sm:$0xf]
        %v4151 = vld [vmem:[%s5 + $0x20] sm:$0xf]
        %v4152 = vld [vmem:[%s6] sm:$0x1]
        %v4154 = vlaneseq
        %v4155 = vshrl.u32 %v4154, 7
        %v4156 = vsub.s32 0, %v4155
        %v4157 = vrot.slane %v4152, %v4156
        %v4168 = vunpack.c.l.b16 %v4143
        %v4169 = vunpack.c.l.b16 %v4144
        %v4170 = vunpack.c.l.b16 %v4145
        %v4171 = vunpack.c.l.b16 %v4146
        %v4172 = vunpack.c.l.b16 %v4147
        %v4173 = vunpack.c.l.b16 %v4148
        %v4174 = vunpack.c.l.b16 %v4149
        %v4175 = vunpack.c.l.b16 %v4150
        %v4176 = vunpack.c.l.b16 %v4151
        %v4177 = vpack.c.b16 %v4169, %v4168
        %v4178 = vpack.c.b16 %v4171, %v4170
        %v4179 = vpack.c.b16 %v4173, %v4172
        %v4180 = vpack.c.b16 %v4175, %v4174
        %v4181 = vpack.c.b16 %v4176, %v4176
        %vm4186 = vcmask 588800
        %v4188 = vsel %vm4186, %v4127, 0
        %v4191 = vsel %vm4186, %v4128, 0
        %v4194 = vsel %vm4186, %v4129, 0
        %v4197 = vsel %vm4186, %v4130, 0
        %v4200 = vsel %vm4186, %v4131, 0
        %v4203 = vsel %vm4186, %v4132, 0
        %v4206 = vsel %vm4186, %v4133, 0
        %v4209 = vsel %vm4186, %v4134, 0
        %v4212 = vsel %vm4186, %v4135, 0
        %v4215 = vsel %vm4186, %v4136, 0
        %v4218 = vsel %vm4186, %v4137, 0
        %v4221 = vsel %vm4186, %v4138, 0
        %v4224 = vsel %vm4186, %v4139, 0
        %v4227 = vsel %vm4186, %v4140, 0
        %v4230 = vsel %vm4186, %v4141, 0
        %v4233 = vsel %vm4186, %v4142, 0
        %vm4235 = vcmask 1043456
        %v4237 = vsel %vm4235, %v4181, 0
        %4239 = vmatprep.subr.bf16.mxu0 0
        %4240 = vmatpush1.bf16.msra.mxu0 0
        %4241 = vmatprep.subr.bf16.mxu0 0
        %4242 = vmatpush1.bf16.msra.mxu0 0
        %4243 = vmatprep.subr.bf16.mxu0 0
        %4244 = vmatpush1.bf16.msra.mxu0 0
        %4245 = vmatprep.subr.bf16.mxu0 0
        %4246 = vmatpush1.bf16.msra.mxu0 %v4237
        %4247 = vmatprep.subr.bf16.mxu0 0
        %4248 = vmatpush1.bf16.msra.mxu0 %v4180
        %4249 = vmatprep.subr.bf16.mxu0 0
        %4250 = vmatpush1.bf16.msra.mxu0 %v4179
        %4251 = vmatprep.subr.bf16.mxu0 0
        %4252 = vmatpush1.bf16.msra.mxu0 %v4178
        %4253 = vmatprep.subr.bf16.mxu0 0
        %4254 = vmatpush1.bf16.msra.mxu0 %v4177
        %4255 = vmatprep.subr.bf16.mxu0 0
        %4256 = vmatpush2.bf16.msra.mxu0 0
        %4257 = vmatprep.subr.bf16.mxu0 0
        %4258 = vmatpush2.bf16.msra.mxu0 0
        %4259 = vmatprep.subr.bf16.mxu0 0
        %4260 = vmatpush2.bf16.msra.mxu0 0
        %4261 = vmatprep.subr.bf16.mxu0 0
        %4262 = vmatpush2.bf16.msra.mxu0 0
        %4263 = vmatprep.subr.bf16.mxu0 0
        %4264 = vmatpush2.bf16.msra.mxu0 0
        %4265 = vmatprep.subr.bf16.mxu0 0
        %4266 = vmatpush2.bf16.msra.mxu0 0
        %4267 = vmatprep.subr.bf16.mxu0 0
        %4268 = vmatpush2.bf16.msra.mxu0 0
        %4269 = vmatprep.subr.bf16.mxu0 0
        %4270 = vmatpush2.bf16.msra.mxu0 0
        %4271 = vmatprep.mubr.bf16.mxu0 0
        %4272 = vmatmul.mubr.bf16.gmra.mxu0 %v4188
        %v4273 = vpop.f32.mrf.mxu0
        %v4274 = vadd.f32 %v4157, %v4273
        %v4275 = vpop.f32.mrf.mxu0
        %v4276 = vpop.f32.mrf.mxu0
        %v4277 = vadd.f32 %v4157, %v4276
        %v4278 = vpop.f32.mrf.mxu0
        %4279 = vmatprep.mubr.bf16.mxu0 0
        %4280 = vmatmul.mubr.bf16.gmra.mxu0 %v4191
        %v4281 = vpop.f32.mrf.mxu0
        %v4282 = vadd.f32 %v4157, %v4281
        %v4283 = vpop.f32.mrf.mxu0
        %v4284 = vpop.f32.mrf.mxu0
        %v4285 = vadd.f32 %v4157, %v4284
        %v4286 = vpop.f32.mrf.mxu0
        %4287 = vmatprep.mubr.bf16.mxu0 0
        %4288 = vmatmul.mubr.bf16.gmra.mxu0 %v4194
        %v4289 = vpop.f32.mrf.mxu0
        %v4290 = vadd.f32 %v4157, %v4289
        %v4291 = vpop.f32.mrf.mxu0
        %v4292 = vpop.f32.mrf.mxu0
        %v4293 = vadd.f32 %v4157, %v4292
        %v4294 = vpop.f32.mrf.mxu0
        %4295 = vmatprep.mubr.bf16.mxu0 0
        %4296 = vmatmul.mubr.bf16.gmra.mxu0 %v4197
        %v4297 = vpop.f32.mrf.mxu0
        %v4298 = vadd.f32 %v4157, %v4297
        %v4299 = vpop.f32.mrf.mxu0
        %v4300 = vpop.f32.mrf.mxu0
        %v4301 = vadd.f32 %v4157, %v4300
        %v4302 = vpop.f32.mrf.mxu0
        %4303 = vmatprep.mubr.bf16.mxu0 0
        %4304 = vmatmul.mubr.bf16.gmra.mxu0 %v4200
        %v4305 = vpop.f32.mrf.mxu0
        %v4306 = vadd.f32 %v4157, %v4305
        %v4307 = vpop.f32.mrf.mxu0
        %v4308 = vpop.f32.mrf.mxu0
        %v4309 = vadd.f32 %v4157, %v4308
        %v4310 = vpop.f32.mrf.mxu0
        %4311 = vmatprep.mubr.bf16.mxu0 0
        %4312 = vmatmul.mubr.bf16.gmra.mxu0 %v4203
        %v4313 = vpop.f32.mrf.mxu0
        %v4314 = vadd.f32 %v4157, %v4313
        %v4315 = vpop.f32.mrf.mxu0
        %v4316 = vpop.f32.mrf.mxu0
        %v4317 = vadd.f32 %v4157, %v4316
        %v4318 = vpop.f32.mrf.mxu0
        %4319 = vmatprep.mubr.bf16.mxu0 0
        %4320 = vmatmul.mubr.bf16.gmra.mxu0 %v4206
        %v4321 = vpop.f32.mrf.mxu0
        %v4322 = vadd.f32 %v4157, %v4321
        %v4323 = vpop.f32.mrf.mxu0
        %v4324 = vpop.f32.mrf.mxu0
        %v4325 = vadd.f32 %v4157, %v4324
        %v4326 = vpop.f32.mrf.mxu0
        %4327 = vmatprep.mubr.bf16.mxu0 0
        %4328 = vmatmul.mubr.bf16.gmra.mxu0 %v4209
        %v4329 = vpop.f32.mrf.mxu0
        %v4330 = vadd.f32 %v4157, %v4329
        %v4331 = vpop.f32.mrf.mxu0
        %v4332 = vpop.f32.mrf.mxu0
        %v4333 = vadd.f32 %v4157, %v4332
        %v4334 = vpop.f32.mrf.mxu0
        %4335 = vmatprep.mubr.bf16.mxu0 0
        %4336 = vmatmul.mubr.bf16.gmra.mxu0 %v4212
        %v4337 = vpop.f32.mrf.mxu0
        %v4338 = vadd.f32 %v4157, %v4337
        %v4339 = vpop.f32.mrf.mxu0
        %v4340 = vpop.f32.mrf.mxu0
        %v4341 = vadd.f32 %v4157, %v4340
        %v4342 = vpop.f32.mrf.mxu0
        %4343 = vmatprep.mubr.bf16.mxu0 0
        %4344 = vmatmul.mubr.bf16.gmra.mxu0 %v4215
        %v4345 = vpop.f32.mrf.mxu0
        %v4346 = vadd.f32 %v4157, %v4345
        %v4347 = vpop.f32.mrf.mxu0
        %v4348 = vpop.f32.mrf.mxu0
        %v4349 = vadd.f32 %v4157, %v4348
        %v4350 = vpop.f32.mrf.mxu0
        %4351 = vmatprep.mubr.bf16.mxu0 0
        %4352 = vmatmul.mubr.bf16.gmra.mxu0 %v4218
        %v4353 = vpop.f32.mrf.mxu0
        %v4354 = vadd.f32 %v4157, %v4353
        %v4355 = vpop.f32.mrf.mxu0
        %v4356 = vpop.f32.mrf.mxu0
        %v4357 = vadd.f32 %v4157, %v4356
        %v4358 = vpop.f32.mrf.mxu0
        %4359 = vmatprep.mubr.bf16.mxu0 0
        %4360 = vmatmul.mubr.bf16.gmra.mxu0 %v4221
        %v4361 = vpop.f32.mrf.mxu0
        %v4362 = vadd.f32 %v4157, %v4361
        %v4363 = vpop.f32.mrf.mxu0
        %v4364 = vpop.f32.mrf.mxu0
        %v4365 = vadd.f32 %v4157, %v4364
        %v4366 = vpop.f32.mrf.mxu0
        %4367 = vmatprep.mubr.bf16.mxu0 0
        %4368 = vmatmul.mubr.bf16.gmra.mxu0 %v4224
        %v4369 = vpop.f32.mrf.mxu0
        %v4370 = vadd.f32 %v4157, %v4369
        %v4371 = vpop.f32.mrf.mxu0
        %v4372 = vpop.f32.mrf.mxu0
        %v4373 = vadd.f32 %v4157, %v4372
        %v4374 = vpop.f32.mrf.mxu0
        %4375 = vmatprep.mubr.bf16.mxu0 0
        %4376 = vmatmul.mubr.bf16.gmra.mxu0 %v4227
        %v4377 = vpop.f32.mrf.mxu0
        %v4378 = vadd.f32 %v4157, %v4377
        %v4379 = vpop.f32.mrf.mxu0
        %v4380 = vpop.f32.mrf.mxu0
        %v4381 = vadd.f32 %v4157, %v4380
        %v4382 = vpop.f32.mrf.mxu0
        %4383 = vmatprep.mubr.bf16.mxu0 0
        %4384 = vmatmul.mubr.bf16.gmra.mxu0 %v4230
        %v4385 = vpop.f32.mrf.mxu0
        %v4386 = vadd.f32 %v4157, %v4385
        %v4387 = vpop.f32.mrf.mxu0
        %v4388 = vpop.f32.mrf.mxu0
        %v4389 = vadd.f32 %v4157, %v4388
        %v4390 = vpop.f32.mrf.mxu0
        %4391 = vmatprep.mubr.bf16.mxu0 0
        %4392 = vmatmul.mubr.bf16.gmra.mxu0 %v4233
        %v4393 = vpop.f32.mrf.mxu0
        %v4394 = vadd.f32 %v4157, %v4393
        %v4395 = vpop.f32.mrf.mxu0
        %v4396 = vpop.f32.mrf.mxu0
        %v4397 = vadd.f32 %v4157, %v4396
        %v4398 = vpop.f32.mrf.mxu0
        %4399 = vdwg.mxu0
        %v4400 = vmax.f32 %v4274, 0.0
        %v4401 = vmax.f32 %v4277, 0.0
        %v4402 = vmax.f32 %v4282, 0.0
        %v4403 = vmax.f32 %v4285, 0.0
        %v4404 = vmax.f32 %v4290, 0.0
        %v4405 = vmax.f32 %v4293, 0.0
        %v4406 = vmax.f32 %v4298, 0.0
        %v4407 = vmax.f32 %v4301, 0.0
        %v4408 = vmax.f32 %v4306, 0.0
        %v4409 = vmax.f32 %v4309, 0.0
        %v4410 = vmax.f32 %v4314, 0.0
        %v4411 = vmax.f32 %v4317, 0.0
        %v4412 = vmax.f32 %v4322, 0.0
        %v4413 = vmax.f32 %v4325, 0.0
        %v4414 = vmax.f32 %v4330, 0.0
        %v4415 = vmax.f32 %v4333, 0.0
        %v4416 = vmax.f32 %v4338, 0.0
        %v4417 = vmax.f32 %v4341, 0.0
        %v4418 = vmax.f32 %v4346, 0.0
        %v4419 = vmax.f32 %v4349, 0.0
        %v4420 = vmax.f32 %v4354, 0.0
        %v4421 = vmax.f32 %v4357, 0.0
        %v4422 = vmax.f32 %v4362, 0.0
        %v4423 = vmax.f32 %v4365, 0.0
        %v4424 = vmax.f32 %v4370, 0.0
        %v4425 = vmax.f32 %v4373, 0.0
        %v4426 = vmax.f32 %v4378, 0.0
        %v4427 = vmax.f32 %v4381, 0.0
        %v4428 = vmax.f32 %v4386, 0.0
        %v4429 = vmax.f32 %v4389, 0.0
        %v4430 = vmax.f32 %v4394, 0.0
        %v4431 = vmax.f32 %v4397, 0.0
        %v4432 = vcombine.low %v4400, %v4404
        %v4433 = vcombine.high %v4400, %v4404
        %v4435 = vunpack.c.l.s4 1983009808
        %v4436 = vunpack.c.0.s8 %v4435
        %v4437 = vlaneseq
        %v4438 = vshrl.u32 %v4437, 7
        %v4439 = vsub.s32 %v4436, %v4438
        %v4440 = vrot.slane %v4432, %v4439
        %v4442 = vunpack.c.l.s4 1983009808
        %v4443 = vunpack.c.0.s8 %v4442
        %v4444 = vlaneseq
        %v4445 = vshrl.u32 %v4444, 7
        %v4446 = vsub.s32 %v4443, %v4445
        %v4447 = vrot.slane %v4433, %v4446
        %v4448 = vcombine.low %v4402, %v4406
        %v4449 = vcombine.high %v4402, %v4406
        %v4451 = vunpack.c.l.s4 1983009808
        %v4452 = vunpack.c.0.s8 %v4451
        %v4453 = vlaneseq
        %v4454 = vshrl.u32 %v4453, 7
        %v4455 = vsub.s32 %v4452, %v4454
        %v4456 = vrot.slane %v4448, %v4455
        %v4458 = vunpack.c.l.s4 1983009808
        %v4459 = vunpack.c.0.s8 %v4458
        %v4460 = vlaneseq
        %v4461 = vshrl.u32 %v4460, 7
        %v4462 = vsub.s32 %v4459, %v4461
        %v4463 = vrot.slane %v4449, %v4462
        %v4464 = vcombine.low %v4408, %v4412
        %v4465 = vcombine.high %v4408, %v4412
        %v4467 = vunpack.c.l.s4 1983009808
        %v4468 = vunpack.c.0.s8 %v4467
        %v4469 = vlaneseq
        %v4470 = vshrl.u32 %v4469, 7
        %v4471 = vsub.s32 %v4468, %v4470
        %v4472 = vrot.slane %v4464, %v4471
        %v4474 = vunpack.c.l.s4 1983009808
        %v4475 = vunpack.c.0.s8 %v4474
        %v4476 = vlaneseq
        %v4477 = vshrl.u32 %v4476, 7
        %v4478 = vsub.s32 %v4475, %v4477
        %v4479 = vrot.slane %v4465, %v4478
        %v4480 = vcombine.low %v4410, %v4414
        %v4481 = vcombine.high %v4410, %v4414
        %v4483 = vunpack.c.l.s4 1983009808
        %v4484 = vunpack.c.0.s8 %v4483
        %v4485 = vlaneseq
        %v4486 = vshrl.u32 %v4485, 7
        %v4487 = vsub.s32 %v4484, %v4486
        %v4488 = vrot.slane %v4480, %v4487
        %v4490 = vunpack.c.l.s4 1983009808
        %v4491 = vunpack.c.0.s8 %v4490
        %v4492 = vlaneseq
        %v4493 = vshrl.u32 %v4492, 7
        %v4494 = vsub.s32 %v4491, %v4493
        %v4495 = vrot.slane %v4481, %v4494
        %v4496 = vcombine.low %v4440, %v4456
        %v4497 = vcombine.high %v4440, %v4456
        %v4499 = vunpack.c.l.s4 1934713408
        %v4500 = vunpack.c.0.s8 %v4499
        %v4501 = vlaneseq
        %v4502 = vshrl.u32 %v4501, 7
        %v4503 = vsub.s32 %v4500, %v4502
        %v4504 = vrot.slane %v4496, %v4503
        %v4506 = vunpack.c.l.s4 1934713408
        %v4507 = vunpack.c.0.s8 %v4506
        %v4508 = vlaneseq
        %v4509 = vshrl.u32 %v4508, 7
        %v4510 = vsub.s32 %v4507, %v4509
        %v4511 = vrot.slane %v4497, %v4510
        %v4512 = vcombine.low %v4447, %v4463
        %v4513 = vcombine.high %v4447, %v4463
        %v4515 = vunpack.c.l.s4 1934713408
        %v4516 = vunpack.c.0.s8 %v4515
        %v4517 = vlaneseq
        %v4518 = vshrl.u32 %v4517, 7
        %v4519 = vsub.s32 %v4516, %v4518
        %v4520 = vrot.slane %v4512, %v4519
        %v4522 = vunpack.c.l.s4 1934713408
        %v4523 = vunpack.c.0.s8 %v4522
        %v4524 = vlaneseq
        %v4525 = vshrl.u32 %v4524, 7
        %v4526 = vsub.s32 %v4523, %v4525
        %v4527 = vrot.slane %v4513, %v4526
        %v4528 = vcombine.low %v4472, %v4488
        %v4529 = vcombine.high %v4472, %v4488
        %v4531 = vunpack.c.l.s4 1934713408
        %v4532 = vunpack.c.0.s8 %v4531
        %v4533 = vlaneseq
        %v4534 = vshrl.u32 %v4533, 7
        %v4535 = vsub.s32 %v4532, %v4534
        %v4536 = vrot.slane %v4528, %v4535
        %v4538 = vunpack.c.l.s4 1934713408
        %v4539 = vunpack.c.0.s8 %v4538
        %v4540 = vlaneseq
        %v4541 = vshrl.u32 %v4540, 7
        %v4542 = vsub.s32 %v4539, %v4541
        %v4543 = vrot.slane %v4529, %v4542
        %v4544 = vcombine.low %v4479, %v4495
        %v4545 = vcombine.high %v4479, %v4495
        %v4547 = vunpack.c.l.s4 1934713408
        %v4548 = vunpack.c.0.s8 %v4547
        %v4549 = vlaneseq
        %v4550 = vshrl.u32 %v4549, 7
        %v4551 = vsub.s32 %v4548, %v4550
        %v4552 = vrot.slane %v4544, %v4551
        %v4554 = vunpack.c.l.s4 1934713408
        %v4555 = vunpack.c.0.s8 %v4554
        %v4556 = vlaneseq
        %v4557 = vshrl.u32 %v4556, 7
        %v4558 = vsub.s32 %v4555, %v4557
        %v4559 = vrot.slane %v4545, %v4558
        %v4560 = vcombine.low %v4504, %v4536
        %v4561 = vcombine.high %v4504, %v4536
        %v4562 = vcombine.low %v4511, %v4543
        %v4563 = vcombine.high %v4511, %v4543
        %v4564 = vcombine.low %v4520, %v4552
        %v4565 = vcombine.high %v4520, %v4552
        %v4566 = vcombine.low %v4527, %v4559
        %v4567 = vcombine.high %v4527, %v4559
        %v4568 = vcombine.low %v4416, %v4420
        %v4569 = vcombine.high %v4416, %v4420
        %v4571 = vunpack.c.l.s4 1983009808
        %v4572 = vunpack.c.0.s8 %v4571
        %v4573 = vlaneseq
        %v4574 = vshrl.u32 %v4573, 7
        %v4575 = vsub.s32 %v4572, %v4574
        %v4576 = vrot.slane %v4568, %v4575
        %v4578 = vunpack.c.l.s4 1983009808
        %v4579 = vunpack.c.0.s8 %v4578
        %v4580 = vlaneseq
        %v4581 = vshrl.u32 %v4580, 7
        %v4582 = vsub.s32 %v4579, %v4581
        %v4583 = vrot.slane %v4569, %v4582
        %v4584 = vcombine.low %v4418, %v4422
        %v4585 = vcombine.high %v4418, %v4422
        %v4587 = vunpack.c.l.s4 1983009808
        %v4588 = vunpack.c.0.s8 %v4587
        %v4589 = vlaneseq
        %v4590 = vshrl.u32 %v4589, 7
        %v4591 = vsub.s32 %v4588, %v4590
        %v4592 = vrot.slane %v4584, %v4591
        %v4594 = vunpack.c.l.s4 1983009808
        %v4595 = vunpack.c.0.s8 %v4594
        %v4596 = vlaneseq
        %v4597 = vshrl.u32 %v4596, 7
        %v4598 = vsub.s32 %v4595, %v4597
        %v4599 = vrot.slane %v4585, %v4598
        %v4600 = vcombine.low %v4424, %v4428
        %v4601 = vcombine.high %v4424, %v4428
        %v4603 = vunpack.c.l.s4 1983009808
        %v4604 = vunpack.c.0.s8 %v4603
        %v4605 = vlaneseq
        %v4606 = vshrl.u32 %v4605, 7
        %v4607 = vsub.s32 %v4604, %v4606
        %v4608 = vrot.slane %v4600, %v4607
        %v4610 = vunpack.c.l.s4 1983009808
        %v4611 = vunpack.c.0.s8 %v4610
        %v4612 = vlaneseq
        %v4613 = vshrl.u32 %v4612, 7
        %v4614 = vsub.s32 %v4611, %v4613
        %v4615 = vrot.slane %v4601, %v4614
        %v4616 = vcombine.low %v4426, %v4430
        %v4617 = vcombine.high %v4426, %v4430
        %v4619 = vunpack.c.l.s4 1983009808
        %v4620 = vunpack.c.0.s8 %v4619
        %v4621 = vlaneseq
        %v4622 = vshrl.u32 %v4621, 7
        %v4623 = vsub.s32 %v4620, %v4622
        %v4624 = vrot.slane %v4616, %v4623
        %v4626 = vunpack.c.l.s4 1983009808
        %v4627 = vunpack.c.0.s8 %v4626
        %v4628 = vlaneseq
        %v4629 = vshrl.u32 %v4628, 7
        %v4630 = vsub.s32 %v4627, %v4629
        %v4631 = vrot.slane %v4617, %v4630
        %v4632 = vcombine.low %v4576, %v4592
        %v4633 = vcombine.high %v4576, %v4592
        %v4635 = vunpack.c.l.s4 1934713408
        %v4636 = vunpack.c.0.s8 %v4635
        %v4637 = vlaneseq
        %v4638 = vshrl.u32 %v4637, 7
        %v4639 = vsub.s32 %v4636, %v4638
        %v4640 = vrot.slane %v4632, %v4639
        %v4642 = vunpack.c.l.s4 1934713408
        %v4643 = vunpack.c.0.s8 %v4642
        %v4644 = vlaneseq
        %v4645 = vshrl.u32 %v4644, 7
        %v4646 = vsub.s32 %v4643, %v4645
        %v4647 = vrot.slane %v4633, %v4646
        %v4648 = vcombine.low %v4583, %v4599
        %v4649 = vcombine.high %v4583, %v4599
        %v4651 = vunpack.c.l.s4 1934713408
        %v4652 = vunpack.c.0.s8 %v4651
        %v4653 = vlaneseq
        %v4654 = vshrl.u32 %v4653, 7
        %v4655 = vsub.s32 %v4652, %v4654
        %v4656 = vrot.slane %v4648, %v4655
        %v4658 = vunpack.c.l.s4 1934713408
        %v4659 = vunpack.c.0.s8 %v4658
        %v4660 = vlaneseq
        %v4661 = vshrl.u32 %v4660, 7
        %v4662 = vsub.s32 %v4659, %v4661
        %v4663 = vrot.slane %v4649, %v4662
        %v4664 = vcombine.low %v4608, %v4624
        %v4665 = vcombine.high %v4608, %v4624
        %v4667 = vunpack.c.l.s4 1934713408
        %v4668 = vunpack.c.0.s8 %v4667
        %v4669 = vlaneseq
        %v4670 = vshrl.u32 %v4669, 7
        %v4671 = vsub.s32 %v4668, %v4670
        %v4672 = vrot.slane %v4664, %v4671
        %v4674 = vunpack.c.l.s4 1934713408
        %v4675 = vunpack.c.0.s8 %v4674
        %v4676 = vlaneseq
        %v4677 = vshrl.u32 %v4676, 7
        %v4678 = vsub.s32 %v4675, %v4677
        %v4679 = vrot.slane %v4665, %v4678
        %v4680 = vcombine.low %v4615, %v4631
        %v4681 = vcombine.high %v4615, %v4631
        %v4683 = vunpack.c.l.s4 1934713408
        %v4684 = vunpack.c.0.s8 %v4683
        %v4685 = vlaneseq
        %v4686 = vshrl.u32 %v4685, 7
        %v4687 = vsub.s32 %v4684, %v4686
        %v4688 = vrot.slane %v4680, %v4687
        %v4690 = vunpack.c.l.s4 1934713408
        %v4691 = vunpack.c.0.s8 %v4690
        %v4692 = vlaneseq
        %v4693 = vshrl.u32 %v4692, 7
        %v4694 = vsub.s32 %v4691, %v4693
        %v4695 = vrot.slane %v4681, %v4694
        %v4696 = vcombine.low %v4640, %v4672
        %v4697 = vcombine.high %v4640, %v4672
        %v4698 = vcombine.low %v4647, %v4679
        %v4699 = vcombine.high %v4647, %v4679
        %v4700 = vcombine.low %v4656, %v4688
        %v4701 = vcombine.high %v4656, %v4688
        %v4702 = vcombine.low %v4663, %v4695
        %v4703 = vcombine.high %v4663, %v4695
        %v4704 = vcombine.low %v4401, %v4405
        %v4705 = vcombine.high %v4401, %v4405
        %v4707 = vunpack.c.l.s4 1983009808
        %v4708 = vunpack.c.0.s8 %v4707
        %v4709 = vlaneseq
        %v4710 = vshrl.u32 %v4709, 7
        %v4711 = vsub.s32 %v4708, %v4710
        %v4712 = vrot.slane %v4704, %v4711
        %v4714 = vunpack.c.l.s4 1983009808
        %v4715 = vunpack.c.0.s8 %v4714
        %v4716 = vlaneseq
        %v4717 = vshrl.u32 %v4716, 7
        %v4718 = vsub.s32 %v4715, %v4717
        %v4719 = vrot.slane %v4705, %v4718
        %v4720 = vcombine.low %v4403, %v4407
        %v4721 = vcombine.high %v4403, %v4407
        %v4723 = vunpack.c.l.s4 1983009808
        %v4724 = vunpack.c.0.s8 %v4723
        %v4725 = vlaneseq
        %v4726 = vshrl.u32 %v4725, 7
        %v4727 = vsub.s32 %v4724, %v4726
        %v4728 = vrot.slane %v4720, %v4727
        %v4730 = vunpack.c.l.s4 1983009808
        %v4731 = vunpack.c.0.s8 %v4730
        %v4732 = vlaneseq
        %v4733 = vshrl.u32 %v4732, 7
        %v4734 = vsub.s32 %v4731, %v4733
        %v4735 = vrot.slane %v4721, %v4734
        %v4736 = vcombine.low %v4409, %v4413
        %v4737 = vcombine.high %v4409, %v4413
        %v4739 = vunpack.c.l.s4 1983009808
        %v4740 = vunpack.c.0.s8 %v4739
        %v4741 = vlaneseq
        %v4742 = vshrl.u32 %v4741, 7
        %v4743 = vsub.s32 %v4740, %v4742
        %v4744 = vrot.slane %v4736, %v4743
        %v4746 = vunpack.c.l.s4 1983009808
        %v4747 = vunpack.c.0.s8 %v4746
        %v4748 = vlaneseq
        %v4749 = vshrl.u32 %v4748, 7
        %v4750 = vsub.s32 %v4747, %v4749
        %v4751 = vrot.slane %v4737, %v4750
        %v4752 = vcombine.low %v4411, %v4415
        %v4753 = vcombine.high %v4411, %v4415
        %v4755 = vunpack.c.l.s4 1983009808
        %v4756 = vunpack.c.0.s8 %v4755
        %v4757 = vlaneseq
        %v4758 = vshrl.u32 %v4757, 7
        %v4759 = vsub.s32 %v4756, %v4758
        %v4760 = vrot.slane %v4752, %v4759
        %v4762 = vunpack.c.l.s4 1983009808
        %v4763 = vunpack.c.0.s8 %v4762
        %v4764 = vlaneseq
        %v4765 = vshrl.u32 %v4764, 7
        %v4766 = vsub.s32 %v4763, %v4765
        %v4767 = vrot.slane %v4753, %v4766
        %v4768 = vcombine.low %v4712, %v4728
        %v4769 = vcombine.high %v4712, %v4728
        %v4771 = vunpack.c.l.s4 1934713408
        %v4772 = vunpack.c.0.s8 %v4771
        %v4773 = vlaneseq
        %v4774 = vshrl.u32 %v4773, 7
        %v4775 = vsub.s32 %v4772, %v4774
        %v4776 = vrot.slane %v4768, %v4775
        %v4778 = vunpack.c.l.s4 1934713408
        %v4779 = vunpack.c.0.s8 %v4778
        %v4780 = vlaneseq
        %v4781 = vshrl.u32 %v4780, 7
        %v4782 = vsub.s32 %v4779, %v4781
        %v4783 = vrot.slane %v4769, %v4782
        %v4784 = vcombine.low %v4719, %v4735
        %v4785 = vcombine.high %v4719, %v4735
        %v4787 = vunpack.c.l.s4 1934713408
        %v4788 = vunpack.c.0.s8 %v4787
        %v4789 = vlaneseq
        %v4790 = vshrl.u32 %v4789, 7
        %v4791 = vsub.s32 %v4788, %v4790
        %v4792 = vrot.slane %v4784, %v4791
        %v4794 = vunpack.c.l.s4 1934713408
        %v4795 = vunpack.c.0.s8 %v4794
        %v4796 = vlaneseq
        %v4797 = vshrl.u32 %v4796, 7
        %v4798 = vsub.s32 %v4795, %v4797
        %v4799 = vrot.slane %v4785, %v4798
        %v4800 = vcombine.low %v4744, %v4760
        %v4801 = vcombine.high %v4744, %v4760
        %v4803 = vunpack.c.l.s4 1934713408
        %v4804 = vunpack.c.0.s8 %v4803
        %v4805 = vlaneseq
        %v4806 = vshrl.u32 %v4805, 7
        %v4807 = vsub.s32 %v4804, %v4806
        %v4808 = vrot.slane %v4800, %v4807
        %v4810 = vunpack.c.l.s4 1934713408
        %v4811 = vunpack.c.0.s8 %v4810
        %v4812 = vlaneseq
        %v4813 = vshrl.u32 %v4812, 7
        %v4814 = vsub.s32 %v4811, %v4813
        %v4815 = vrot.slane %v4801, %v4814
        %v4816 = vcombine.low %v4751, %v4767
        %v4817 = vcombine.high %v4751, %v4767
        %v4819 = vunpack.c.l.s4 1934713408
        %v4820 = vunpack.c.0.s8 %v4819
        %v4821 = vlaneseq
        %v4822 = vshrl.u32 %v4821, 7
        %v4823 = vsub.s32 %v4820, %v4822
        %v4824 = vrot.slane %v4816, %v4823
        %v4826 = vunpack.c.l.s4 1934713408
        %v4827 = vunpack.c.0.s8 %v4826
        %v4828 = vlaneseq
        %v4829 = vshrl.u32 %v4828, 7
        %v4830 = vsub.s32 %v4827, %v4829
        %v4831 = vrot.slane %v4817, %v4830
        %v4832 = vcombine.low %v4776, %v4808
        %v4833 = vcombine.high %v4776, %v4808
        %v4834 = vcombine.low %v4783, %v4815
        %v4835 = vcombine.high %v4783, %v4815
        %v4836 = vcombine.low %v4792, %v4824
        %v4837 = vcombine.high %v4792, %v4824
        %v4838 = vcombine.low %v4799, %v4831
        %v4839 = vcombine.high %v4799, %v4831
        %v4840 = vcombine.low %v4417, %v4421
        %v4841 = vcombine.high %v4417, %v4421
        %v4843 = vunpack.c.l.s4 1983009808
        %v4844 = vunpack.c.0.s8 %v4843
        %v4845 = vlaneseq
        %v4846 = vshrl.u32 %v4845, 7
        %v4847 = vsub.s32 %v4844, %v4846
        %v4848 = vrot.slane %v4840, %v4847
        %v4850 = vunpack.c.l.s4 1983009808
        %v4851 = vunpack.c.0.s8 %v4850
        %v4852 = vlaneseq
        %v4853 = vshrl.u32 %v4852, 7
        %v4854 = vsub.s32 %v4851, %v4853
        %v4855 = vrot.slane %v4841, %v4854
        %v4856 = vcombine.low %v4419, %v4423
        %v4857 = vcombine.high %v4419, %v4423
        %v4859 = vunpack.c.l.s4 1983009808
        %v4860 = vunpack.c.0.s8 %v4859
        %v4861 = vlaneseq
        %v4862 = vshrl.u32 %v4861, 7
        %v4863 = vsub.s32 %v4860, %v4862
        %v4864 = vrot.slane %v4856, %v4863
        %v4866 = vunpack.c.l.s4 1983009808
        %v4867 = vunpack.c.0.s8 %v4866
        %v4868 = vlaneseq
        %v4869 = vshrl.u32 %v4868, 7
        %v4870 = vsub.s32 %v4867, %v4869
        %v4871 = vrot.slane %v4857, %v4870
        %v4872 = vcombine.low %v4425, %v4429
        %v4873 = vcombine.high %v4425, %v4429
        %v4875 = vunpack.c.l.s4 1983009808
        %v4876 = vunpack.c.0.s8 %v4875
        %v4877 = vlaneseq
        %v4878 = vshrl.u32 %v4877, 7
        %v4879 = vsub.s32 %v4876, %v4878
        %v4880 = vrot.slane %v4872, %v4879
        %v4882 = vunpack.c.l.s4 1983009808
        %v4883 = vunpack.c.0.s8 %v4882
        %v4884 = vlaneseq
        %v4885 = vshrl.u32 %v4884, 7
        %v4886 = vsub.s32 %v4883, %v4885
        %v4887 = vrot.slane %v4873, %v4886
        %v4888 = vcombine.low %v4427, %v4431
        %v4889 = vcombine.high %v4427, %v4431
        %v4891 = vunpack.c.l.s4 1983009808
        %v4892 = vunpack.c.0.s8 %v4891
        %v4893 = vlaneseq
        %v4894 = vshrl.u32 %v4893, 7
        %v4895 = vsub.s32 %v4892, %v4894
        %v4896 = vrot.slane %v4888, %v4895
        %v4898 = vunpack.c.l.s4 1983009808
        %v4899 = vunpack.c.0.s8 %v4898
        %v4900 = vlaneseq
        %v4901 = vshrl.u32 %v4900, 7
        %v4902 = vsub.s32 %v4899, %v4901
        %v4903 = vrot.slane %v4889, %v4902
        %v4904 = vcombine.low %v4848, %v4864
        %v4905 = vcombine.high %v4848, %v4864
        %v4907 = vunpack.c.l.s4 1934713408
        %v4908 = vunpack.c.0.s8 %v4907
        %v4909 = vlaneseq
        %v4910 = vshrl.u32 %v4909, 7
        %v4911 = vsub.s32 %v4908, %v4910
        %v4912 = vrot.slane %v4904, %v4911
        %v4914 = vunpack.c.l.s4 1934713408
        %v4915 = vunpack.c.0.s8 %v4914
        %v4916 = vlaneseq
        %v4917 = vshrl.u32 %v4916, 7
        %v4918 = vsub.s32 %v4915, %v4917
        %v4919 = vrot.slane %v4905, %v4918
        %v4920 = vcombine.low %v4855, %v4871
        %v4921 = vcombine.high %v4855, %v4871
        %v4923 = vunpack.c.l.s4 1934713408
        %v4924 = vunpack.c.0.s8 %v4923
        %v4925 = vlaneseq
        %v4926 = vshrl.u32 %v4925, 7
        %v4927 = vsub.s32 %v4924, %v4926
        %v4928 = vrot.slane %v4920, %v4927
        %v4930 = vunpack.c.l.s4 1934713408
        %v4931 = vunpack.c.0.s8 %v4930
        %v4932 = vlaneseq
        %v4933 = vshrl.u32 %v4932, 7
        %v4934 = vsub.s32 %v4931, %v4933
        %v4935 = vrot.slane %v4921, %v4934
        %v4936 = vcombine.low %v4880, %v4896
        %v4937 = vcombine.high %v4880, %v4896
        %v4939 = vunpack.c.l.s4 1934713408
        %v4940 = vunpack.c.0.s8 %v4939
        %v4941 = vlaneseq
        %v4942 = vshrl.u32 %v4941, 7
        %v4943 = vsub.s32 %v4940, %v4942
        %v4944 = vrot.slane %v4936, %v4943
        %v4946 = vunpack.c.l.s4 1934713408
        %v4947 = vunpack.c.0.s8 %v4946
        %v4948 = vlaneseq
        %v4949 = vshrl.u32 %v4948, 7
        %v4950 = vsub.s32 %v4947, %v4949
        %v4951 = vrot.slane %v4937, %v4950
        %v4952 = vcombine.low %v4887, %v4903
        %v4953 = vcombine.high %v4887, %v4903
        %v4955 = vunpack.c.l.s4 1934713408
        %v4956 = vunpack.c.0.s8 %v4955
        %v4957 = vlaneseq
        %v4958 = vshrl.u32 %v4957, 7
        %v4959 = vsub.s32 %v4956, %v4958
        %v4960 = vrot.slane %v4952, %v4959
        %v4962 = vunpack.c.l.s4 1934713408
        %v4963 = vunpack.c.0.s8 %v4962
        %v4964 = vlaneseq
        %v4965 = vshrl.u32 %v4964, 7
        %v4966 = vsub.s32 %v4963, %v4965
        %v4967 = vrot.slane %v4953, %v4966
        %v4968 = vcombine.low %v4912, %v4944
        %v4969 = vcombine.high %v4912, %v4944
        %v4970 = vcombine.low %v4919, %v4951
        %v4971 = vcombine.high %v4919, %v4951
        %v4972 = vcombine.low %v4928, %v4960
        %v4973 = vcombine.high %v4928, %v4960
        %v4974 = vcombine.low %v4935, %v4967
        %v4975 = vcombine.high %v4935, %v4967
        %4978 = vrot.lane.b32.xlu0 %v4561, 8
        %v4979 = vpop.permute.xlu0 %4978
        %4980 = vrot.lane.b32.xlu0 %v4697, 8
        %v4981 = vpop.permute.xlu0 %4980
        %4986 = vrot.lane.b32.xlu0 %v4562, 16
        %v4987 = vpop.permute.xlu0 %4986
        %4988 = vrot.lane.b32.xlu0 %v4698, 16
        %v4989 = vpop.permute.xlu0 %4988
        %4994 = vrot.lane.b32.xlu0 %v4563, 24
        %v4995 = vpop.permute.xlu0 %4994
        %4996 = vrot.lane.b32.xlu0 %v4699, 24
        %v4997 = vpop.permute.xlu0 %4996
        %5002 = vrot.lane.b32.xlu0 %v4564, 32
        %v5003 = vpop.permute.xlu0 %5002
        %5004 = vrot.lane.b32.xlu0 %v4700, 32
        %v5005 = vpop.permute.xlu0 %5004
        %5010 = vrot.lane.b32.xlu0 %v4565, 40
        %v5011 = vpop.permute.xlu0 %5010
        %5012 = vrot.lane.b32.xlu0 %v4701, 40
        %v5013 = vpop.permute.xlu0 %5012
        %5018 = vrot.lane.b32.xlu0 %v4566, 48
        %v5019 = vpop.permute.xlu0 %5018
        %5020 = vrot.lane.b32.xlu0 %v4702, 48
        %v5021 = vpop.permute.xlu0 %5020
        %5026 = vrot.lane.b32.xlu0 %v4567, 56
        %v5027 = vpop.permute.xlu0 %5026
        %5028 = vrot.lane.b32.xlu0 %v4703, 56
        %v5029 = vpop.permute.xlu0 %5028
        %5034 = vrot.lane.b32.xlu0 %v4832, 64
        %v5035 = vpop.permute.xlu0 %5034
        %5036 = vrot.lane.b32.xlu0 %v4968, 64
        %v5037 = vpop.permute.xlu0 %5036
        %5042 = vrot.lane.b32.xlu0 %v4833, 72
        %v5043 = vpop.permute.xlu0 %5042
        %5044 = vrot.lane.b32.xlu0 %v4969, 72
        %v5045 = vpop.permute.xlu0 %5044
        %5050 = vrot.lane.b32.xlu0 %v4834, 80
        %v5051 = vpop.permute.xlu0 %5050
        %5052 = vrot.lane.b32.xlu0 %v4970, 80
        %v5053 = vpop.permute.xlu0 %5052
        %5058 = vrot.lane.b32.xlu0 %v4835, 88
        %v5059 = vpop.permute.xlu0 %5058
        %5060 = vrot.lane.b32.xlu0 %v4971, 88
        %v5061 = vpop.permute.xlu0 %5060
        %5066 = vrot.lane.b32.xlu0 %v4836, 96
        %v5067 = vpop.permute.xlu0 %5066
        %5068 = vrot.lane.b32.xlu0 %v4972, 96
        %v5069 = vpop.permute.xlu0 %5068
        %5074 = vrot.lane.b32.xlu0 %v4837, 104
        %v5075 = vpop.permute.xlu0 %5074
        %5076 = vrot.lane.b32.xlu0 %v4973, 104
        %v5077 = vpop.permute.xlu0 %5076
        %5082 = vrot.lane.b32.xlu0 %v4838, 112
        %v5083 = vpop.permute.xlu0 %5082
        %5084 = vrot.lane.b32.xlu0 %v4974, 112
        %v5085 = vpop.permute.xlu0 %5084
        %5090 = vrot.lane.b32.xlu0 %v4839, 120
        %v5091 = vpop.permute.xlu0 %5090
        %5092 = vrot.lane.b32.xlu0 %v4975, 120
        %v5093 = vpop.permute.xlu0 %5092
        %v5096 = vsel %vm2476, %v4560, %v4979
        %v5097 = vsel %vm2476, %v4696, %v4981
        %v5098 = vsel %vm3897, %v5096, %v4987
        %v5099 = vsel %vm3897, %v5097, %v4989
        %v5100 = vsel %vm2156, %v5098, %v4995
        %v5101 = vsel %vm2156, %v5099, %v4997
        %v5102 = vsel %vm3962, %v5100, %v5003
        %v5103 = vsel %vm3962, %v5101, %v5005
        %v5104 = vsel %vm3995, %v5102, %v5011
        %v5105 = vsel %vm3995, %v5103, %v5013
        %v5106 = vsel %vm4028, %v5104, %v5019
        %v5107 = vsel %vm4028, %v5105, %v5021
        %v5108 = vsel %vm4061, %v5106, %v5027
        %v5109 = vsel %vm4061, %v5107, %v5029
        %v5110 = vsel %vm4094, %v5108, %v5035
        %v5111 = vsel %vm4094, %v5109, %v5037
        %v5112 = vsel %vm4186, %v5110, %v5043
        %v5113 = vsel %vm4186, %v5111, %v5045
        %vm5114 = vcmask 654336
        %v5115 = vsel %vm5114, %v5112, %v5051
        %v5116 = vsel %vm5114, %v5113, %v5053
        %vm5117 = vcmask 719872
        %v5118 = vsel %vm5117, %v5115, %v5059
        %v5119 = vsel %vm5117, %v5116, %v5061
        %vm5120 = vcmask 785408
        %v5121 = vsel %vm5120, %v5118, %v5067
        %v5122 = vsel %vm5120, %v5119, %v5069
        %vm5123 = vcmask 850944
        %v5124 = vsel %vm5123, %v5121, %v5075
        %v5125 = vsel %vm5123, %v5122, %v5077
        %vm5126 = vcmask 916480
        %v5127 = vsel %vm5126, %v5124, %v5083
        %v5128 = vsel %vm5126, %v5125, %v5085
        %vm5129 = vcmask 982016
        %v5130 = vsel %vm5129, %v5127, %v5091
        %v5131 = vsel %vm5129, %v5128, %v5093
        %5132 = vst [vmem:[%s410] sm:$0xff] %v5130
        %5133 = vst [vmem:[%s410 + $0x8] sm:$0xff] %v5131
        %v5134 = vsel %vm2476, %v4400, -inf
        %v5135 = vsel %vm2476, %v4402, -inf
        %v5136 = vmax.f32 %v5134, %v5135
        %v5137 = vsel %vm2476, %v4401, -inf
        %v5138 = vsel %vm2476, %v4403, -inf
        %v5139 = vmax.f32 %v5137, %v5138
        %v5140 = vsel %vm2476, %v4404, -inf
        %v5141 = vsel %vm2476, %v4406, -inf
        %v5142 = vmax.f32 %v5140, %v5141
        %v5143 = vsel %vm2476, %v4405, -inf
        %v5144 = vsel %vm2476, %v4407, -inf
        %v5145 = vmax.f32 %v5143, %v5144
        %v5146 = vsel %vm2476, %v4408, -inf
        %v5147 = vsel %vm2476, %v4410, -inf
        %v5148 = vmax.f32 %v5146, %v5147
        %v5149 = vsel %vm2476, %v4409, -inf
        %v5150 = vsel %vm2476, %v4411, -inf
        %v5151 = vmax.f32 %v5149, %v5150
        %v5152 = vsel %vm2476, %v4412, -inf
        %v5153 = vsel %vm2476, %v4414, -inf
        %v5154 = vmax.f32 %v5152, %v5153
        %v5155 = vsel %vm2476, %v4413, -inf
        %v5156 = vsel %vm2476, %v4415, -inf
        %v5157 = vmax.f32 %v5155, %v5156
        %v5158 = vsel %vm2476, %v4416, -inf
        %v5159 = vsel %vm2476, %v4418, -inf
        %v5160 = vmax.f32 %v5158, %v5159
        %v5161 = vsel %vm2476, %v4417, -inf
        %v5162 = vsel %vm2476, %v4419, -inf
        %v5163 = vmax.f32 %v5161, %v5162
        %v5164 = vsel %vm2476, %v4420, -inf
        %v5165 = vsel %vm2476, %v4422, -inf
        %v5166 = vmax.f32 %v5164, %v5165
        %v5167 = vsel %vm2476, %v4421, -inf
        %v5168 = vsel %vm2476, %v4423, -inf
        %v5169 = vmax.f32 %v5167, %v5168
        %v5170 = vsel %vm2476, %v4424, -inf
        %v5171 = vsel %vm2476, %v4426, -inf
        %v5172 = vmax.f32 %v5170, %v5171
        %v5173 = vsel %vm2476, %v4425, -inf
        %v5174 = vsel %vm2476, %v4427, -inf
        %v5175 = vmax.f32 %v5173, %v5174
        %v5176 = vsel %vm2476, %v4428, -inf
        %v5177 = vsel %vm2476, %v4430, -inf
        %v5178 = vmax.f32 %v5176, %v5177
        %v5179 = vsel %vm2476, %v4429, -inf
        %v5180 = vsel %vm2476, %v4431, -inf
        %v5181 = vmax.f32 %v5179, %v5180
        %5182 = vst.msk [vmem:[#allocation3] sm:$0xff] %vm2476, %v5136
        %5183 = vst.msk [vmem:[#allocation3 + $0x8] sm:$0xff] %vm2476, %v5139
        %5184 = vst.msk [vmem:[#allocation3 + $0x10] sm:$0xff] %vm2476, %v5142
        %5185 = vst.msk [vmem:[#allocation3 + $0x18] sm:$0xff] %vm2476, %v5145
        %5186 = vst.msk [vmem:[#allocation3 + $0x20] sm:$0xff] %vm2476, %v5148
        %5187 = vst.msk [vmem:[#allocation3 + $0x28] sm:$0xff] %vm2476, %v5151
        %5188 = vst.msk [vmem:[#allocation3 + $0x30] sm:$0xff] %vm2476, %v5154
        %5189 = vst.msk [vmem:[#allocation3 + $0x38] sm:$0xff] %vm2476, %v5157
        %5190 = vst.msk [vmem:[#allocation3 + $0x40] sm:$0xff] %vm2476, %v5160
        %5191 = vst.msk [vmem:[#allocation3 + $0x48] sm:$0xff] %vm2476, %v5163
        %5192 = vst.msk [vmem:[#allocation3 + $0x50] sm:$0xff] %vm2476, %v5166
        %5193 = vst.msk [vmem:[#allocation3 + $0x58] sm:$0xff] %vm2476, %v5169
        %5194 = vst.msk [vmem:[#allocation3 + $0x60] sm:$0xff] %vm2476, %v5172
        %5195 = vst.msk [vmem:[#allocation3 + $0x68] sm:$0xff] %vm2476, %v5175
        %5196 = vst.msk [vmem:[#allocation3 + $0x70] sm:$0xff] %vm2476, %v5178
        %5197 = vst.msk [vmem:[#allocation3 + $0x78] sm:$0xff] %vm2476, %v5181
        %v5198 = vld [vmem:[#allocation3] ss:$2 sm:$0xff]
        %s5199 = scalar_lea.vmem [#allocation3], 16
        %v5200 = vld [vmem:[%s5199] ss:$2 sm:$0xff]
        %s5201 = scalar_lea.vmem [#allocation3], 32
        %v5202 = vld [vmem:[%s5201] ss:$2 sm:$0xff]
        %s5203 = scalar_lea.vmem [#allocation3], 48
        %v5204 = vld [vmem:[%s5203] ss:$2 sm:$0xff]
        %s5205 = scalar_lea.vmem [#allocation3], 64
        %v5206 = vld [vmem:[%s5205] ss:$2 sm:$0xff]
        %s5207 = scalar_lea.vmem [#allocation3], 80
        %v5208 = vld [vmem:[%s5207] ss:$2 sm:$0xff]
        %s5209 = scalar_lea.vmem [#allocation3], 96
        %v5210 = vld [vmem:[%s5209] ss:$2 sm:$0xff]
        %s5211 = scalar_lea.vmem [#allocation3], 112
        %v5212 = vld [vmem:[%s5211] ss:$2 sm:$0xff]
        %s5213 = scalar_lea.vmem [#allocation3], 1
        %v5214 = vld [vmem:[%s5213] ss:$2 sm:$0xff]
        %s5215 = scalar_lea.vmem [#allocation3], 17
        %v5216 = vld [vmem:[%s5215] ss:$2 sm:$0xff]
        %s5217 = scalar_lea.vmem [#allocation3], 33
        %v5218 = vld [vmem:[%s5217] ss:$2 sm:$0xff]
        %s5219 = scalar_lea.vmem [#allocation3], 49
        %v5220 = vld [vmem:[%s5219] ss:$2 sm:$0xff]
        %s5221 = scalar_lea.vmem [#allocation3], 65
        %v5222 = vld [vmem:[%s5221] ss:$2 sm:$0xff]
        %s5223 = scalar_lea.vmem [#allocation3], 81
        %v5224 = vld [vmem:[%s5223] ss:$2 sm:$0xff]
        %s5225 = scalar_lea.vmem [#allocation3], 97
        %v5226 = vld [vmem:[%s5225] ss:$2 sm:$0xff]
        %s5227 = scalar_lea.vmem [#allocation3], 113
        %v5228 = vld [vmem:[%s5227] ss:$2 sm:$0xff]
        %v5229 = vmax.f32 %v5198, %v5214
        %v5230 = vmax.f32 %v5200, %v5216
        %v5231 = vmax.f32 %v5202, %v5218
        %v5232 = vmax.f32 %v5204, %v5220
        %v5233 = vmax.f32 %v5206, %v5222
        %v5234 = vmax.f32 %v5208, %v5224
        %v5235 = vmax.f32 %v5210, %v5226
        %v5236 = vmax.f32 %v5212, %v5228
        %5237 = vst.msk [vmem:[#allocation2] sm:$0xff] %vm2476, 0.0
        %5238 = vst.msk [vmem:[#allocation2 + $0x8] sm:$0x3] %vm2479, 0.0
        %s5239 = scalar_lea.vmem [#allocation2], 216
        %5240 = vst.msk [vmem:[%s5239] sm:$0xff] %vm2476, 0.0
        %5241 = vst.msk [vmem:[%s5239 + $0x8] sm:$0x3] %vm2479, 0.0
        %5242 = vst.msk [vmem:[#allocation2] sm:$0x1] %vm2484, 0.0
        %5243 = vst.msk [vmem:[#allocation2 + $0x18] sm:$0x1] %vm2484, 0.0
        %5244 = vst.msk [vmem:[#allocation2 + $0x30] sm:$0x1] %vm2484, 0.0
        %5245 = vst.msk [vmem:[#allocation2 + $0x48] sm:$0x1] %vm2484, 0.0
        %5246 = vst.msk [vmem:[#allocation2 + $0x60] sm:$0x1] %vm2484, 0.0
        %5247 = vst.msk [vmem:[#allocation2 + $0x78] sm:$0x1] %vm2484, 0.0
        %5248 = vst.msk [vmem:[#allocation2 + $0x90] sm:$0x1] %vm2484, 0.0
        %5249 = vst.msk [vmem:[#allocation2 + $0xa8] sm:$0x1] %vm2484, 0.0
        %5250 = vst.msk [vmem:[#allocation2 + $0xc0] sm:$0x1] %vm2484, 0.0
        %5251 = vst.msk [vmem:[#allocation2 + $0xd8] sm:$0x1] %vm2484, 0.0
        %5252 = vst.msk [vmem:[#allocation2 + $0x9] sm:$0x1] %vm2484, 0.0
        %5253 = vst.msk [vmem:[#allocation2 + $0x21] sm:$0x1] %vm2484, 0.0
        %5254 = vst.msk [vmem:[#allocation2 + $0x39] sm:$0x1] %vm2484, 0.0
        %5255 = vst.msk [vmem:[#allocation2 + $0x51] sm:$0x1] %vm2484, 0.0
        %5256 = vst.msk [vmem:[#allocation2 + $0x69] sm:$0x1] %vm2484, 0.0
        %5257 = vst.msk [vmem:[#allocation2 + $0x81] sm:$0x1] %vm2484, 0.0
        %5258 = vst.msk [vmem:[#allocation2 + $0x99] sm:$0x1] %vm2484, 0.0
        %5259 = vst.msk [vmem:[#allocation2 + $0xb1] sm:$0x1] %vm2484, 0.0
        %5260 = vst.msk [vmem:[#allocation2 + $0xc9] sm:$0x1] %vm2484, 0.0
        %5261 = vst.msk [vmem:[#allocation2 + $0xe1] sm:$0x1] %vm2484, 0.0
        %5262 = vst.msk [vmem:[%s580 + $0x1] sm:$0xff] %vm2476, %v5229
        %5263 = vst.msk [vmem:[%s580 + $0x19] sm:$0xff] %vm2476, %v5230
        %5264 = vst.msk [vmem:[%s580 + $0x31] sm:$0xff] %vm2476, %v5231
        %5265 = vst.msk [vmem:[%s580 + $0x49] sm:$0xff] %vm2476, %v5232
        %5266 = vst.msk [vmem:[%s580 + $0x61] sm:$0xff] %vm2476, %v5233
        %5267 = vst.msk [vmem:[%s580 + $0x79] sm:$0xff] %vm2476, %v5234
        %5268 = vst.msk [vmem:[%s580 + $0x91] sm:$0xff] %vm2476, %v5235
        %5269 = vst.msk [vmem:[%s580 + $0xa9] sm:$0xff] %vm2476, %v5236
        %v5270 = vld [vmem:[#allocation2] sm:$0xff]
        %v5271 = vld [vmem:[#allocation2 + $0x18] sm:$0xff]
        %v5272 = vld [vmem:[#allocation2 + $0x30] sm:$0xff]
        %v5273 = vld [vmem:[#allocation2 + $0x48] sm:$0xff]
        %v5274 = vld [vmem:[#allocation2 + $0x60] sm:$0xff]
        %v5275 = vld [vmem:[#allocation2 + $0x78] sm:$0xff]
        %v5276 = vld [vmem:[#allocation2 + $0x90] sm:$0xff]
        %v5277 = vld [vmem:[#allocation2 + $0xa8] sm:$0xff]
        %v5278 = vld [vmem:[#allocation2 + $0x1] sm:$0xff]
        %v5279 = vld [vmem:[#allocation2 + $0x19] sm:$0xff]
        %v5280 = vld [vmem:[#allocation2 + $0x31] sm:$0xff]
        %v5281 = vld [vmem:[#allocation2 + $0x49] sm:$0xff]
        %v5282 = vld [vmem:[#allocation2 + $0x61] sm:$0xff]
        %v5283 = vld [vmem:[#allocation2 + $0x79] sm:$0xff]
        %v5284 = vld [vmem:[#allocation2 + $0x91] sm:$0xff]
        %v5285 = vld [vmem:[#allocation2 + $0xa9] sm:$0xff]
        %v5286 = vld [vmem:[#allocation2 + $0x2] sm:$0xff]
        %v5287 = vld [vmem:[#allocation2 + $0x1a] sm:$0xff]
        %v5288 = vld [vmem:[#allocation2 + $0x32] sm:$0xff]
        %v5289 = vld [vmem:[#allocation2 + $0x4a] sm:$0xff]
        %v5290 = vld [vmem:[#allocation2 + $0x62] sm:$0xff]
        %v5291 = vld [vmem:[#allocation2 + $0x7a] sm:$0xff]
        %v5292 = vld [vmem:[#allocation2 + $0x92] sm:$0xff]
        %v5293 = vld [vmem:[#allocation2 + $0xaa] sm:$0xff]
        %v5294 = vld [vmem:[%s580] sm:$0xff]
        %v5295 = vld [vmem:[%s580 + $0x18] sm:$0xff]
        %v5296 = vld [vmem:[%s580 + $0x30] sm:$0xff]
        %v5297 = vld [vmem:[%s580 + $0x48] sm:$0xff]
        %v5298 = vld [vmem:[%s580 + $0x60] sm:$0xff]
        %v5299 = vld [vmem:[%s580 + $0x78] sm:$0xff]
        %v5300 = vld [vmem:[%s580 + $0x90] sm:$0xff]
        %v5301 = vld [vmem:[%s580 + $0xa8] sm:$0xff]
        %v5302 = vld [vmem:[%s580 + $0x1] sm:$0xff]
        %v5303 = vld [vmem:[%s580 + $0x19] sm:$0xff]
        %v5304 = vld [vmem:[%s580 + $0x31] sm:$0xff]
        %v5305 = vld [vmem:[%s580 + $0x49] sm:$0xff]
        %v5306 = vld [vmem:[%s580 + $0x61] sm:$0xff]
        %v5307 = vld [vmem:[%s580 + $0x79] sm:$0xff]
        %v5308 = vld [vmem:[%s580 + $0x91] sm:$0xff]
        %v5309 = vld [vmem:[%s580 + $0xa9] sm:$0xff]
        %v5310 = vld [vmem:[%s580 + $0x2] sm:$0xff]
        %v5311 = vld [vmem:[%s580 + $0x1a] sm:$0xff]
        %v5312 = vld [vmem:[%s580 + $0x32] sm:$0xff]
        %v5313 = vld [vmem:[%s580 + $0x4a] sm:$0xff]
        %v5314 = vld [vmem:[%s580 + $0x62] sm:$0xff]
        %v5315 = vld [vmem:[%s580 + $0x7a] sm:$0xff]
        %v5316 = vld [vmem:[%s580 + $0x92] sm:$0xff]
        %v5317 = vld [vmem:[%s580 + $0xaa] sm:$0xff]
        %v5318 = vld [vmem:[%s805] sm:$0xff]
        %v5319 = vld [vmem:[%s805 + $0x18] sm:$0xff]
        %v5320 = vld [vmem:[%s805 + $0x30] sm:$0xff]
        %v5321 = vld [vmem:[%s805 + $0x48] sm:$0xff]
        %v5322 = vld [vmem:[%s805 + $0x60] sm:$0xff]
        %v5323 = vld [vmem:[%s805 + $0x78] sm:$0xff]
        %v5324 = vld [vmem:[%s805 + $0x90] sm:$0xff]
        %v5325 = vld [vmem:[%s805 + $0xa8] sm:$0xff]
        %v5326 = vld [vmem:[%s805 + $0x1] sm:$0xff]
        %v5327 = vld [vmem:[%s805 + $0x19] sm:$0xff]
        %v5328 = vld [vmem:[%s805 + $0x31] sm:$0xff]
        %v5329 = vld [vmem:[%s805 + $0x49] sm:$0xff]
        %v5330 = vld [vmem:[%s805 + $0x61] sm:$0xff]
        %v5331 = vld [vmem:[%s805 + $0x79] sm:$0xff]
        %v5332 = vld [vmem:[%s805 + $0x91] sm:$0xff]
        %v5333 = vld [vmem:[%s805 + $0xa9] sm:$0xff]
        %v5334 = vld [vmem:[%s805 + $0x2] sm:$0xff]
        %v5335 = vld [vmem:[%s805 + $0x1a] sm:$0xff]
        %v5336 = vld [vmem:[%s805 + $0x32] sm:$0xff]
        %v5337 = vld [vmem:[%s805 + $0x4a] sm:$0xff]
        %v5338 = vld [vmem:[%s805 + $0x62] sm:$0xff]
        %v5339 = vld [vmem:[%s805 + $0x7a] sm:$0xff]
        %v5340 = vld [vmem:[%s805 + $0x92] sm:$0xff]
        %v5341 = vld [vmem:[%s805 + $0xaa] sm:$0xff]
        %5350 = vrot.lane.b32.xlu0 %v5278, 8
        %v5351 = vpop.permute.xlu0 %5350
        %5352 = vrot.lane.b32.xlu0 %v5279, 8
        %v5353 = vpop.permute.xlu0 %5352
        %5354 = vrot.lane.b32.xlu0 %v5280, 8
        %v5355 = vpop.permute.xlu0 %5354
        %5356 = vrot.lane.b32.xlu0 %v5281, 8
        %v5357 = vpop.permute.xlu0 %5356
        %5358 = vrot.lane.b32.xlu0 %v5282, 8
        %v5359 = vpop.permute.xlu0 %5358
        %5360 = vrot.lane.b32.xlu0 %v5283, 8
        %v5361 = vpop.permute.xlu0 %5360
        %5362 = vrot.lane.b32.xlu0 %v5284, 8
        %v5363 = vpop.permute.xlu0 %5362
        %5364 = vrot.lane.b32.xlu0 %v5285, 8
        %v5365 = vpop.permute.xlu0 %5364
        %5382 = vrot.lane.b32.xlu0 %v5286, 16
        %v5383 = vpop.permute.xlu0 %5382
        %5384 = vrot.lane.b32.xlu0 %v5287, 16
        %v5385 = vpop.permute.xlu0 %5384
        %5386 = vrot.lane.b32.xlu0 %v5288, 16
        %v5387 = vpop.permute.xlu0 %5386
        %5388 = vrot.lane.b32.xlu0 %v5289, 16
        %v5389 = vpop.permute.xlu0 %5388
        %5390 = vrot.lane.b32.xlu0 %v5290, 16
        %v5391 = vpop.permute.xlu0 %5390
        %5392 = vrot.lane.b32.xlu0 %v5291, 16
        %v5393 = vpop.permute.xlu0 %5392
        %5394 = vrot.lane.b32.xlu0 %v5292, 16
        %v5395 = vpop.permute.xlu0 %5394
        %5396 = vrot.lane.b32.xlu0 %v5293, 16
        %v5397 = vpop.permute.xlu0 %5396
        %5414 = vrot.lane.b32.xlu0 %v5294, 24
        %v5415 = vpop.permute.xlu0 %5414
        %5416 = vrot.lane.b32.xlu0 %v5295, 24
        %v5417 = vpop.permute.xlu0 %5416
        %5418 = vrot.lane.b32.xlu0 %v5296, 24
        %v5419 = vpop.permute.xlu0 %5418
        %5420 = vrot.lane.b32.xlu0 %v5297, 24
        %v5421 = vpop.permute.xlu0 %5420
        %5422 = vrot.lane.b32.xlu0 %v5298, 24
        %v5423 = vpop.permute.xlu0 %5422
        %5424 = vrot.lane.b32.xlu0 %v5299, 24
        %v5425 = vpop.permute.xlu0 %5424
        %5426 = vrot.lane.b32.xlu0 %v5300, 24
        %v5427 = vpop.permute.xlu0 %5426
        %5428 = vrot.lane.b32.xlu0 %v5301, 24
        %v5429 = vpop.permute.xlu0 %5428
        %5446 = vrot.lane.b32.xlu0 %v5302, 32
        %v5447 = vpop.permute.xlu0 %5446
        %5448 = vrot.lane.b32.xlu0 %v5303, 32
        %v5449 = vpop.permute.xlu0 %5448
        %5450 = vrot.lane.b32.xlu0 %v5304, 32
        %v5451 = vpop.permute.xlu0 %5450
        %5452 = vrot.lane.b32.xlu0 %v5305, 32
        %v5453 = vpop.permute.xlu0 %5452
        %5454 = vrot.lane.b32.xlu0 %v5306, 32
        %v5455 = vpop.permute.xlu0 %5454
        %5456 = vrot.lane.b32.xlu0 %v5307, 32
        %v5457 = vpop.permute.xlu0 %5456
        %5458 = vrot.lane.b32.xlu0 %v5308, 32
        %v5459 = vpop.permute.xlu0 %5458
        %5460 = vrot.lane.b32.xlu0 %v5309, 32
        %v5461 = vpop.permute.xlu0 %5460
        %5478 = vrot.lane.b32.xlu0 %v5310, 40
        %v5479 = vpop.permute.xlu0 %5478
        %5480 = vrot.lane.b32.xlu0 %v5311, 40
        %v5481 = vpop.permute.xlu0 %5480
        %5482 = vrot.lane.b32.xlu0 %v5312, 40
        %v5483 = vpop.permute.xlu0 %5482
        %5484 = vrot.lane.b32.xlu0 %v5313, 40
        %v5485 = vpop.permute.xlu0 %5484
        %5486 = vrot.lane.b32.xlu0 %v5314, 40
        %v5487 = vpop.permute.xlu0 %5486
        %5488 = vrot.lane.b32.xlu0 %v5315, 40
        %v5489 = vpop.permute.xlu0 %5488
        %5490 = vrot.lane.b32.xlu0 %v5316, 40
        %v5491 = vpop.permute.xlu0 %5490
        %5492 = vrot.lane.b32.xlu0 %v5317, 40
        %v5493 = vpop.permute.xlu0 %5492
        %5510 = vrot.lane.b32.xlu0 %v5318, 48
        %v5511 = vpop.permute.xlu0 %5510
        %5512 = vrot.lane.b32.xlu0 %v5319, 48
        %v5513 = vpop.permute.xlu0 %5512
        %5514 = vrot.lane.b32.xlu0 %v5320, 48
        %v5515 = vpop.permute.xlu0 %5514
        %5516 = vrot.lane.b32.xlu0 %v5321, 48
        %v5517 = vpop.permute.xlu0 %5516
        %5518 = vrot.lane.b32.xlu0 %v5322, 48
        %v5519 = vpop.permute.xlu0 %5518
        %5520 = vrot.lane.b32.xlu0 %v5323, 48
        %v5521 = vpop.permute.xlu0 %5520
        %5522 = vrot.lane.b32.xlu0 %v5324, 48
        %v5523 = vpop.permute.xlu0 %5522
        %5524 = vrot.lane.b32.xlu0 %v5325, 48
        %v5525 = vpop.permute.xlu0 %5524
        %5542 = vrot.lane.b32.xlu0 %v5326, 56
        %v5543 = vpop.permute.xlu0 %5542
        %5544 = vrot.lane.b32.xlu0 %v5327, 56
        %v5545 = vpop.permute.xlu0 %5544
        %5546 = vrot.lane.b32.xlu0 %v5328, 56
        %v5547 = vpop.permute.xlu0 %5546
        %5548 = vrot.lane.b32.xlu0 %v5329, 56
        %v5549 = vpop.permute.xlu0 %5548
        %5550 = vrot.lane.b32.xlu0 %v5330, 56
        %v5551 = vpop.permute.xlu0 %5550
        %5552 = vrot.lane.b32.xlu0 %v5331, 56
        %v5553 = vpop.permute.xlu0 %5552
        %5554 = vrot.lane.b32.xlu0 %v5332, 56
        %v5555 = vpop.permute.xlu0 %5554
        %5556 = vrot.lane.b32.xlu0 %v5333, 56
        %v5557 = vpop.permute.xlu0 %5556
        %5574 = vrot.lane.b32.xlu0 %v5334, 64
        %v5575 = vpop.permute.xlu0 %5574
        %5576 = vrot.lane.b32.xlu0 %v5335, 64
        %v5577 = vpop.permute.xlu0 %5576
        %5578 = vrot.lane.b32.xlu0 %v5336, 64
        %v5579 = vpop.permute.xlu0 %5578
        %5580 = vrot.lane.b32.xlu0 %v5337, 64
        %v5581 = vpop.permute.xlu0 %5580
        %5582 = vrot.lane.b32.xlu0 %v5338, 64
        %v5583 = vpop.permute.xlu0 %5582
        %5584 = vrot.lane.b32.xlu0 %v5339, 64
        %v5585 = vpop.permute.xlu0 %5584
        %5586 = vrot.lane.b32.xlu0 %v5340, 64
        %v5587 = vpop.permute.xlu0 %5586
        %5588 = vrot.lane.b32.xlu0 %v5341, 64
        %v5589 = vpop.permute.xlu0 %5588
        %v5598 = vsel %vm2476, %v5270, %v5351
        %v5599 = vsel %vm2476, %v5271, %v5353
        %v5600 = vsel %vm2476, %v5272, %v5355
        %v5601 = vsel %vm2476, %v5273, %v5357
        %v5602 = vsel %vm2476, %v5274, %v5359
        %v5603 = vsel %vm2476, %v5275, %v5361
        %v5604 = vsel %vm2476, %v5276, %v5363
        %v5605 = vsel %vm2476, %v5277, %v5365
        %v5606 = vsel %vm3897, %v5598, %v5383
        %v5607 = vsel %vm3897, %v5599, %v5385
        %v5608 = vsel %vm3897, %v5600, %v5387
        %v5609 = vsel %vm3897, %v5601, %v5389
        %v5610 = vsel %vm3897, %v5602, %v5391
        %v5611 = vsel %vm3897, %v5603, %v5393
        %v5612 = vsel %vm3897, %v5604, %v5395
        %v5613 = vsel %vm3897, %v5605, %v5397
        %v5614 = vsel %vm2156, %v5606, %v5415
        %v5615 = vsel %vm2156, %v5607, %v5417
        %v5616 = vsel %vm2156, %v5608, %v5419
        %v5617 = vsel %vm2156, %v5609, %v5421
        %v5618 = vsel %vm2156, %v5610, %v5423
        %v5619 = vsel %vm2156, %v5611, %v5425
        %v5620 = vsel %vm2156, %v5612, %v5427
        %v5621 = vsel %vm2156, %v5613, %v5429
        %v5622 = vsel %vm3962, %v5614, %v5447
        %v5623 = vsel %vm3962, %v5615, %v5449
        %v5624 = vsel %vm3962, %v5616, %v5451
        %v5625 = vsel %vm3962, %v5617, %v5453
        %v5626 = vsel %vm3962, %v5618, %v5455
        %v5627 = vsel %vm3962, %v5619, %v5457
        %v5628 = vsel %vm3962, %v5620, %v5459
        %v5629 = vsel %vm3962, %v5621, %v5461
        %v5630 = vsel %vm3995, %v5622, %v5479
        %v5631 = vsel %vm3995, %v5623, %v5481
        %v5632 = vsel %vm3995, %v5624, %v5483
        %v5633 = vsel %vm3995, %v5625, %v5485
        %v5634 = vsel %vm3995, %v5626, %v5487
        %v5635 = vsel %vm3995, %v5627, %v5489
        %v5636 = vsel %vm3995, %v5628, %v5491
        %v5637 = vsel %vm3995, %v5629, %v5493
        %v5638 = vsel %vm4028, %v5630, %v5511
        %v5639 = vsel %vm4028, %v5631, %v5513
        %v5640 = vsel %vm4028, %v5632, %v5515
        %v5641 = vsel %vm4028, %v5633, %v5517
        %v5642 = vsel %vm4028, %v5634, %v5519
        %v5643 = vsel %vm4028, %v5635, %v5521
        %v5644 = vsel %vm4028, %v5636, %v5523
        %v5645 = vsel %vm4028, %v5637, %v5525
        %v5646 = vsel %vm4061, %v5638, %v5543
        %v5647 = vsel %vm4061, %v5639, %v5545
        %v5648 = vsel %vm4061, %v5640, %v5547
        %v5649 = vsel %vm4061, %v5641, %v5549
        %v5650 = vsel %vm4061, %v5642, %v5551
        %v5651 = vsel %vm4061, %v5643, %v5553
        %v5652 = vsel %vm4061, %v5644, %v5555
        %v5653 = vsel %vm4061, %v5645, %v5557
        %v5654 = vsel %vm4094, %v5646, %v5575
        %v5655 = vsel %vm4094, %v5647, %v5577
        %v5656 = vsel %vm4094, %v5648, %v5579
        %v5657 = vsel %vm4094, %v5649, %v5581
        %v5658 = vsel %vm4094, %v5650, %v5583
        %v5659 = vsel %vm4094, %v5651, %v5585
        %v5660 = vsel %vm4094, %v5652, %v5587
        %v5661 = vsel %vm4094, %v5653, %v5589
        %v5662 = vpack.c.bf16 %v5655, %v5654
        %v5663 = vpack.c.bf16 %v5657, %v5656
        %v5664 = vpack.c.bf16 %v5659, %v5658
        %v5665 = vpack.c.bf16 %v5661, %v5660
        %v5666 = vld [vmem:[%s7] sm:$0xf]
        %v5667 = vld [vmem:[%s7 + $0x4] sm:$0xf]
        %v5668 = vld [vmem:[%s7 + $0x8] sm:$0xf]
        %v5669 = vld [vmem:[%s7 + $0xc] sm:$0xf]
        %v5670 = vld [vmem:[%s7 + $0x10] sm:$0xf]
        %v5671 = vld [vmem:[%s7 + $0x14] sm:$0xf]
        %v5672 = vld [vmem:[%s7 + $0x18] sm:$0xf]
        %v5673 = vld [vmem:[%s7 + $0x1c] sm:$0xf]
        %v5674 = vld [vmem:[%s7 + $0x20] sm:$0xf]
        %v5675 = vld [vmem:[%s8] sm:$0x1]
        %v5677 = vlaneseq
        %v5678 = vshrl.u32 %v5677, 7
        %v5679 = vsub.s32 0, %v5678
        %v5680 = vrot.slane %v5675, %v5679
        %v5691 = vunpack.c.l.b16 %v5666
        %v5692 = vunpack.c.l.b16 %v5667
        %v5693 = vunpack.c.l.b16 %v5668
        %v5694 = vunpack.c.l.b16 %v5669
        %v5695 = vunpack.c.l.b16 %v5670
        %v5696 = vunpack.c.l.b16 %v5671
        %v5697 = vunpack.c.l.b16 %v5672
        %v5698 = vunpack.c.l.b16 %v5673
        %v5699 = vunpack.c.l.b16 %v5674
        %v5700 = vpack.c.b16 %v5692, %v5691
        %v5701 = vpack.c.b16 %v5694, %v5693
        %v5702 = vpack.c.b16 %v5696, %v5695
        %v5703 = vpack.c.b16 %v5698, %v5697
        %v5704 = vpack.c.b16 %v5699, %v5699
        %v5710 = vsel %vm4186, %v5662, 0
        %v5713 = vsel %vm4186, %v5663, 0
        %v5716 = vsel %vm4186, %v5664, 0
        %v5719 = vsel %vm4186, %v5665, 0
        %v5722 = vsel %vm4235, %v5704, 0
        %5724 = vmatprep.subr.bf16.mxu0 0
        %5725 = vmatpush1.bf16.msra.mxu0 0
        %5726 = vmatprep.subr.bf16.mxu0 0
        %5727 = vmatpush1.bf16.msra.mxu0 0
        %5728 = vmatprep.subr.bf16.mxu0 0
        %5729 = vmatpush1.bf16.msra.mxu0 0
        %5730 = vmatprep.subr.bf16.mxu0 0
        %5731 = vmatpush1.bf16.msra.mxu0 %v5722
        %5732 = vmatprep.subr.bf16.mxu0 0
        %5733 = vmatpush1.bf16.msra.mxu0 %v5703
        %5734 = vmatprep.subr.bf16.mxu0 0
        %5735 = vmatpush1.bf16.msra.mxu0 %v5702
        %5736 = vmatprep.subr.bf16.mxu0 0
        %5737 = vmatpush1.bf16.msra.mxu0 %v5701
        %5738 = vmatprep.subr.bf16.mxu0 0
        %5739 = vmatpush1.bf16.msra.mxu0 %v5700
        %5740 = vmatprep.subr.bf16.mxu0 0
        %5741 = vmatpush2.bf16.msra.mxu0 0
        %5742 = vmatprep.subr.bf16.mxu0 0
        %5743 = vmatpush2.bf16.msra.mxu0 0
        %5744 = vmatprep.subr.bf16.mxu0 0
        %5745 = vmatpush2.bf16.msra.mxu0 0
        %5746 = vmatprep.subr.bf16.mxu0 0
        %5747 = vmatpush2.bf16.msra.mxu0 0
        %5748 = vmatprep.subr.bf16.mxu0 0
        %5749 = vmatpush2.bf16.msra.mxu0 0
        %5750 = vmatprep.subr.bf16.mxu0 0
        %5751 = vmatpush2.bf16.msra.mxu0 0
        %5752 = vmatprep.subr.bf16.mxu0 0
        %5753 = vmatpush2.bf16.msra.mxu0 0
        %5754 = vmatprep.subr.bf16.mxu0 0
        %5755 = vmatpush2.bf16.msra.mxu0 0
        %5756 = vmatprep.mubr.bf16.mxu0 0
        %5757 = vmatmul.mubr.bf16.gmra.mxu0 %v5710
        %v5758 = vpop.f32.mrf.mxu0
        %v5759 = vadd.f32 %v5680, %v5758
        %v5760 = vpop.f32.mrf.mxu0
        %v5761 = vpop.f32.mrf.mxu0
        %v5762 = vadd.f32 %v5680, %v5761
        %v5763 = vpop.f32.mrf.mxu0
        %5764 = vmatprep.mubr.bf16.mxu0 0
        %5765 = vmatmul.mubr.bf16.gmra.mxu0 %v5713
        %v5766 = vpop.f32.mrf.mxu0
        %v5767 = vadd.f32 %v5680, %v5766
        %v5768 = vpop.f32.mrf.mxu0
        %v5769 = vpop.f32.mrf.mxu0
        %v5770 = vadd.f32 %v5680, %v5769
        %v5771 = vpop.f32.mrf.mxu0
        %5772 = vmatprep.mubr.bf16.mxu0 0
        %5773 = vmatmul.mubr.bf16.gmra.mxu0 %v5716
        %v5774 = vpop.f32.mrf.mxu0
        %v5775 = vadd.f32 %v5680, %v5774
        %v5776 = vpop.f32.mrf.mxu0
        %v5777 = vpop.f32.mrf.mxu0
        %v5778 = vadd.f32 %v5680, %v5777
        %v5779 = vpop.f32.mrf.mxu0
        %5780 = vmatprep.mubr.bf16.mxu0 0
        %5781 = vmatmul.mubr.bf16.gmra.mxu0 %v5719
        %v5782 = vpop.f32.mrf.mxu0
        %v5783 = vadd.f32 %v5680, %v5782
        %v5784 = vpop.f32.mrf.mxu0
        %v5785 = vpop.f32.mrf.mxu0
        %v5786 = vadd.f32 %v5680, %v5785
        %v5787 = vpop.f32.mrf.mxu0
        %5788 = vdwg.mxu0
        %v5789 = vmax.f32 %v5759, 0.0
        %v5790 = vmax.f32 %v5762, 0.0
        %v5791 = vmax.f32 %v5767, 0.0
        %v5792 = vmax.f32 %v5770, 0.0
        %v5793 = vmax.f32 %v5775, 0.0
        %v5794 = vmax.f32 %v5778, 0.0
        %v5795 = vmax.f32 %v5783, 0.0
        %v5796 = vmax.f32 %v5786, 0.0
        %v5797 = vcombine.low %v5789, %v5791
        %v5798 = vcombine.high %v5789, %v5791
        %v5800 = vunpack.c.l.s4 1983009808
        %v5801 = vunpack.c.0.s8 %v5800
        %v5802 = vlaneseq
        %v5803 = vshrl.u32 %v5802, 7
        %v5804 = vsub.s32 %v5801, %v5803
        %v5805 = vrot.slane %v5797, %v5804
        %v5807 = vunpack.c.l.s4 1983009808
        %v5808 = vunpack.c.0.s8 %v5807
        %v5809 = vlaneseq
        %v5810 = vshrl.u32 %v5809, 7
        %v5811 = vsub.s32 %v5808, %v5810
        %v5812 = vrot.slane %v5798, %v5811
        %v5813 = vcombine.low %v5790, %v5792
        %v5814 = vcombine.high %v5790, %v5792
        %v5816 = vunpack.c.l.s4 1983009808
        %v5817 = vunpack.c.0.s8 %v5816
        %v5818 = vlaneseq
        %v5819 = vshrl.u32 %v5818, 7
        %v5820 = vsub.s32 %v5817, %v5819
        %v5821 = vrot.slane %v5813, %v5820
        %v5823 = vunpack.c.l.s4 1983009808
        %v5824 = vunpack.c.0.s8 %v5823
        %v5825 = vlaneseq
        %v5826 = vshrl.u32 %v5825, 7
        %v5827 = vsub.s32 %v5824, %v5826
        %v5828 = vrot.slane %v5814, %v5827
        %v5829 = vcombine.low %v5793, %v5795
        %v5830 = vcombine.high %v5793, %v5795
        %v5832 = vunpack.c.l.s4 1983009808
        %v5833 = vunpack.c.0.s8 %v5832
        %v5834 = vlaneseq
        %v5835 = vshrl.u32 %v5834, 7
        %v5836 = vsub.s32 %v5833, %v5835
        %v5837 = vrot.slane %v5829, %v5836
        %v5839 = vunpack.c.l.s4 1983009808
        %v5840 = vunpack.c.0.s8 %v5839
        %v5841 = vlaneseq
        %v5842 = vshrl.u32 %v5841, 7
        %v5843 = vsub.s32 %v5840, %v5842
        %v5844 = vrot.slane %v5830, %v5843
        %v5845 = vcombine.low %v5794, %v5796
        %v5846 = vcombine.high %v5794, %v5796
        %v5848 = vunpack.c.l.s4 1983009808
        %v5849 = vunpack.c.0.s8 %v5848
        %v5850 = vlaneseq
        %v5851 = vshrl.u32 %v5850, 7
        %v5852 = vsub.s32 %v5849, %v5851
        %v5853 = vrot.slane %v5845, %v5852
        %v5855 = vunpack.c.l.s4 1983009808
        %v5856 = vunpack.c.0.s8 %v5855
        %v5857 = vlaneseq
        %v5858 = vshrl.u32 %v5857, 7
        %v5859 = vsub.s32 %v5856, %v5858
        %v5860 = vrot.slane %v5846, %v5859
        %v5861 = vcombine.low %v5805, %v5821
        %v5862 = vcombine.high %v5805, %v5821
        %v5864 = vunpack.c.l.s4 1934713408
        %v5865 = vunpack.c.0.s8 %v5864
        %v5866 = vlaneseq
        %v5867 = vshrl.u32 %v5866, 7
        %v5868 = vsub.s32 %v5865, %v5867
        %v5869 = vrot.slane %v5861, %v5868
        %v5871 = vunpack.c.l.s4 1934713408
        %v5872 = vunpack.c.0.s8 %v5871
        %v5873 = vlaneseq
        %v5874 = vshrl.u32 %v5873, 7
        %v5875 = vsub.s32 %v5872, %v5874
        %v5876 = vrot.slane %v5862, %v5875
        %v5877 = vcombine.low %v5812, %v5828
        %v5878 = vcombine.high %v5812, %v5828
        %v5880 = vunpack.c.l.s4 1934713408
        %v5881 = vunpack.c.0.s8 %v5880
        %v5882 = vlaneseq
        %v5883 = vshrl.u32 %v5882, 7
        %v5884 = vsub.s32 %v5881, %v5883
        %v5885 = vrot.slane %v5877, %v5884
        %v5887 = vunpack.c.l.s4 1934713408
        %v5888 = vunpack.c.0.s8 %v5887
        %v5889 = vlaneseq
        %v5890 = vshrl.u32 %v5889, 7
        %v5891 = vsub.s32 %v5888, %v5890
        %v5892 = vrot.slane %v5878, %v5891
        %v5893 = vcombine.low %v5837, %v5853
        %v5894 = vcombine.high %v5837, %v5853
        %v5896 = vunpack.c.l.s4 1934713408
        %v5897 = vunpack.c.0.s8 %v5896
        %v5898 = vlaneseq
        %v5899 = vshrl.u32 %v5898, 7
        %v5900 = vsub.s32 %v5897, %v5899
        %v5901 = vrot.slane %v5893, %v5900
        %v5903 = vunpack.c.l.s4 1934713408
        %v5904 = vunpack.c.0.s8 %v5903
        %v5905 = vlaneseq
        %v5906 = vshrl.u32 %v5905, 7
        %v5907 = vsub.s32 %v5904, %v5906
        %v5908 = vrot.slane %v5894, %v5907
        %v5909 = vcombine.low %v5844, %v5860
        %v5910 = vcombine.high %v5844, %v5860
        %v5912 = vunpack.c.l.s4 1934713408
        %v5913 = vunpack.c.0.s8 %v5912
        %v5914 = vlaneseq
        %v5915 = vshrl.u32 %v5914, 7
        %v5916 = vsub.s32 %v5913, %v5915
        %v5917 = vrot.slane %v5909, %v5916
        %v5919 = vunpack.c.l.s4 1934713408
        %v5920 = vunpack.c.0.s8 %v5919
        %v5921 = vlaneseq
        %v5922 = vshrl.u32 %v5921, 7
        %v5923 = vsub.s32 %v5920, %v5922
        %v5924 = vrot.slane %v5910, %v5923
        %v5925 = vcombine.low %v5869, %v5901
        %v5926 = vcombine.high %v5869, %v5901
        %v5927 = vcombine.low %v5876, %v5908
        %v5928 = vcombine.high %v5876, %v5908
        %v5929 = vcombine.low %v5885, %v5917
        %v5930 = vcombine.high %v5885, %v5917
        %v5931 = vcombine.low %v5892, %v5924
        %v5932 = vcombine.high %v5892, %v5924
        %5934 = vrot.lane.b32.xlu0 %v5926, 16
        %v5935 = vpop.permute.xlu0 %5934
        %5938 = vrot.lane.b32.xlu0 %v5927, 32
        %v5939 = vpop.permute.xlu0 %5938
        %5942 = vrot.lane.b32.xlu0 %v5928, 48
        %v5943 = vpop.permute.xlu0 %5942
        %5946 = vrot.lane.b32.xlu0 %v5929, 64
        %v5947 = vpop.permute.xlu0 %5946
        %5950 = vrot.lane.b32.xlu0 %v5930, 80
        %v5951 = vpop.permute.xlu0 %5950
        %5954 = vrot.lane.b32.xlu0 %v5931, 96
        %v5955 = vpop.permute.xlu0 %5954
        %5958 = vrot.lane.b32.xlu0 %v5932, 112
        %v5959 = vpop.permute.xlu0 %5958
        %v5961 = vsel %vm3897, %v5925, %v5935
        %v5962 = vsel %vm3962, %v5961, %v5939
        %v5963 = vsel %vm4028, %v5962, %v5943
        %v5964 = vsel %vm4094, %v5963, %v5947
        %v5965 = vsel %vm5114, %v5964, %v5951
        %v5966 = vsel %vm5120, %v5965, %v5955
        %v5967 = vsel %vm5126, %v5966, %v5959
        %5968 = vst [vmem:[%s417] sm:$0xff] %v5967
        %5969 = vst.msk [vmem:[#allocation2] sm:$0xff] %vm3897, 0.0
        %vm5970 = vcmask 123904
        %5971 = vst.msk [vmem:[#allocation2 + $0x8] sm:$0x3] %vm5970, 0.0
        %5972 = vst.msk [vmem:[%s5239] sm:$0xff] %vm3897, 0.0
        %5973 = vst.msk [vmem:[%s5239 + $0x8] sm:$0x3] %vm5970, 0.0
        %vm5974 = vcmask 122880
        %5975 = vst.msk [vmem:[#allocation2] sm:$0x1] %vm5974, 0.0
        %5976 = vst.msk [vmem:[#allocation2 + $0x18] sm:$0x1] %vm5974, 0.0
        %5977 = vst.msk [vmem:[#allocation2 + $0x30] sm:$0x1] %vm5974, 0.0
        %5978 = vst.msk [vmem:[#allocation2 + $0x48] sm:$0x1] %vm5974, 0.0
        %5979 = vst.msk [vmem:[#allocation2 + $0x60] sm:$0x1] %vm5974, 0.0
        %5980 = vst.msk [vmem:[#allocation2 + $0x78] sm:$0x1] %vm5974, 0.0
        %5981 = vst.msk [vmem:[#allocation2 + $0x90] sm:$0x1] %vm5974, 0.0
        %5982 = vst.msk [vmem:[#allocation2 + $0xa8] sm:$0x1] %vm5974, 0.0
        %5983 = vst.msk [vmem:[#allocation2 + $0xc0] sm:$0x1] %vm5974, 0.0
        %5984 = vst.msk [vmem:[#allocation2 + $0xd8] sm:$0x1] %vm5974, 0.0
        %5985 = vst.msk [vmem:[#allocation2 + $0x9] sm:$0x1] %vm5974, 0.0
        %5986 = vst.msk [vmem:[#allocation2 + $0x21] sm:$0x1] %vm5974, 0.0
        %5987 = vst.msk [vmem:[#allocation2 + $0x39] sm:$0x1] %vm5974, 0.0
        %5988 = vst.msk [vmem:[#allocation2 + $0x51] sm:$0x1] %vm5974, 0.0
        %5989 = vst.msk [vmem:[#allocation2 + $0x69] sm:$0x1] %vm5974, 0.0
        %5990 = vst.msk [vmem:[#allocation2 + $0x81] sm:$0x1] %vm5974, 0.0
        %5991 = vst.msk [vmem:[#allocation2 + $0x99] sm:$0x1] %vm5974, 0.0
        %5992 = vst.msk [vmem:[#allocation2 + $0xb1] sm:$0x1] %vm5974, 0.0
        %5993 = vst.msk [vmem:[#allocation2 + $0xc9] sm:$0x1] %vm5974, 0.0
        %5994 = vst.msk [vmem:[#allocation2 + $0xe1] sm:$0x1] %vm5974, 0.0
        %5995 = vst.msk [vmem:[%s580 + $0x1] sm:$0xff] %vm3897, %v5789
        %5996 = vst.msk [vmem:[%s580 + $0x19] sm:$0xff] %vm3897, %v5790
        %5997 = vst.msk [vmem:[%s580 + $0x31] sm:$0xff] %vm3897, %v5791
        %5998 = vst.msk [vmem:[%s580 + $0x49] sm:$0xff] %vm3897, %v5792
        %5999 = vst.msk [vmem:[%s580 + $0x61] sm:$0xff] %vm3897, %v5793
        %6000 = vst.msk [vmem:[%s580 + $0x79] sm:$0xff] %vm3897, %v5794
        %6001 = vst.msk [vmem:[%s580 + $0x91] sm:$0xff] %vm3897, %v5795
        %6002 = vst.msk [vmem:[%s580 + $0xa9] sm:$0xff] %vm3897, %v5796
        %v6003 = vld [vmem:[#allocation2] sm:$0xff]
        %v6004 = vld [vmem:[#allocation2 + $0x18] sm:$0xff]
        %v6005 = vld [vmem:[#allocation2 + $0x30] sm:$0xff]
        %v6006 = vld [vmem:[#allocation2 + $0x48] sm:$0xff]
        %v6007 = vld [vmem:[#allocation2 + $0x60] sm:$0xff]
        %v6008 = vld [vmem:[#allocation2 + $0x78] sm:$0xff]
        %v6009 = vld [vmem:[#allocation2 + $0x90] sm:$0xff]
        %v6010 = vld [vmem:[#allocation2 + $0xa8] sm:$0xff]
        %v6011 = vld [vmem:[#allocation2 + $0x1] sm:$0xff]
        %v6012 = vld [vmem:[#allocation2 + $0x19] sm:$0xff]
        %v6013 = vld [vmem:[#allocation2 + $0x31] sm:$0xff]
        %v6014 = vld [vmem:[#allocation2 + $0x49] sm:$0xff]
        %v6015 = vld [vmem:[#allocation2 + $0x61] sm:$0xff]
        %v6016 = vld [vmem:[#allocation2 + $0x79] sm:$0xff]
        %v6017 = vld [vmem:[#allocation2 + $0x91] sm:$0xff]
        %v6018 = vld [vmem:[#allocation2 + $0xa9] sm:$0xff]
        %v6019 = vld [vmem:[#allocation2 + $0x2] sm:$0xff]
        %v6020 = vld [vmem:[#allocation2 + $0x1a] sm:$0xff]
        %v6021 = vld [vmem:[#allocation2 + $0x32] sm:$0xff]
        %v6022 = vld [vmem:[#allocation2 + $0x4a] sm:$0xff]
        %v6023 = vld [vmem:[#allocation2 + $0x62] sm:$0xff]
        %v6024 = vld [vmem:[#allocation2 + $0x7a] sm:$0xff]
        %v6025 = vld [vmem:[#allocation2 + $0x92] sm:$0xff]
        %v6026 = vld [vmem:[#allocation2 + $0xaa] sm:$0xff]
        %v6027 = vld [vmem:[%s580] sm:$0xff]
        %v6028 = vld [vmem:[%s580 + $0x18] sm:$0xff]
        %v6029 = vld [vmem:[%s580 + $0x30] sm:$0xff]
        %v6030 = vld [vmem:[%s580 + $0x48] sm:$0xff]
        %v6031 = vld [vmem:[%s580 + $0x60] sm:$0xff]
        %v6032 = vld [vmem:[%s580 + $0x78] sm:$0xff]
        %v6033 = vld [vmem:[%s580 + $0x90] sm:$0xff]
        %v6034 = vld [vmem:[%s580 + $0xa8] sm:$0xff]
        %v6035 = vld [vmem:[%s580 + $0x1] sm:$0xff]
        %v6036 = vld [vmem:[%s580 + $0x19] sm:$0xff]
        %v6037 = vld [vmem:[%s580 + $0x31] sm:$0xff]
        %v6038 = vld [vmem:[%s580 + $0x49] sm:$0xff]
        %v6039 = vld [vmem:[%s580 + $0x61] sm:$0xff]
        %v6040 = vld [vmem:[%s580 + $0x79] sm:$0xff]
        %v6041 = vld [vmem:[%s580 + $0x91] sm:$0xff]
        %v6042 = vld [vmem:[%s580 + $0xa9] sm:$0xff]
        %v6043 = vld [vmem:[%s580 + $0x2] sm:$0xff]
        %v6044 = vld [vmem:[%s580 + $0x1a] sm:$0xff]
        %v6045 = vld [vmem:[%s580 + $0x32] sm:$0xff]
        %v6046 = vld [vmem:[%s580 + $0x4a] sm:$0xff]
        %v6047 = vld [vmem:[%s580 + $0x62] sm:$0xff]
        %v6048 = vld [vmem:[%s580 + $0x7a] sm:$0xff]
        %v6049 = vld [vmem:[%s580 + $0x92] sm:$0xff]
        %v6050 = vld [vmem:[%s580 + $0xaa] sm:$0xff]
        %v6051 = vld [vmem:[%s805] sm:$0xff]
        %v6052 = vld [vmem:[%s805 + $0x18] sm:$0xff]
        %v6053 = vld [vmem:[%s805 + $0x30] sm:$0xff]
        %v6054 = vld [vmem:[%s805 + $0x48] sm:$0xff]
        %v6055 = vld [vmem:[%s805 + $0x60] sm:$0xff]
        %v6056 = vld [vmem:[%s805 + $0x78] sm:$0xff]
        %v6057 = vld [vmem:[%s805 + $0x90] sm:$0xff]
        %v6058 = vld [vmem:[%s805 + $0xa8] sm:$0xff]
        %v6059 = vld [vmem:[%s805 + $0x1] sm:$0xff]
        %v6060 = vld [vmem:[%s805 + $0x19] sm:$0xff]
        %v6061 = vld [vmem:[%s805 + $0x31] sm:$0xff]
        %v6062 = vld [vmem:[%s805 + $0x49] sm:$0xff]
        %v6063 = vld [vmem:[%s805 + $0x61] sm:$0xff]
        %v6064 = vld [vmem:[%s805 + $0x79] sm:$0xff]
        %v6065 = vld [vmem:[%s805 + $0x91] sm:$0xff]
        %v6066 = vld [vmem:[%s805 + $0xa9] sm:$0xff]
        %v6067 = vld [vmem:[%s805 + $0x2] sm:$0xff]
        %v6068 = vld [vmem:[%s805 + $0x1a] sm:$0xff]
        %v6069 = vld [vmem:[%s805 + $0x32] sm:$0xff]
        %v6070 = vld [vmem:[%s805 + $0x4a] sm:$0xff]
        %v6071 = vld [vmem:[%s805 + $0x62] sm:$0xff]
        %v6072 = vld [vmem:[%s805 + $0x7a] sm:$0xff]
        %v6073 = vld [vmem:[%s805 + $0x92] sm:$0xff]
        %v6074 = vld [vmem:[%s805 + $0xaa] sm:$0xff]
        %6083 = vrot.lane.b32.xlu0 %v6011, 16
        %v6084 = vpop.permute.xlu0 %6083
        %6085 = vrot.lane.b32.xlu0 %v6012, 16
        %v6086 = vpop.permute.xlu0 %6085
        %6087 = vrot.lane.b32.xlu0 %v6013, 16
        %v6088 = vpop.permute.xlu0 %6087
        %6089 = vrot.lane.b32.xlu0 %v6014, 16
        %v6090 = vpop.permute.xlu0 %6089
        %6091 = vrot.lane.b32.xlu0 %v6015, 16
        %v6092 = vpop.permute.xlu0 %6091
        %6093 = vrot.lane.b32.xlu0 %v6016, 16
        %v6094 = vpop.permute.xlu0 %6093
        %6095 = vrot.lane.b32.xlu0 %v6017, 16
        %v6096 = vpop.permute.xlu0 %6095
        %6097 = vrot.lane.b32.xlu0 %v6018, 16
        %v6098 = vpop.permute.xlu0 %6097
        %6115 = vrot.lane.b32.xlu0 %v6019, 32
        %v6116 = vpop.permute.xlu0 %6115
        %6117 = vrot.lane.b32.xlu0 %v6020, 32
        %v6118 = vpop.permute.xlu0 %6117
        %6119 = vrot.lane.b32.xlu0 %v6021, 32
        %v6120 = vpop.permute.xlu0 %6119
        %6121 = vrot.lane.b32.xlu0 %v6022, 32
        %v6122 = vpop.permute.xlu0 %6121
        %6123 = vrot.lane.b32.xlu0 %v6023, 32
        %v6124 = vpop.permute.xlu0 %6123
        %6125 = vrot.lane.b32.xlu0 %v6024, 32
        %v6126 = vpop.permute.xlu0 %6125
        %6127 = vrot.lane.b32.xlu0 %v6025, 32
        %v6128 = vpop.permute.xlu0 %6127
        %6129 = vrot.lane.b32.xlu0 %v6026, 32
        %v6130 = vpop.permute.xlu0 %6129
        %6147 = vrot.lane.b32.xlu0 %v6027, 48
        %v6148 = vpop.permute.xlu0 %6147
        %6149 = vrot.lane.b32.xlu0 %v6028, 48
        %v6150 = vpop.permute.xlu0 %6149
        %6151 = vrot.lane.b32.xlu0 %v6029, 48
        %v6152 = vpop.permute.xlu0 %6151
        %6153 = vrot.lane.b32.xlu0 %v6030, 48
        %v6154 = vpop.permute.xlu0 %6153
        %6155 = vrot.lane.b32.xlu0 %v6031, 48
        %v6156 = vpop.permute.xlu0 %6155
        %6157 = vrot.lane.b32.xlu0 %v6032, 48
        %v6158 = vpop.permute.xlu0 %6157
        %6159 = vrot.lane.b32.xlu0 %v6033, 48
        %v6160 = vpop.permute.xlu0 %6159
        %6161 = vrot.lane.b32.xlu0 %v6034, 48
        %v6162 = vpop.permute.xlu0 %6161
        %6179 = vrot.lane.b32.xlu0 %v6035, 64
        %v6180 = vpop.permute.xlu0 %6179
        %6181 = vrot.lane.b32.xlu0 %v6036, 64
        %v6182 = vpop.permute.xlu0 %6181
        %6183 = vrot.lane.b32.xlu0 %v6037, 64
        %v6184 = vpop.permute.xlu0 %6183
        %6185 = vrot.lane.b32.xlu0 %v6038, 64
        %v6186 = vpop.permute.xlu0 %6185
        %6187 = vrot.lane.b32.xlu0 %v6039, 64
        %v6188 = vpop.permute.xlu0 %6187
        %6189 = vrot.lane.b32.xlu0 %v6040, 64
        %v6190 = vpop.permute.xlu0 %6189
        %6191 = vrot.lane.b32.xlu0 %v6041, 64
        %v6192 = vpop.permute.xlu0 %6191
        %6193 = vrot.lane.b32.xlu0 %v6042, 64
        %v6194 = vpop.permute.xlu0 %6193
        %6211 = vrot.lane.b32.xlu0 %v6043, 80
        %v6212 = vpop.permute.xlu0 %6211
        %6213 = vrot.lane.b32.xlu0 %v6044, 80
        %v6214 = vpop.permute.xlu0 %6213
        %6215 = vrot.lane.b32.xlu0 %v6045, 80
        %v6216 = vpop.permute.xlu0 %6215
        %6217 = vrot.lane.b32.xlu0 %v6046, 80
        %v6218 = vpop.permute.xlu0 %6217
        %6219 = vrot.lane.b32.xlu0 %v6047, 80
        %v6220 = vpop.permute.xlu0 %6219
        %6221 = vrot.lane.b32.xlu0 %v6048, 80
        %v6222 = vpop.permute.xlu0 %6221
        %6223 = vrot.lane.b32.xlu0 %v6049, 80
        %v6224 = vpop.permute.xlu0 %6223
        %6225 = vrot.lane.b32.xlu0 %v6050, 80
        %v6226 = vpop.permute.xlu0 %6225
        %6243 = vrot.lane.b32.xlu0 %v6051, 96
        %v6244 = vpop.permute.xlu0 %6243
        %6245 = vrot.lane.b32.xlu0 %v6052, 96
        %v6246 = vpop.permute.xlu0 %6245
        %6247 = vrot.lane.b32.xlu0 %v6053, 96
        %v6248 = vpop.permute.xlu0 %6247
        %6249 = vrot.lane.b32.xlu0 %v6054, 96
        %v6250 = vpop.permute.xlu0 %6249
        %6251 = vrot.lane.b32.xlu0 %v6055, 96
        %v6252 = vpop.permute.xlu0 %6251
        %6253 = vrot.lane.b32.xlu0 %v6056, 96
        %v6254 = vpop.permute.xlu0 %6253
        %6255 = vrot.lane.b32.xlu0 %v6057, 96
        %v6256 = vpop.permute.xlu0 %6255
        %6257 = vrot.lane.b32.xlu0 %v6058, 96
        %v6258 = vpop.permute.xlu0 %6257
        %6275 = vrot.lane.b32.xlu0 %v6059, 112
        %v6276 = vpop.permute.xlu0 %6275
        %6277 = vrot.lane.b32.xlu0 %v6060, 112
        %v6278 = vpop.permute.xlu0 %6277
        %6279 = vrot.lane.b32.xlu0 %v6061, 112
        %v6280 = vpop.permute.xlu0 %6279
        %6281 = vrot.lane.b32.xlu0 %v6062, 112
        %v6282 = vpop.permute.xlu0 %6281
        %6283 = vrot.lane.b32.xlu0 %v6063, 112
        %v6284 = vpop.permute.xlu0 %6283
        %6285 = vrot.lane.b32.xlu0 %v6064, 112
        %v6286 = vpop.permute.xlu0 %6285
        %6287 = vrot.lane.b32.xlu0 %v6065, 112
        %v6288 = vpop.permute.xlu0 %6287
        %6289 = vrot.lane.b32.xlu0 %v6066, 112
        %v6290 = vpop.permute.xlu0 %6289
        %v6299 = vsel %vm3897, %v6003, %v6084
        %v6300 = vsel %vm3897, %v6004, %v6086
        %v6301 = vsel %vm3897, %v6005, %v6088
        %v6302 = vsel %vm3897, %v6006, %v6090
        %v6303 = vsel %vm3897, %v6007, %v6092
        %v6304 = vsel %vm3897, %v6008, %v6094
        %v6305 = vsel %vm3897, %v6009, %v6096
        %v6306 = vsel %vm3897, %v6010, %v6098
        %v6307 = vsel %vm3962, %v6299, %v6116
        %v6308 = vsel %vm3962, %v6300, %v6118
        %v6309 = vsel %vm3962, %v6301, %v6120
        %v6310 = vsel %vm3962, %v6302, %v6122
        %v6311 = vsel %vm3962, %v6303, %v6124
        %v6312 = vsel %vm3962, %v6304, %v6126
        %v6313 = vsel %vm3962, %v6305, %v6128
        %v6314 = vsel %vm3962, %v6306, %v6130
        %v6315 = vsel %vm4028, %v6307, %v6148
        %v6316 = vsel %vm4028, %v6308, %v6150
        %v6317 = vsel %vm4028, %v6309, %v6152
        %v6318 = vsel %vm4028, %v6310, %v6154
        %v6319 = vsel %vm4028, %v6311, %v6156
        %v6320 = vsel %vm4028, %v6312, %v6158
        %v6321 = vsel %vm4028, %v6313, %v6160
        %v6322 = vsel %vm4028, %v6314, %v6162
        %v6323 = vsel %vm4094, %v6315, %v6180
        %v6324 = vsel %vm4094, %v6316, %v6182
        %v6325 = vsel %vm4094, %v6317, %v6184
        %v6326 = vsel %vm4094, %v6318, %v6186
        %v6327 = vsel %vm4094, %v6319, %v6188
        %v6328 = vsel %vm4094, %v6320, %v6190
        %v6329 = vsel %vm4094, %v6321, %v6192
        %v6330 = vsel %vm4094, %v6322, %v6194
        %v6331 = vsel %vm5114, %v6323, %v6212
        %v6332 = vsel %vm5114, %v6324, %v6214
        %v6333 = vsel %vm5114, %v6325, %v6216
        %v6334 = vsel %vm5114, %v6326, %v6218
        %v6335 = vsel %vm5114, %v6327, %v6220
        %v6336 = vsel %vm5114, %v6328, %v6222
        %v6337 = vsel %vm5114, %v6329, %v6224
        %v6338 = vsel %vm5114, %v6330, %v6226
        %v6339 = vsel %vm5120, %v6331, %v6244
        %v6340 = vsel %vm5120, %v6332, %v6246
        %v6341 = vsel %vm5120, %v6333, %v6248
        %v6342 = vsel %vm5120, %v6334, %v6250
        %v6343 = vsel %vm5120, %v6335, %v6252
        %v6344 = vsel %vm5120, %v6336, %v6254
        %v6345 = vsel %vm5120, %v6337, %v6256
        %v6346 = vsel %vm5120, %v6338, %v6258
        %v6347 = vsel %vm5126, %v6339, %v6276
        %v6348 = vsel %vm5126, %v6340, %v6278
        %v6349 = vsel %vm5126, %v6341, %v6280
        %v6350 = vsel %vm5126, %v6342, %v6282
        %v6351 = vsel %vm5126, %v6343, %v6284
        %v6352 = vsel %vm5126, %v6344, %v6286
        %v6353 = vsel %vm5126, %v6345, %v6288
        %v6354 = vsel %vm5126, %v6346, %v6290
        %v6355 = vpack.c.bf16 %v6348, %v6347
        %v6356 = vpack.c.bf16 %v6068, %v6067
        %v6357 = vpack.c.bf16 %v6350, %v6349
        %v6358 = vpack.c.bf16 %v6070, %v6069
        %v6359 = vpack.c.bf16 %v6352, %v6351
        %v6360 = vpack.c.bf16 %v6072, %v6071
        %v6361 = vpack.c.bf16 %v6354, %v6353
        %v6362 = vpack.c.bf16 %v6074, %v6073
        %v6363 = vld [vmem:[%s9] sm:$0xf]
        %v6364 = vld [vmem:[%s9 + $0x4] sm:$0xf]
        %v6365 = vld [vmem:[%s9 + $0x8] sm:$0xf]
        %v6366 = vld [vmem:[%s9 + $0xc] sm:$0xf]
        %v6367 = vld [vmem:[%s9 + $0x10] sm:$0xf]
        %v6368 = vld [vmem:[%s9 + $0x14] sm:$0xf]
        %v6369 = vld [vmem:[%s9 + $0x18] sm:$0xf]
        %v6370 = vld [vmem:[%s9 + $0x1c] sm:$0xf]
        %v6371 = vld [vmem:[%s9 + $0x20] sm:$0xf]
        %v6372 = vld [vmem:[%s9 + $0x24] sm:$0xf]
        %v6373 = vld [vmem:[%s9 + $0x28] sm:$0xf]
        %v6374 = vld [vmem:[%s9 + $0x2c] sm:$0xf]
        %v6375 = vld [vmem:[%s9 + $0x30] sm:$0xf]
        %v6376 = vld [vmem:[%s9 + $0x34] sm:$0xf]
        %v6377 = vld [vmem:[%s9 + $0x38] sm:$0xf]
        %v6378 = vld [vmem:[%s9 + $0x3c] sm:$0xf]
        %v6379 = vld [vmem:[%s9 + $0x40] sm:$0xf]
        %v6380 = vld [vmem:[%s9 + $0x44] sm:$0xf]
        %v6381 = vld [vmem:[%s10] sm:$0x1]
        %v6383 = vlaneseq
        %v6384 = vshrl.u32 %v6383, 7
        %v6385 = vsub.s32 0, %v6384
        %v6386 = vrot.slane %v6381, %v6385
        %v6406 = vunpack.c.l.b16 %v6363
        %v6407 = vunpack.c.l.b16 %v6364
        %v6408 = vunpack.c.l.b16 %v6365
        %v6409 = vunpack.c.l.b16 %v6366
        %v6410 = vunpack.c.l.b16 %v6367
        %v6411 = vunpack.c.l.b16 %v6368
        %v6412 = vunpack.c.l.b16 %v6369
        %v6413 = vunpack.c.l.b16 %v6370
        %v6414 = vunpack.c.l.b16 %v6371
        %v6415 = vunpack.c.l.b16 %v6372
        %v6416 = vunpack.c.l.b16 %v6373
        %v6417 = vunpack.c.l.b16 %v6374
        %v6418 = vunpack.c.l.b16 %v6375
        %v6419 = vunpack.c.l.b16 %v6376
        %v6420 = vunpack.c.l.b16 %v6377
        %v6421 = vunpack.c.l.b16 %v6378
        %v6422 = vunpack.c.l.b16 %v6379
        %v6423 = vunpack.c.l.b16 %v6380
        %v6424 = vpack.c.b16 %v6407, %v6406
        %v6425 = vpack.c.b16 %v6409, %v6408
        %v6426 = vpack.c.b16 %v6411, %v6410
        %v6427 = vpack.c.b16 %v6413, %v6412
        %v6428 = vpack.c.b16 %v6415, %v6414
        %v6429 = vpack.c.b16 %v6417, %v6416
        %v6430 = vpack.c.b16 %v6419, %v6418
        %v6431 = vpack.c.b16 %v6421, %v6420
        %v6432 = vpack.c.b16 %v6423, %v6422
        %v6443 = vsel %vm3897, %v6356, 0
        %v6446 = vsel %vm3897, %v6358, 0
        %v6449 = vsel %vm3897, %v6360, 0
        %v6452 = vsel %vm3897, %v6362, 0
        %6454 = vmatprep.subr.bf16.mxu0 0
        %6455 = vmatpush1.bf16.msra.mxu0 %v6431
        %6456 = vmatprep.subr.bf16.mxu0 0
        %6457 = vmatpush1.bf16.msra.mxu0 %v6430
        %6458 = vmatprep.subr.bf16.mxu0 0
        %6459 = vmatpush1.bf16.msra.mxu0 %v6429
        %6460 = vmatprep.subr.bf16.mxu0 0
        %6461 = vmatpush1.bf16.msra.mxu0 %v6428
        %6462 = vmatprep.subr.bf16.mxu0 0
        %6463 = vmatpush1.bf16.msra.mxu0 %v6427
        %6464 = vmatprep.subr.bf16.mxu0 0
        %6465 = vmatpush1.bf16.msra.mxu0 %v6426
        %6466 = vmatprep.subr.bf16.mxu0 0
        %6467 = vmatpush1.bf16.msra.mxu0 %v6425
        %6468 = vmatprep.subr.bf16.mxu0 0
        %6469 = vmatpush1.bf16.msra.mxu0 %v6424
        %6470 = vmatprep.subr.bf16.mxu0 0
        %6471 = vmatpush2.bf16.msra.mxu0 0
        %6472 = vmatprep.subr.bf16.mxu0 0
        %6473 = vmatpush2.bf16.msra.mxu0 0
        %6474 = vmatprep.subr.bf16.mxu0 0
        %6475 = vmatpush2.bf16.msra.mxu0 0
        %6476 = vmatprep.subr.bf16.mxu0 0
        %6477 = vmatpush2.bf16.msra.mxu0 0
        %6478 = vmatprep.subr.bf16.mxu0 0
        %6479 = vmatpush2.bf16.msra.mxu0 0
        %6480 = vmatprep.subr.bf16.mxu0 0
        %6481 = vmatpush2.bf16.msra.mxu0 0
        %6482 = vmatprep.subr.bf16.mxu0 0
        %6483 = vmatpush2.bf16.msra.mxu0 0
        %6484 = vmatprep.subr.bf16.mxu0 0
        %6485 = vmatpush2.bf16.msra.mxu0 %v6432
        %6486 = vmatprep.mubr.bf16.mxu0 %v6443
        %6487 = vmatmul.mubr.bf16.gmra.mxu0 %v6355
        %v6488 = vpop.f32.mrf.mxu0
        %v6489 = vadd.f32 %v6386, %v6488
        %v6490 = vpop.f32.mrf.mxu0
        %v6491 = vpop.f32.mrf.mxu0
        %v6492 = vadd.f32 %v6386, %v6491
        %v6493 = vpop.f32.mrf.mxu0
        %6494 = vmatprep.mubr.bf16.mxu0 %v6446
        %6495 = vmatmul.mubr.bf16.gmra.mxu0 %v6357
        %v6496 = vpop.f32.mrf.mxu0
        %v6497 = vadd.f32 %v6386, %v6496
        %v6498 = vpop.f32.mrf.mxu0
        %v6499 = vpop.f32.mrf.mxu0
        %v6500 = vadd.f32 %v6386, %v6499
        %v6501 = vpop.f32.mrf.mxu0
        %6502 = vmatprep.mubr.bf16.mxu0 %v6449
        %6503 = vmatmul.mubr.bf16.gmra.mxu0 %v6359
        %v6504 = vpop.f32.mrf.mxu0
        %v6505 = vadd.f32 %v6386, %v6504
        %v6506 = vpop.f32.mrf.mxu0
        %v6507 = vpop.f32.mrf.mxu0
        %v6508 = vadd.f32 %v6386, %v6507
        %v6509 = vpop.f32.mrf.mxu0
        %6510 = vmatprep.mubr.bf16.mxu0 %v6452
        %6511 = vmatmul.mubr.bf16.gmra.mxu0 %v6361
        %v6512 = vpop.f32.mrf.mxu0
        %v6513 = vadd.f32 %v6386, %v6512
        %v6514 = vpop.f32.mrf.mxu0
        %v6515 = vpop.f32.mrf.mxu0
        %v6516 = vadd.f32 %v6386, %v6515
        %v6517 = vpop.f32.mrf.mxu0
        %6518 = vdwg.mxu0
        %v6519 = vmax.f32 %v6489, 0.0
        %v6520 = vmax.f32 %v6492, 0.0
        %v6521 = vmax.f32 %v6497, 0.0
        %v6522 = vmax.f32 %v6500, 0.0
        %v6523 = vmax.f32 %v6505, 0.0
        %v6524 = vmax.f32 %v6508, 0.0
        %v6525 = vmax.f32 %v6513, 0.0
        %v6526 = vmax.f32 %v6516, 0.0
        %v6527 = vsel %vm3897, %v6519, -inf
        %v6528 = vsel %vm3897, %v6520, -inf
        %v6529 = vmax.f32 %v6527, %v6528
        %v6530 = vsel %vm3897, %v6521, -inf
        %v6531 = vsel %vm3897, %v6522, -inf
        %v6532 = vmax.f32 %v6530, %v6531
        %v6533 = vsel %vm3897, %v6523, -inf
        %v6534 = vsel %vm3897, %v6524, -inf
        %v6535 = vmax.f32 %v6533, %v6534
        %v6536 = vsel %vm3897, %v6525, -inf
        %v6537 = vsel %vm3897, %v6526, -inf
        %v6538 = vmax.f32 %v6536, %v6537
        %6539 = vst.msk [vmem:[#allocation3] sm:$0xff] %vm3897, %v6529
        %6540 = vst.msk [vmem:[#allocation3 + $0x10] sm:$0xff] %vm3897, %v6532
        %6541 = vst.msk [vmem:[#allocation3 + $0x20] sm:$0xff] %vm3897, %v6535
        %6542 = vst.msk [vmem:[#allocation3 + $0x30] sm:$0xff] %vm3897, %v6538
        %s6543 = sand.u32 %s274, 1
        %s6544 = scalar_lea.sflag [#allocation5], %s6543
        %s6545 = sand.u32 %s274, 1
        %s6546 = smul.addr %s6545, 16
        %s6547 = scalar_lea.vmem [#allocation4], %s6546
        %s6548 = sand.u32 %s300, 1
        %s6549 = scalar_lea.sflag [#allocation7], %s6548
        %s6550 = sand.u32 %s300, 1
        %s6551 = smul.addr %s6550, 8
        %s6552 = scalar_lea.vmem [#allocation6], %s6551
        // Predicated region
        $region65: #{tpu_custom_call.1} parent=63 // pred_check
          %p6553 = pneg %p284
        $region66: #{tpu_custom_call.1} parent=63 // pred_check_branch
          %6555 = sbr.rel (%p6553) target = $region68
        $region67: #{tpu_custom_call.1} parent=63 // pred_region
          %s6557 = ssub.s32 256, 256
          %6558 = vsyncadd %s6544, %s6557
          %s6559 = smul.addr %s30, 2
          %s6560 = smul.addr %s6559, 128
          %s6561 = scalar_lea.hbm %s11, %s6560
          %s6562 = sshll.u32 %s6547, 4
          %s6563 = int_to_ptr.vmem [resolvable:$true] %s6562
          %6568 = dma.vmem_to_hbm [thread:$0]  %s6563, 256, %s6561, %s6544, 128, 128, 8
        $region68: #{tpu_custom_call.1} parent=63 // pred_fallthru
          _
        // Predicated region
        $region69: #{tpu_custom_call.1} parent=63 // pred_check
          %p6569 = pneg %p310
        $region70: #{tpu_custom_call.1} parent=63 // pred_check_branch
          %6571 = sbr.rel (%p6569) target = $region72
        $region71: #{tpu_custom_call.1} parent=63 // pred_region
          %s6573 = ssub.s32 128, 128
          %6574 = vsyncadd %s6549, %s6573
          %s6575 = smul.addr %s30, 128
          %s6576 = scalar_lea.hbm %s12, %s6575
          %s6578 = sshll.u32 %s6552, 4
          %s6579 = int_to_ptr.vmem [resolvable:$true] %s6578
          %6581 = dma.vmem_to_hbm [thread:$0]  %s6579, 128, %s6576, %s6549
        $region72: #{tpu_custom_call.1} parent=63 // pred_fallthru
          _
      $region64: #{tpu_custom_call.1} parent=5 // pred_fallthru
        _
      %p6582 = scmp.le.s32.totalorder 2, %s25
      // Predicated region
      $region73: #{tpu_custom_call.1} parent=5 // pred_check
        %p6583 = pneg %p6582
      $region74: #{tpu_custom_call.1} parent=5 // pred_check_branch
        %6585 = sbr.rel (%p6583) target = $region76
      $region75: #{tpu_custom_call.1} parent=5 // pred_region
        %s6586 = ssub.s32 %s25, 2
        // Predicated region
        $region77: #{tpu_custom_call.1} parent=75 // pred_check
          %p6587 = pneg %p290
        $region78: #{tpu_custom_call.1} parent=75 // pred_check_branch
          %6589 = sbr.rel (%p6587) target = $region80
        $region79: #{tpu_custom_call.1} parent=75 // pred_region
          %s6590 = sand.u32 %s275, 1
          %s6591 = scalar_lea.sflag [#allocation5], %s6590
          %s6592 = sand.u32 %s275, 1
          %s6593 = smul.addr %s6592, 16
          %s6594 = scalar_lea.vmem [#allocation4], %s6593
          %6595 = dma.done %s6591, 256
        $region80: #{tpu_custom_call.1} parent=75 // pred_fallthru
          _
        // Predicated region
        $region81: #{tpu_custom_call.1} parent=75 // pred_check
          %p6596 = pneg %p316
        $region82: #{tpu_custom_call.1} parent=75 // pred_check_branch
          %6598 = sbr.rel (%p6596) target = $region84
        $region83: #{tpu_custom_call.1} parent=75 // pred_region
          %s6599 = sand.u32 %s301, 1
          %s6600 = scalar_lea.sflag [#allocation7], %s6599
          %s6601 = sand.u32 %s301, 1
          %s6602 = smul.addr %s6601, 8
          %s6603 = scalar_lea.vmem [#allocation6], %s6602
          %6604 = dma.done %s6600, 128
        $region84: #{tpu_custom_call.1} parent=75 // pred_fallthru
          _
      $region76: #{tpu_custom_call.1} parent=5 // pred_fallthru
        _
    $region6: #{tpu_custom_call.1} parent=1 // loop_footer
      %s29 = sadd.s32 1, %s25
    $region7: #{tpu_custom_call.1} parent=1 // loop_footer_branch
      %24 = sbr.rel target = $region3
    $region8: #{tpu_custom_call.1} parent=1 // loop_exit
      _
    %6605 = vsyncpa [#allocation5], 1
    %s6606 = scalar_lea.sflag [#allocation5], 1
    %6607 = vsyncpa %s6606, 1
    %6608 = vsyncpa [#allocation7], 1
    %s6609 = scalar_lea.sflag [#allocation7], 1
    %6610 = vsyncpa %s6609, 1

</llo_original>
